<compile_context>
chip_gen: v7x
topology: tpu7x:2x2x1
jax: 0.10.0
libtpu: 0.0.40
codegen_flags: <defaults>
</compile_context>

<pallas_src>
import jax
import jax.numpy as jnp
from jax import lax
from jax.experimental import pallas as pl
from jax.experimental.pallas import tpu as pltpu

C = 512          # channels, fixed by the module
BN_EPS = 1e-5    # PyTorch BatchNorm1d default


def _round_up(x, m):
    return (x + m - 1) // m * m


def _make_kernel(t_tile, t_real, needs_mask):
    """Kernel closure over static tiling constants.

    Refs:
      x_ref    (C, t_tile)  activations (time on lanes, channels on sublanes)
      halo_ref (C, 2)       raw x columns just left/right of this tile
      p_ref    (C, 8)       packed per-channel params:
                            0 bn1 scale, 1 bn1 shift, 2..4 depthwise taps
                            (t-1, t, t+1), 5 bn2 scale, 6 bn2 shift, 7 prelu alpha
      w_ref    (C, C)       pointwise conv weight (C_out, C_in), bf16
      o_ref    (C, t_tile)  output
    """

    def kernel(x_ref, halo_ref, p_ref, w_ref, o_ref):
        t = pl.program_id(1)

        xf = x_ref[...].astype(jnp.float32)                      # (C, T_TILE)
        p = p_ref[...]                                           # (C, 8) f32
        s1, b1 = p[:, 0:1], p[:, 1:2]
        w0, w1, w2 = p[:, 2:3], p[:, 3:4], p[:, 4:5]
        s2, b2 = p[:, 5:6], p[:, 6:7]
        alpha = p[:, 7:8]

        # ReLU -> folded BatchNorm1.
        y = jnp.maximum(xf, 0.0) * s1 + b1

        lane = lax.broadcasted_iota(jnp.int32, (C, t_tile), 1)
        if needs_mask:
            # Columns past the real sequence length behave as conv zero-padding.
            y = jnp.where(t * t_tile + lane < t_real, y, 0.0)

        # Halo columns: apply ReLU + BN1 to the raw neighbour columns here
        # (per-channel elementwise, so recomputation is exact and cheap).
        hl = jnp.maximum(halo_ref[:, 0:1].astype(jnp.float32), 0.0) * s1 + b1
        hr = jnp.maximum(halo_ref[:, 1:2].astype(jnp.float32), 0.0) * s1 + b1
        # Zero the halo at the sequence boundaries (Conv1d padding=1).
        hl = hl * jnp.where(t > 0, 1.0, 0.0)
        hr = hr * jnp.where((t + 1) * t_tile < t_real, 1.0, 0.0)

        # Depthwise Conv1d(k=3, groups=C): lane rolls on the XLU + one edge
        # select per side, fused into the multiply-adds on the VPU.
        y_prev = jnp.where(lane == 0, hl, pltpu.roll(y, 1, axis=1))
        y_next = jnp.where(lane == t_tile - 1, hr,
                           pltpu.roll(y, t_tile - 1, axis=1))
        z = w0 * y_prev + w1 * y + w2 * y_next

        # PReLU -> folded BatchNorm2.
        z = jnp.where(z >= 0.0, z, alpha * z)
        z = z * s2 + b2

        # Pointwise 1x1 conv on the MXU: (C_out, C_in) @ (C_in, T_TILE),
        # bf16 inputs, f32 accumulation.  M = 512 >= 256.
        out = jnp.dot(w_ref[...], z.astype(jnp.bfloat16),
                      preferred_element_type=jnp.float32)

        # Residual.
        o_ref[...] = (out + xf).astype(o_ref.dtype)

    return kernel


def visual_conv1d(x, gamma1, beta1, mean1, var1, ds_w, prelu_a,
                  gamma2, beta2, mean2, var2, pw_w, *, t_tile=512):
    """x: (B, C, T) in PyTorch Conv1d layout. Returns (B, C, T)."""
    B, Cc, T = x.shape
    assert Cc == C

    # Tile size: multiple of 128 lanes, capped by the (lane-aligned) sequence.
    t_tile = max(128, _round_up(min(t_tile, _round_up(T, 128)), 128))
    T_pad = _round_up(T, t_tile)
    nt = T_pad // t_tile
    needs_mask = (T_pad != T)

    x_pad = jnp.pad(x, ((0, 0), (0, 0), (0, T_pad - T))) if needs_mask else x

    # Fold BatchNorm (eval mode) into per-channel scale/shift.
    s1 = gamma1 * lax.rsqrt(var1 + BN_EPS)
    b1 = beta1 - mean1 * s1
    s2 = gamma2 * lax.rsqrt(var2 + BN_EPS)
    b2 = beta2 - mean2 * s2
    alpha_vec = jnp.broadcast_to(
        jnp.asarray(prelu_a, jnp.float32).reshape(-1), (C,))
    packed = jnp.stack(
        [s1, b1, ds_w[:, 0, 0], ds_w[:, 0, 1], ds_w[:, 0, 2], s2, b2, alpha_vec],
        axis=1).astype(jnp.float32)                               # (C, 8)

    # Pointwise weight: (C_out, C_in, 1) -> (C_out, C_in), cast to bf16 ONCE.
    pw = pw_w[:, :, 0].astype(jnp.bfloat16)                       # (C, C)

    # Cross-tile halo columns (raw x; ReLU+BN1 applied inside the kernel).
    left_edge = x_pad[:, :, 0::t_tile]                            # (B, C, nt)
    right_edge = x_pad[:, :, t_tile - 1::t_tile]                  # (B, C, nt)
    zcol = jnp.zeros((B, C, 1), x_pad.dtype)
    halo_l = jnp.concatenate([zcol, right_edge[:, :, :nt - 1]], axis=2)
    halo_r = jnp.concatenate([left_edge[:, :, 1:], zcol], axis=2)
    halos = jnp.stack([halo_l, halo_r], axis=-1)                  # (B, C, nt, 2)
    halos = jnp.transpose(halos, (0, 2, 1, 3)).astype(jnp.float32)  # (B, nt, C, 2)

    kernel = _make_kernel(t_tile, T, needs_mask)

    itemsize = jnp.dtype(x.dtype).itemsize
    cost = pl.CostEstimate(
        flops=2 * B * T_pad * C * C + 12 * B * T_pad * C,
        transcendentals=0,
        bytes_accessed=int(2 * B * C * T_pad * itemsize          # act in + out
                           + pw.size * 2 + packed.size * 4 + halos.size * 4))

    out = pl.pallas_call(
        kernel,
        out_shape=jax.ShapeDtypeStruct((B, C, T_pad), x.dtype),
        grid=(B, nt),
        in_specs=[
            pl.BlockSpec((None, C, t_tile), lambda b, t: (b, 0, t)),   # activations
            pl.BlockSpec((None, None, C, 2), lambda b, t: (b, t, 0, 0)),  # halos
            pl.BlockSpec((C, 8), lambda b, t: (0, 0)),                 # packed params
            pl.BlockSpec((C, C), lambda b, t: (0, 0)),                 # pw weight (bf16)
        ],
        out_specs=pl.BlockSpec((None, C, t_tile), lambda b, t: (b, 0, t)),
        compiler_params=pltpu.CompilerParams(
            dimension_semantics=("parallel", "parallel"),
            vmem_limit_bytes=32 * 1024 * 1024),
        cost_estimate=cost,
    )(x_pad, halos, packed, pw)

    return out[:, :, :T] if needs_mask else out


def reference_forward(x, gamma1, beta1, mean1, var1, ds_w, prelu_a,
                      gamma2, beta2, mean2, var2, pw_w):
    """Pure-JAX f32/HIGHEST mirror of VisualConv1D.forward (eval-mode BN)."""
    B, Cc, T = x.shape
    y = jnp.maximum(x, 0.0)
    y = ((y - mean1[None, :, None]) * lax.rsqrt(var1 + BN_EPS)[None, :, None]
         * gamma1[None, :, None] + beta1[None, :, None])
    ypad = jnp.pad(y, ((0, 0), (0, 0), (1, 1)))
    w0 = ds_w[:, 0, 0][None, :, None]
    w1 = ds_w[:, 0, 1][None, :, None]
    w2 = ds_w[:, 0, 2][None, :, None]
    z = w0 * ypad[:, :, 0:T] + w1 * ypad[:, :, 1:T + 1] + w2 * ypad[:, :, 2:T + 2]
    z = jnp.where(z >= 0.0, z, prelu_a * z)
    z = ((z - mean2[None, :, None]) * lax.rsqrt(var2 + BN_EPS)[None, :, None]
         * gamma2[None, :, None] + beta2[None, :, None])
    out = jnp.einsum('oc,bct->bot', pw_w[:, :, 0], z,
                     precision=lax.Precision.HIGHEST)
    return out + x


def reference_forward_kernel_math(x, gamma1, beta1, mean1, var1, ds_w, prelu_a,
                                  gamma2, beta2, mean2, var2, pw_w):
    """Mirror of the kernel's exact math (folded BN, bf16-rounded matmul inputs)."""
    B, Cc, T = x.shape
    s1 = gamma1 * lax.rsqrt(var1 + BN_EPS)
    b1 = beta1 - mean1 * s1
    s2 = gamma2 * lax.rsqrt(var2 + BN_EPS)
    b2 = beta2 - mean2 * s2
    y = jnp.maximum(x, 0.0) * s1[None, :, None] + b1[None, :, None]
    ypad = jnp.pad(y, ((0, 0), (0, 0), (1, 1)))
    w0 = ds_w[:, 0, 0][None, :, None]
    w1 = ds_w[:, 0, 1][None, :, None]
    w2 = ds_w[:, 0, 2][None, :, None]
    z = w0 * ypad[:, :, 0:T] + w1 * ypad[:, :, 1:T + 1] + w2 * ypad[:, :, 2:T + 2]
    z = jnp.where(z >= 0.0, z, prelu_a * z)
    z = z * s2[None, :, None] + b2[None, :, None]
    w = pw_w[:, :, 0].astype(jnp.bfloat16).astype(jnp.float32)
    zb = z.astype(jnp.bfloat16).astype(jnp.float32)
    out = jnp.einsum('oc,bct->bot', w, zb, precision=lax.Precision.HIGHEST)
    return out + x


if __name__ == "__main__":
    # Small-but-representative shapes: channels fixed at 512 by the module;
    # T=300 with t_tile=128 exercises multiple time tiles, cross-tile halos
    # AND the padded-tail masking path.
    B, T = 2, 300

    keys = jax.random.split(jax.random.PRNGKey(0), 11)
    x = jax.random.normal(keys[0], (B, C, T), jnp.float32)

    gamma1 = 1.0 + 0.1 * jax.random.normal(keys[1], (C,), jnp.float32)
    beta1 = 0.1 * jax.random.normal(keys[2], (C,), jnp.float32)
    mean1 = 0.1 * jax.random.normal(keys[3], (C,), jnp.float32)
    var1 = 1.0 + 0.1 * jnp.abs(jax.random.normal(keys[4], (C,), jnp.float32))

    ds_w = 0.3 * jax.random.normal(keys[5], (C, 1, 3), jnp.float32)  # depthwise weight
    prelu_a = jnp.float32(0.25)                                      # PReLU default

    gamma2 = 1.0 + 0.1 * jax.random.normal(keys[6], (C,), jnp.float32)
    beta2 = 0.1 * jax.random.normal(keys[7], (C,), jnp.float32)
    mean2 = 0.1 * jax.random.normal(keys[8], (C,), jnp.float32)
    var2 = 1.0 + 0.1 * jnp.abs(jax.random.normal(keys[9], (C,), jnp.float32))

    pw_w = (1.0 / jnp.sqrt(float(C))) * jax.random.normal(
        keys[10], (C, C, 1), jnp.float32)                            # pointwise weight

    args = (x, gamma1, beta1, mean1, var1, ds_w, prelu_a,
            gamma2, beta2, mean2, var2, pw_w)

    out = visual_conv1d(*args, t_tile=128)
    out = jax.block_until_ready(out)

    assert out.shape == (B, C, T)
    assert bool(jnp.all(jnp.isfinite(out)))

    # Tight check vs. a reference that uses the kernel's exact math
    # (folded BN, bf16-rounded matmul inputs, f32 accumulation).
    ref_tight = jax.block_until_ready(reference_forward_kernel_math(*args))
    err_tight = float(jnp.max(jnp.abs(out - ref_tight)))
    assert err_tight < 2e-3, f"mismatch vs kernel-math reference: {err_tight}"

    # Loose check vs. the full-f32 HIGHEST reference (bf16 MXU inputs only
    # introduce ~1e-2 worst-case absolute error at these scales).
    ref_f32 = jax.block_until_ready(reference_forward(*args))
    err_f32 = float(jnp.max(jnp.abs(out - ref_f32)))
    assert err_f32 < 5e-2, f"mismatch vs f32 reference: {err_f32}"

    print("KERNEL_OK")
</pallas_src>

<mosaic_0001>
module attributes {stable_mosaic.version = 11 : i64} {
  func.func @kernel(%arg0: i32, %arg1: i32, %arg2: memref<1x512x128xf32, #tpu.memory_space<vmem>>, %arg3: memref<1x1x512x2xf32, #tpu.memory_space<vmem>>, %arg4: memref<512x8xf32, #tpu.memory_space<vmem>>, %arg5: memref<512x512xbf16, #tpu.memory_space<vmem>>, %arg6: memref<1x512x128xf32, #tpu.memory_space<vmem>>) attributes {dimension_semantics = [#tpu.dimension_semantics<parallel>, #tpu.dimension_semantics<parallel>], iteration_bounds = array<i64: 2, 3>, scalar_prefetch = 0 : i64, scratch_operands = 0 : i64, tpu.core_type = #tpu.core_type<tc>, window_params = [{transform_indices = @transform_0, window_bounds = array<i64: 1, 512, 128>}, {transform_indices = @transform_1, window_bounds = array<i64: 1, 1, 512, 2>}, {pipeline_mode = #tpu.pipeline_mode<synchronous>, transform_indices = @transform_2, window_bounds = array<i64: 512, 8>}, {pipeline_mode = #tpu.pipeline_mode<synchronous>, transform_indices = @transform_3, window_bounds = array<i64: 512, 512>}, {transform_indices = @transform_4, window_bounds = array<i64: 1, 512, 128>}]} {
    %c0 = arith.constant 0 : index
    %c0_0 = arith.constant 0 : index
    %c0_1 = arith.constant 0 : index
    %0 = vector.load %arg2[%c0, %c0_0, %c0_1] : memref<1x512x128xf32, #tpu.memory_space<vmem>>, vector<1x512x128xf32>
    %1 = vector.shape_cast %0 : vector<1x512x128xf32> to vector<512x128xf32>
    %c0_2 = arith.constant 0 : index
    %c0_3 = arith.constant 0 : index
    %2 = vector.load %arg4[%c0_2, %c0_3] : memref<512x8xf32, #tpu.memory_space<vmem>>, vector<512x8xf32>
    %3 = vector.extract_strided_slice %2 {offsets = [0, 0], sizes = [512, 1], strides = [1, 1]} : vector<512x8xf32> to vector<512x1xf32>
    %4 = vector.extract_strided_slice %2 {offsets = [0, 1], sizes = [512, 1], strides = [1, 1]} : vector<512x8xf32> to vector<512x1xf32>
    %5 = vector.extract_strided_slice %2 {offsets = [0, 2], sizes = [512, 1], strides = [1, 1]} : vector<512x8xf32> to vector<512x1xf32>
    %6 = vector.extract_strided_slice %2 {offsets = [0, 3], sizes = [512, 1], strides = [1, 1]} : vector<512x8xf32> to vector<512x1xf32>
    %7 = vector.extract_strided_slice %2 {offsets = [0, 4], sizes = [512, 1], strides = [1, 1]} : vector<512x8xf32> to vector<512x1xf32>
    %8 = vector.extract_strided_slice %2 {offsets = [0, 5], sizes = [512, 1], strides = [1, 1]} : vector<512x8xf32> to vector<512x1xf32>
    %9 = vector.extract_strided_slice %2 {offsets = [0, 6], sizes = [512, 1], strides = [1, 1]} : vector<512x8xf32> to vector<512x1xf32>
    %10 = vector.extract_strided_slice %2 {offsets = [0, 7], sizes = [512, 1], strides = [1, 1]} : vector<512x8xf32> to vector<512x1xf32>
    %cst = arith.constant 0.000000e+00 : f32
    %11 = vector.broadcast %cst : f32 to vector<512x128xf32>
    %12 = arith.maximumf %1, %11 : vector<512x128xf32>
    %13 = vector.broadcast %3 : vector<512x1xf32> to vector<512x128xf32>
    %14 = arith.mulf %12, %13 : vector<512x128xf32>
    %15 = vector.broadcast %4 : vector<512x1xf32> to vector<512x128xf32>
    %16 = arith.addf %14, %15 : vector<512x128xf32>
    %17 = tpu.iota {dimensions = array<i32: 1>} : vector<512x128xi32>
    %c128_i32 = arith.constant 128 : i32
    %18 = arith.muli %arg1, %c128_i32 : i32
    %19 = vector.broadcast %18 : i32 to vector<512x128xi32>
    %20 = arith.addi %19, %17 : vector<512x128xi32>
    %c300_i32 = arith.constant 300 : i32
    %21 = vector.broadcast %c300_i32 : i32 to vector<512x128xi32>
    %22 = arith.cmpi slt, %20, %21 : vector<512x128xi32>
    %cst_4 = arith.constant 0.000000e+00 : f32
    %23 = vector.broadcast %cst_4 : f32 to vector<512x128xf32>
    %24 = arith.select %22, %16, %23 : vector<512x128xi1>, vector<512x128xf32>
    %c0_5 = arith.constant 0 : index
    %c0_6 = arith.constant 0 : index
    %c0_7 = arith.constant 0 : index
    %c0_8 = arith.constant 0 : index
    %25 = vector.load %arg3[%c0_5, %c0_6, %c0_7, %c0_8] : memref<1x1x512x2xf32, #tpu.memory_space<vmem>>, vector<1x1x512x1xf32>
    %26 = vector.shape_cast %25 : vector<1x1x512x1xf32> to vector<512x1xf32>
    %cst_9 = arith.constant 0.000000e+00 : f32
    %27 = vector.broadcast %cst_9 : f32 to vector<512x1xf32>
    %28 = arith.maximumf %26, %27 : vector<512x1xf32>
    %29 = arith.mulf %28, %3 : vector<512x1xf32>
    %30 = arith.addf %29, %4 : vector<512x1xf32>
    %c0_10 = arith.constant 0 : index
    %c0_11 = arith.constant 0 : index
    %c0_12 = arith.constant 0 : index
    %c1 = arith.constant 1 : index
    %31 = vector.load %arg3[%c0_10, %c0_11, %c0_12, %c1] : memref<1x1x512x2xf32, #tpu.memory_space<vmem>>, vector<1x1x512x1xf32>
    %32 = vector.shape_cast %31 : vector<1x1x512x1xf32> to vector<512x1xf32>
    %cst_13 = arith.constant 0.000000e+00 : f32
    %33 = vector.broadcast %cst_13 : f32 to vector<512x1xf32>
    %34 = arith.maximumf %32, %33 : vector<512x1xf32>
    %35 = arith.mulf %34, %3 : vector<512x1xf32>
    %36 = arith.addf %35, %4 : vector<512x1xf32>
    %c0_i32 = arith.constant 0 : i32
    %37 = arith.cmpi sgt, %arg1, %c0_i32 : i32
    %cst_14 = arith.constant 1.000000e+00 : f32
    %cst_15 = arith.constant 0.000000e+00 : f32
    %38 = arith.select %37, %cst_14, %cst_15 : f32
    %39 = vector.broadcast %38 : f32 to vector<512x1xf32>
    %40 = arith.mulf %30, %39 : vector<512x1xf32>
    %c1_i32 = arith.constant 1 : i32
    %41 = arith.addi %arg1, %c1_i32 : i32
    %c128_i32_16 = arith.constant 128 : i32
    %42 = arith.muli %41, %c128_i32_16 : i32
    %c300_i32_17 = arith.constant 300 : i32
    %43 = arith.cmpi slt, %42, %c300_i32_17 : i32
    %cst_18 = arith.constant 1.000000e+00 : f32
    %cst_19 = arith.constant 0.000000e+00 : f32
    %44 = arith.select %43, %cst_18, %cst_19 : f32
    %45 = vector.broadcast %44 : f32 to vector<512x1xf32>
    %46 = arith.mulf %36, %45 : vector<512x1xf32>
    %c0_i32_20 = arith.constant 0 : i32
    %47 = vector.broadcast %c0_i32_20 : i32 to vector<512x128xi32>
    %48 = arith.cmpi eq, %17, %47 : vector<512x128xi32>
    %c1_i32_21 = arith.constant 1 : i32
    %49 = tpu.dynamic_rotate %24 by %c1_i32_21 dim 1 : vector<512x128xf32>, i32 -> vector<512x128xf32>
    %50 = vector.shape_cast %40 : vector<512x1xf32> to vector<512x1xf32>
    %51 = vector.broadcast %50 : vector<512x1xf32> to vector<512x128xf32>
    %52 = arith.select %48, %51, %49 : vector<512x128xi1>, vector<512x128xf32>
    %c127_i32 = arith.constant 127 : i32
    %53 = vector.broadcast %c127_i32 : i32 to vector<512x128xi32>
    %54 = arith.cmpi eq, %17, %53 : vector<512x128xi32>
    %c127_i32_22 = arith.constant 127 : i32
    %55 = tpu.dynamic_rotate %24 by %c127_i32_22 dim 1 : vector<512x128xf32>, i32 -> vector<512x128xf32>
    %56 = vector.shape_cast %46 : vector<512x1xf32> to vector<512x1xf32>
    %57 = vector.broadcast %56 : vector<512x1xf32> to vector<512x128xf32>
    %58 = arith.select %54, %57, %55 : vector<512x128xi1>, vector<512x128xf32>
    %59 = vector.broadcast %5 : vector<512x1xf32> to vector<512x128xf32>
    %60 = arith.mulf %59, %52 : vector<512x128xf32>
    %61 = vector.broadcast %6 : vector<512x1xf32> to vector<512x128xf32>
    %62 = arith.mulf %61, %24 : vector<512x128xf32>
    %63 = arith.addf %60, %62 : vector<512x128xf32>
    %64 = vector.broadcast %7 : vector<512x1xf32> to vector<512x128xf32>
    %65 = arith.mulf %64, %58 : vector<512x128xf32>
    %66 = arith.addf %63, %65 : vector<512x128xf32>
    %cst_23 = arith.constant 0.000000e+00 : f32
    %67 = vector.broadcast %cst_23 : f32 to vector<512x128xf32>
    %68 = arith.cmpf oge, %66, %67 : vector<512x128xf32>
    %69 = vector.broadcast %10 : vector<512x1xf32> to vector<512x128xf32>
    %70 = arith.mulf %69, %66 : vector<512x128xf32>
    %71 = arith.select %68, %66, %70 : vector<512x128xi1>, vector<512x128xf32>
    %72 = vector.broadcast %8 : vector<512x1xf32> to vector<512x128xf32>
    %73 = arith.mulf %71, %72 : vector<512x128xf32>
    %74 = vector.broadcast %9 : vector<512x1xf32> to vector<512x128xf32>
    %75 = arith.addf %73, %74 : vector<512x128xf32>
    %c0_24 = arith.constant 0 : index
    %c0_25 = arith.constant 0 : index
    %76 = vector.load %arg5[%c0_24, %c0_25] : memref<512x512xbf16, #tpu.memory_space<vmem>>, vector<512x512xbf16>
    %77 = arith.truncf %75 : vector<512x128xf32> to vector<512x128xbf16>
    %cst_26 = arith.constant dense<0.000000e+00> : vector<512x128xf32>
    %78 = tpu.matmul %76, %77, %cst_26 {dimension_numbers = #tpu.dot_dimension_numbers<[1], [0], [0], [1], [0, 0, 1, 1], [], []>} : vector<512x512xbf16>, vector<512x128xbf16>, vector<512x128xf32> -> vector<512x128xf32>
    %79 = arith.addf %78, %1 : vector<512x128xf32>
    %c0_27 = arith.constant 0 : index
    %c0_28 = arith.constant 0 : index
    %c0_29 = arith.constant 0 : index
    %80 = vector.load %arg6[%c0_27, %c0_28, %c0_29] : memref<1x512x128xf32, #tpu.memory_space<vmem>>, vector<1x512x128xf32>
    %81 = vector.shape_cast %80 : vector<1x512x128xf32> to vector<512x128xf32>
    %82 = vector.shape_cast %79 : vector<512x128xf32> to vector<1x512x128xf32>
    tpu.vector_store %arg6[%c0_27, %c0_28, %c0_29], %82 {strides = array<i32>} : memref<1x512x128xf32, #tpu.memory_space<vmem>>, vector<1x512x128xf32>,
    return
  }
  func.func @transform_0(%arg0: i32, %arg1: i32) -> (i32, i32, i32) {
    %c0_i32 = arith.constant 0 : i32
    %c0_i32_0 = arith.constant 0 : i32
    return %arg0, %c0_i32, %arg1 : i32, i32, i32
  }
  func.func @transform_1(%arg0: i32, %arg1: i32) -> (i32, i32, i32, i32) {
    %c0_i32 = arith.constant 0 : i32
    %c0_i32_0 = arith.constant 0 : i32
    %c0_i32_1 = arith.constant 0 : i32
    return %arg0, %arg1, %c0_i32, %c0_i32_0 : i32, i32, i32, i32
  }
  func.func @transform_2(%arg0: i32, %arg1: i32) -> (i32, i32) {
    %c0_i32 = arith.constant 0 : i32
    %c0_i32_0 = arith.constant 0 : i32
    %c0_i32_1 = arith.constant 0 : i32
    return %c0_i32, %c0_i32_0 : i32, i32
  }
  func.func @transform_3(%arg0: i32, %arg1: i32) -> (i32, i32) {
    %c0_i32 = arith.constant 0 : i32
    %c0_i32_0 = arith.constant 0 : i32
    %c0_i32_1 = arith.constant 0 : i32
    return %c0_i32, %c0_i32_0 : i32, i32
  }
  func.func @transform_4(%arg0: i32, %arg1: i32) -> (i32, i32, i32) {
    %c0_i32 = arith.constant 0 : i32
    %c0_i32_0 = arith.constant 0 : i32
    return %arg0, %c0_i32, %arg1 : i32, i32, i32
  }
}

</mosaic_0001>

<llo_original>
// kernel: tpu_custom_call.1
$region0: #{tpu_custom_call.1}
  #allocation0 [shape = 'u32[]', space=smem, size = 0x4, offset = 0x4, fixed_abs, tag = 'smem constant byte address 0x4 - core index']
  #allocation1 [shape = 'u32[144,128]{1,0:T(1,128)}', space=vmem, size = 0x12000, scoped, tag = 'internal scratch']
  %s0 = inlined_call_operand.vmem [shape: f32[2,512,384], index: 0, kind: input, shape index: {}]
  %s1 = inlined_call_operand.vmem [shape: f32[2,3,512,2], index: 1, kind: input, shape index: {}]
  %s2 = inlined_call_operand.vmem [shape: f32[512,8], index: 2, kind: input, shape index: {}]
  %s3 = inlined_call_operand.hbm [shape: bf16[512,512], index: 3, kind: input, shape index: {}]
  %s4 = inlined_call_operand.hbm [shape: f32[2,512,384], index: 4, kind: output, shape index: {}]
  %s5 = sld [smem:[#allocation0]]
  $region91: #{tpu_custom_call.1} parent=0
    _
  %s7 = ssub.s32 1, %s5
  %s8 = scalar_select 0, %s7, %s5
  $region1: #{tpu_custom_call.1} parent=0
    #allocation2 [shape = 'u8[524288]{0}', space=vmem, size = 0x80000, scoped, tag = 'input window, operand 0']
    #allocation3 [shape = 'u8[524288]{0}', space=vmem, size = 0x80000, scoped, tag = 'input window, operand 3, single buffered']
    #allocation4 [shape = 's32[2]{0}', space=sflag, size = 0x8, scoped, tag = 'scoped memory for tpu_custom_call.1']
    #allocation5 [shape = 's32[2]{0}', space=sflag, size = 0x8, scoped, tag = 'scoped memory for tpu_custom_call.1']
    #allocation6 [shape = 'u8[524288]{0}', space=vmem, size = 0x80000, scoped, tag = 'output window, operand 0']
    %9 = vsyncpa [#allocation4], 0
    %10 = vsyncpa [#allocation5], 0
    %s11 = scalar_lea.sflag [#allocation5], 1
    %12 = vsyncpa %s11, 0
    loop: start=0, step=1, limit=8
    $region2: #{tpu_custom_call.1} parent=1 // loop_pre_header
      _
    $region3: #{tpu_custom_call.1} parent=1 // loop_header
      %s14 = sphi 0, %s18
      %p15 = scmp.ge.s32.totalorder %s14, 8
      %s21 = sphi 0, %s33
      %s22 = sphi 0, %s29
      %s23 = sphi 0, %s21
      %s24 = sphi 0, %s22
      %s25 = sphi 0, %s23
      %s26 = sphi 0, %s24
      %s38 = sphi 0, %s40
      %s41 = sphi 0, %s38
      %s42 = sphi 0, %s41
      %s58 = sphi 0, %s42
      %s66 = sphi 0, %s68
      %s69 = sphi 0, %s66
      %s70 = sphi 0, %s69
      %s86 = sphi 0, %s70
      %s90 = sphi 0, %s90
      %s92 = sphi 0, %s90
      %s93 = sphi 0, %s92
      %s107 = sphi 0, %s93
      %s111 = sphi 0, %s111
      %s113 = sphi 0, %s111
      %s114 = sphi 0, %s113
      %s128 = sphi 0, %s114
      %s136 = sphi 0, %s138
      %s139 = sphi 0, %s136
      %s140 = sphi 0, %s139
      %s156 = sphi 0, %s140
    $region4: #{tpu_custom_call.1} parent=1 // loop_header_branch
      %17 = sbr.rel (%p15) target = $region8
    $region5: #{tpu_custom_call.1} parent=1 // loop_body
      %s19 = ssub.s32 %s14, 1
      %s20 = ssub.s32 %s14, 2
      %s27 = sadd.s32 1, %s22
      %p28 = scmp.ge.s32.totalorder %s27, 3
      %s29 = scalar_select %p28, 0, %s27
      %s30 = sadd.s32 1, %s21
      %s31 = scalar_select %p28, %s30, %s21
      %p32 = scmp.ge.s32.totalorder %s31, 2
      %s33 = scalar_select %p32, 0, %s31
      %s34 = ssub.s32 %s21, %s33
      %s35 = ssub.s32 %s22, %s29
      %s36 = sor.u32 %s34, %s35
      %p37 = scmp.eq.s32.totalorder %s36, 0
      %s39 = sadd.s32 %s38, 1
      %s40 = scalar_select %p37, %s38, %s39
      %p43 = pneg %p37
      %p44 = scmp.eq.s32.totalorder %s14, 5
      %p45 = por %p43, %p44
      %p46 = scmp.ne.s32.totalorder %s38, %s41
      %p47 = scmp.eq.s32.totalorder %s14, 0
      %p48 = por %p46, %p47
      %p49 = scmp.ne.s32.totalorder %s38, %s41
      %p50 = scmp.eq.s32.totalorder %s19, 5
      %p51 = por %p49, %p50
      %p52 = scmp.ne.s32.totalorder %s41, %s42
      %p53 = scmp.eq.s32.totalorder %s19, 0
      %p54 = por %p52, %p53
      %p55 = scmp.ne.s32.totalorder %s41, %s42
      %p56 = scmp.eq.s32.totalorder %s20, 5
      %p57 = por %p55, %p56
      %p59 = scmp.ne.s32.totalorder %s42, %s58
      %p60 = scmp.eq.s32.totalorder %s20, 0
      %p61 = por %p59, %p60
      %s62 = ssub.s32 %s21, %s33
      %s63 = ssub.s32 %s22, %s29
      %s64 = sor.u32 %s62, %s63
      %p65 = scmp.eq.s32.totalorder %s64, 0
      %s67 = sadd.s32 %s66, 1
      %s68 = scalar_select %p65, %s66, %s67
      %p71 = pneg %p65
      %p72 = scmp.eq.s32.totalorder %s14, 5
      %p73 = por %p71, %p72
      %p74 = scmp.ne.s32.totalorder %s66, %s69
      %p75 = scmp.eq.s32.totalorder %s14, 0
      %p76 = por %p74, %p75
      %p77 = scmp.ne.s32.totalorder %s66, %s69
      %p78 = scmp.eq.s32.totalorder %s19, 5
      %p79 = por %p77, %p78
      %p80 = scmp.ne.s32.totalorder %s69, %s70
      %p81 = scmp.eq.s32.totalorder %s19, 0
      %p82 = por %p80, %p81
      %p83 = scmp.ne.s32.totalorder %s69, %s70
      %p84 = scmp.eq.s32.totalorder %s20, 5
      %p85 = por %p83, %p84
      %p87 = scmp.ne.s32.totalorder %s70, %s86
      %p88 = scmp.eq.s32.totalorder %s20, 0
      %p89 = por %p87, %p88
      %s91 = sadd.s32 %s90, 1
      %p94 = scmp.eq.s32.totalorder %s14, 5
      %p95 = scmp.ne.s32.totalorder %s90, %s92
      %p96 = scmp.eq.s32.totalorder %s14, 0
      %p97 = por %p95, %p96
      %p98 = scmp.ne.s32.totalorder %s90, %s92
      %p99 = scmp.eq.s32.totalorder %s19, 5
      %p100 = por %p98, %p99
      %p101 = scmp.ne.s32.totalorder %s92, %s93
      %p102 = scmp.eq.s32.totalorder %s19, 0
      %p103 = por %p101, %p102
      %p104 = scmp.ne.s32.totalorder %s92, %s93
      %p105 = scmp.eq.s32.totalorder %s20, 5
      %p106 = por %p104, %p105
      %p108 = scmp.ne.s32.totalorder %s93, %s107
      %p109 = scmp.eq.s32.totalorder %s20, 0
      %p110 = por %p108, %p109
      %s112 = sadd.s32 %s111, 1
      %p115 = scmp.eq.s32.totalorder %s14, 5
      %p116 = scmp.ne.s32.totalorder %s111, %s113
      %p117 = scmp.eq.s32.totalorder %s14, 0
      %p118 = por %p116, %p117
      %p119 = scmp.ne.s32.totalorder %s111, %s113
      %p120 = scmp.eq.s32.totalorder %s19, 5
      %p121 = por %p119, %p120
      %p122 = scmp.ne.s32.totalorder %s113, %s114
      %p123 = scmp.eq.s32.totalorder %s19, 0
      %p124 = por %p122, %p123
      %p125 = scmp.ne.s32.totalorder %s113, %s114
      %p126 = scmp.eq.s32.totalorder %s20, 5
      %p127 = por %p125, %p126
      %p129 = scmp.ne.s32.totalorder %s114, %s128
      %p130 = scmp.eq.s32.totalorder %s20, 0
      %p131 = por %p129, %p130
      %s132 = ssub.s32 %s21, %s33
      %s133 = ssub.s32 %s22, %s29
      %s134 = sor.u32 %s132, %s133
      %p135 = scmp.eq.s32.totalorder %s134, 0
      %s137 = sadd.s32 %s136, 1
      %s138 = scalar_select %p135, %s136, %s137
      %p141 = pneg %p135
      %p142 = scmp.eq.s32.totalorder %s14, 5
      %p143 = por %p141, %p142
      %p144 = scmp.ne.s32.totalorder %s136, %s139
      %p145 = scmp.eq.s32.totalorder %s14, 0
      %p146 = por %p144, %p145
      %p147 = scmp.ne.s32.totalorder %s136, %s139
      %p148 = scmp.eq.s32.totalorder %s19, 5
      %p149 = por %p147, %p148
      %p150 = scmp.ne.s32.totalorder %s139, %s140
      %p151 = scmp.eq.s32.totalorder %s19, 0
      %p152 = por %p150, %p151
      %p153 = scmp.ne.s32.totalorder %s139, %s140
      %p154 = scmp.eq.s32.totalorder %s20, 5
      %p155 = por %p153, %p154
      %p157 = scmp.ne.s32.totalorder %s140, %s156
      %p158 = scmp.eq.s32.totalorder %s20, 0
      %p159 = por %p157, %p158
      %p160 = scmp.le.s32.totalorder 1, %s14
      %p161 = scmp.lt.s32.totalorder %s14, 7
      %p162 = pnand %p160, %p161
      %p163 = pneg %p162
      // Predicated region
      $region9: #{tpu_custom_call.1} parent=5 // pred_check
        _
      $region10: #{tpu_custom_call.1} parent=5 // pred_check_branch
        %165 = sbr.rel (%p162) target = $region12
      $region11: #{tpu_custom_call.1} parent=5 // pred_region
        %s166 = ssub.s32 %s14, 1
        // Predicated region
        $region13: #{tpu_custom_call.1} parent=11 // pred_check
          %p167 = pneg %p103
        $region14: #{tpu_custom_call.1} parent=11 // pred_check_branch
          %169 = sbr.rel (%p167) target = $region16
        $region15: #{tpu_custom_call.1} parent=11 // pred_region
          _
        $region16: #{tpu_custom_call.1} parent=11 // pred_fallthru
          _
        // Predicated region
        $region17: #{tpu_custom_call.1} parent=11 // pred_check
          %p170 = pneg %p124
        $region18: #{tpu_custom_call.1} parent=11 // pred_check_branch
          %172 = sbr.rel (%p170) target = $region20
        $region19: #{tpu_custom_call.1} parent=11 // pred_region
          %s174 = ssub.s32 16384, 16384
          %175 = vsyncadd [#allocation4], %s174
          %s176 = sshll.u32 [#allocation3], 4
          %s177 = int_to_ptr.vmem [resolvable:$true] %s176
          %182 = dma.hbm_to_vmem [thread:$0]  %s3, 16384, %s177, [#allocation4], 256, 256, 16
        $region20: #{tpu_custom_call.1} parent=11 // pred_fallthru
          _
      $region12: #{tpu_custom_call.1} parent=5 // pred_fallthru
        _
      %p183 = scmp.lt.s32.totalorder %s14, 6
      // Predicated region
      $region21: #{tpu_custom_call.1} parent=5 // pred_check
        %p184 = pneg %p183
      $region22: #{tpu_custom_call.1} parent=5 // pred_check_branch
        %186 = sbr.rel (%p184) target = $region24
      $region23: #{tpu_custom_call.1} parent=5 // pred_region
        // Predicated region
        $region25: #{tpu_custom_call.1} parent=23 // pred_check
          %p187 = pneg %p48
        $region26: #{tpu_custom_call.1} parent=23 // pred_check_branch
          %189 = sbr.rel (%p187) target = $region28
        $region27: #{tpu_custom_call.1} parent=23 // pred_region
          %s190 = sand.u32 %s38, 1
          %s191 = sand.u32 %s38, 1
          %s192 = smul.addr %s191, 512
          %s193 = scalar_lea.vmem [#allocation2], %s192
          %s194 = smul.addr %s21, 192
          %s195 = sadd.s32 %s22, %s194
          %s196 = smul.addr %s195, 8
          %s197 = scalar_lea.vmem %s0, %s196
          // Predicated region
          $region29: #{tpu_custom_call.1} parent=27 // pred_check
            _
          $region30: #{tpu_custom_call.1} parent=27 // pred_check_branch
            %199 = sbr.rel (0) target = $region32
          $region31: #{tpu_custom_call.1} parent=27 // pred_region
            // Predicated region
            $region33: #{tpu_custom_call.1} parent=31 // pred_check
              _
            $region34: #{tpu_custom_call.1} parent=31 // pred_check_branch
              %201 = sbr.rel (0) target = $region36
            $region35: #{tpu_custom_call.1} parent=31 // pred_region
              // Predicated region
              $region48: #{tpu_custom_call.1} parent=35 // pred_check
                _
              $region49: #{tpu_custom_call.1} parent=35 // pred_check_branch
                %342 = sbr.rel (0) target = $region51
              $region50: #{tpu_custom_call.1} parent=35 // pred_region
                loop: start=0, step=1, limit=1
                $region52: #{tpu_custom_call.1} parent=50 // loop_pre_header
                  _
                $region53: #{tpu_custom_call.1} parent=50 // loop_header
                  %s344 = sphi 0, %s348
                  %p345 = scmp.ge.s32.totalorder %s344, 1
                  %s349 = sphi %s197, %s197
                  %s350 = sphi %s193, %s193
                $region54: #{tpu_custom_call.1} parent=50 // loop_header_branch
                  %347 = sbr.rel (%p345) target = $region58
                $region55: #{tpu_custom_call.1} parent=50 // loop_body
                  %v351 = vld [vmem:[%s349] sm:$0xff]
                  %352 = vst [vmem:[%s350] sm:$0xff] %v351
                  %v353 = vld [vmem:[%s349 + $0x18] sm:$0xff]
                  %354 = vst [vmem:[%s350 + $0x8] sm:$0xff] %v353
                  %v355 = vld [vmem:[%s349 + $0x30] sm:$0xff]
                  %356 = vst [vmem:[%s350 + $0x10] sm:$0xff] %v355
                  %v357 = vld [vmem:[%s349 + $0x48] sm:$0xff]
                  %358 = vst [vmem:[%s350 + $0x18] sm:$0xff] %v357
                  %v359 = vld [vmem:[%s349 + $0x60] sm:$0xff]
                  %360 = vst [vmem:[%s350 + $0x20] sm:$0xff] %v359
                  %v361 = vld [vmem:[%s349 + $0x78] sm:$0xff]
                  %362 = vst [vmem:[%s350 + $0x28] sm:$0xff] %v361
                  %v363 = vld [vmem:[%s349 + $0x90] sm:$0xff]
                  %364 = vst [vmem:[%s350 + $0x30] sm:$0xff] %v363
                  %v365 = vld [vmem:[%s349 + $0xa8] sm:$0xff]
                  %366 = vst [vmem:[%s350 + $0x38] sm:$0xff] %v365
                  %v367 = vld [vmem:[%s349 + $0xc0] sm:$0xff]
                  %368 = vst [vmem:[%s350 + $0x40] sm:$0xff] %v367
                  %v369 = vld [vmem:[%s349 + $0xd8] sm:$0xff]
                  %370 = vst [vmem:[%s350 + $0x48] sm:$0xff] %v369
                  %v371 = vld [vmem:[%s349 + $0xf0] sm:$0xff]
                  %372 = vst [vmem:[%s350 + $0x50] sm:$0xff] %v371
                  %v373 = vld [vmem:[%s349 + $0x108] sm:$0xff]
                  %374 = vst [vmem:[%s350 + $0x58] sm:$0xff] %v373
                  %v375 = vld [vmem:[%s349 + $0x120] sm:$0xff]
                  %376 = vst [vmem:[%s350 + $0x60] sm:$0xff] %v375
                  %v377 = vld [vmem:[%s349 + $0x138] sm:$0xff]
                  %378 = vst [vmem:[%s350 + $0x68] sm:$0xff] %v377
                  %v379 = vld [vmem:[%s349 + $0x150] sm:$0xff]
                  %380 = vst [vmem:[%s350 + $0x70] sm:$0xff] %v379
                  %v381 = vld [vmem:[%s349 + $0x168] sm:$0xff]
                  %382 = vst [vmem:[%s350 + $0x78] sm:$0xff] %v381
                  %v383 = vld [vmem:[%s349 + $0x180] sm:$0xff]
                  %384 = vst [vmem:[%s350 + $0x80] sm:$0xff] %v383
                  %v385 = vld [vmem:[%s349 + $0x198] sm:$0xff]
                  %386 = vst [vmem:[%s350 + $0x88] sm:$0xff] %v385
                  %v387 = vld [vmem:[%s349 + $0x1b0] sm:$0xff]
                  %388 = vst [vmem:[%s350 + $0x90] sm:$0xff] %v387
                  %v389 = vld [vmem:[%s349 + $0x1c8] sm:$0xff]
                  %390 = vst [vmem:[%s350 + $0x98] sm:$0xff] %v389
                  %v391 = vld [vmem:[%s349 + $0x1e0] sm:$0xff]
                  %392 = vst [vmem:[%s350 + $0xa0] sm:$0xff] %v391
                  %v393 = vld [vmem:[%s349 + $0x1f8] sm:$0xff]
                  %394 = vst [vmem:[%s350 + $0xa8] sm:$0xff] %v393
                  %v395 = vld [vmem:[%s349 + $0x210] sm:$0xff]
                  %396 = vst [vmem:[%s350 + $0xb0] sm:$0xff] %v395
                  %v397 = vld [vmem:[%s349 + $0x228] sm:$0xff]
                  %398 = vst [vmem:[%s350 + $0xb8] sm:$0xff] %v397
                  %v399 = vld [vmem:[%s349 + $0x240] sm:$0xff]
                  %400 = vst [vmem:[%s350 + $0xc0] sm:$0xff] %v399
                  %v401 = vld [vmem:[%s349 + $0x258] sm:$0xff]
                  %402 = vst [vmem:[%s350 + $0xc8] sm:$0xff] %v401
                  %v403 = vld [vmem:[%s349 + $0x270] sm:$0xff]
                  %404 = vst [vmem:[%s350 + $0xd0] sm:$0xff] %v403
                  %v405 = vld [vmem:[%s349 + $0x288] sm:$0xff]
                  %406 = vst [vmem:[%s350 + $0xd8] sm:$0xff] %v405
                  %v407 = vld [vmem:[%s349 + $0x2a0] sm:$0xff]
                  %408 = vst [vmem:[%s350 + $0xe0] sm:$0xff] %v407
                  %v409 = vld [vmem:[%s349 + $0x2b8] sm:$0xff]
                  %410 = vst [vmem:[%s350 + $0xe8] sm:$0xff] %v409
                  %v411 = vld [vmem:[%s349 + $0x2d0] sm:$0xff]
                  %412 = vst [vmem:[%s350 + $0xf0] sm:$0xff] %v411
                  %v413 = vld [vmem:[%s349 + $0x2e8] sm:$0xff]
                  %414 = vst [vmem:[%s350 + $0xf8] sm:$0xff] %v413
                  %v415 = vld [vmem:[%s349 + $0x300] sm:$0xff]
                  %416 = vst [vmem:[%s350 + $0x100] sm:$0xff] %v415
                  %v417 = vld [vmem:[%s349 + $0x318] sm:$0xff]
                  %418 = vst [vmem:[%s350 + $0x108] sm:$0xff] %v417
                  %v419 = vld [vmem:[%s349 + $0x330] sm:$0xff]
                  %420 = vst [vmem:[%s350 + $0x110] sm:$0xff] %v419
                  %v421 = vld [vmem:[%s349 + $0x348] sm:$0xff]
                  %422 = vst [vmem:[%s350 + $0x118] sm:$0xff] %v421
                  %v423 = vld [vmem:[%s349 + $0x360] sm:$0xff]
                  %424 = vst [vmem:[%s350 + $0x120] sm:$0xff] %v423
                  %v425 = vld [vmem:[%s349 + $0x378] sm:$0xff]
                  %426 = vst [vmem:[%s350 + $0x128] sm:$0xff] %v425
                  %v427 = vld [vmem:[%s349 + $0x390] sm:$0xff]
                  %428 = vst [vmem:[%s350 + $0x130] sm:$0xff] %v427
                  %v429 = vld [vmem:[%s349 + $0x3a8] sm:$0xff]
                  %430 = vst [vmem:[%s350 + $0x138] sm:$0xff] %v429
                  %v431 = vld [vmem:[%s349 + $0x3c0] sm:$0xff]
                  %432 = vst [vmem:[%s350 + $0x140] sm:$0xff] %v431
                  %v433 = vld [vmem:[%s349 + $0x3d8] sm:$0xff]
                  %434 = vst [vmem:[%s350 + $0x148] sm:$0xff] %v433
                  %v435 = vld [vmem:[%s349 + $0x3f0] sm:$0xff]
                  %436 = vst [vmem:[%s350 + $0x150] sm:$0xff] %v435
                  %v437 = vld [vmem:[%s349 + $0x408] sm:$0xff]
                  %438 = vst [vmem:[%s350 + $0x158] sm:$0xff] %v437
                  %v439 = vld [vmem:[%s349 + $0x420] sm:$0xff]
                  %440 = vst [vmem:[%s350 + $0x160] sm:$0xff] %v439
                  %v441 = vld [vmem:[%s349 + $0x438] sm:$0xff]
                  %442 = vst [vmem:[%s350 + $0x168] sm:$0xff] %v441
                  %v443 = vld [vmem:[%s349 + $0x450] sm:$0xff]
                  %444 = vst [vmem:[%s350 + $0x170] sm:$0xff] %v443
                  %v445 = vld [vmem:[%s349 + $0x468] sm:$0xff]
                  %446 = vst [vmem:[%s350 + $0x178] sm:$0xff] %v445
                  %v447 = vld [vmem:[%s349 + $0x480] sm:$0xff]
                  %448 = vst [vmem:[%s350 + $0x180] sm:$0xff] %v447
                  %v449 = vld [vmem:[%s349 + $0x498] sm:$0xff]
                  %450 = vst [vmem:[%s350 + $0x188] sm:$0xff] %v449
                  %v451 = vld [vmem:[%s349 + $0x4b0] sm:$0xff]
                  %452 = vst [vmem:[%s350 + $0x190] sm:$0xff] %v451
                  %v453 = vld [vmem:[%s349 + $0x4c8] sm:$0xff]
                  %454 = vst [vmem:[%s350 + $0x198] sm:$0xff] %v453
                  %v455 = vld [vmem:[%s349 + $0x4e0] sm:$0xff]
                  %456 = vst [vmem:[%s350 + $0x1a0] sm:$0xff] %v455
                  %v457 = vld [vmem:[%s349 + $0x4f8] sm:$0xff]
                  %458 = vst [vmem:[%s350 + $0x1a8] sm:$0xff] %v457
                  %v459 = vld [vmem:[%s349 + $0x510] sm:$0xff]
                  %460 = vst [vmem:[%s350 + $0x1b0] sm:$0xff] %v459
                  %v461 = vld [vmem:[%s349 + $0x528] sm:$0xff]
                  %462 = vst [vmem:[%s350 + $0x1b8] sm:$0xff] %v461
                  %v463 = vld [vmem:[%s349 + $0x540] sm:$0xff]
                  %464 = vst [vmem:[%s350 + $0x1c0] sm:$0xff] %v463
                  %v465 = vld [vmem:[%s349 + $0x558] sm:$0xff]
                  %466 = vst [vmem:[%s350 + $0x1c8] sm:$0xff] %v465
                  %v467 = vld [vmem:[%s349 + $0x570] sm:$0xff]
                  %468 = vst [vmem:[%s350 + $0x1d0] sm:$0xff] %v467
                  %v469 = vld [vmem:[%s349 + $0x588] sm:$0xff]
                  %470 = vst [vmem:[%s350 + $0x1d8] sm:$0xff] %v469
                  %v471 = vld [vmem:[%s349 + $0x5a0] sm:$0xff]
                  %472 = vst [vmem:[%s350 + $0x1e0] sm:$0xff] %v471
                  %v473 = vld [vmem:[%s349 + $0x5b8] sm:$0xff]
                  %474 = vst [vmem:[%s350 + $0x1e8] sm:$0xff] %v473
                  %v475 = vld [vmem:[%s349 + $0x5d0] sm:$0xff]
                  %476 = vst [vmem:[%s350 + $0x1f0] sm:$0xff] %v475
                  %v477 = vld [vmem:[%s349 + $0x5e8] sm:$0xff]
                  %478 = vst [vmem:[%s350 + $0x1f8] sm:$0xff] %v477
                $region56: #{tpu_custom_call.1} parent=50 // loop_footer
                  %s348 = sadd.s32 1, %s344
                $region57: #{tpu_custom_call.1} parent=50 // loop_footer_branch
                  %343 = sbr.rel target = $region53
                $region58: #{tpu_custom_call.1} parent=50 // loop_exit
                  _
              $region51: #{tpu_custom_call.1} parent=35 // pred_fallthru
                _
              // Predicated region
              $region59: #{tpu_custom_call.1} parent=35 // pred_check
                _
              $region60: #{tpu_custom_call.1} parent=35 // pred_check_branch
                %480 = sbr.rel target = $region62
              $region61: #{tpu_custom_call.1} parent=35 // pred_region
                _
              $region62: #{tpu_custom_call.1} parent=35 // pred_fallthru
                _
            $region36: #{tpu_custom_call.1} parent=31 // pred_fallthru
              _
            // Predicated region
            $region37: #{tpu_custom_call.1} parent=31 // pred_check
              _
            $region38: #{tpu_custom_call.1} parent=31 // pred_check_branch
              %203 = sbr.rel target = $region40
            $region39: #{tpu_custom_call.1} parent=31 // pred_region
              loop: start=0, step=1, limit=1
              $region41: #{tpu_custom_call.1} parent=39 // loop_pre_header
                _
              $region42: #{tpu_custom_call.1} parent=39 // loop_header
                %s206 = sphi 0, %s210
                %p207 = scmp.ge.s32.totalorder %s206, 1
                %s211 = sphi %s197, %s197
                %s212 = sphi %s193, %s193
              $region43: #{tpu_custom_call.1} parent=39 // loop_header_branch
                %209 = sbr.rel (%p207) target = $region47
              $region44: #{tpu_custom_call.1} parent=39 // loop_body
                %v213 = vld [vmem:[%s211] sm:$0xff]
                %214 = vst [vmem:[%s212] sm:$0xff] %v213
                %v215 = vld [vmem:[%s211 + $0x18] sm:$0xff]
                %216 = vst [vmem:[%s212 + $0x8] sm:$0xff] %v215
                %v217 = vld [vmem:[%s211 + $0x30] sm:$0xff]
                %218 = vst [vmem:[%s212 + $0x10] sm:$0xff] %v217
                %v219 = vld [vmem:[%s211 + $0x48] sm:$0xff]
                %220 = vst [vmem:[%s212 + $0x18] sm:$0xff] %v219
                %v221 = vld [vmem:[%s211 + $0x60] sm:$0xff]
                %222 = vst [vmem:[%s212 + $0x20] sm:$0xff] %v221
                %v223 = vld [vmem:[%s211 + $0x78] sm:$0xff]
                %224 = vst [vmem:[%s212 + $0x28] sm:$0xff] %v223
                %v225 = vld [vmem:[%s211 + $0x90] sm:$0xff]
                %226 = vst [vmem:[%s212 + $0x30] sm:$0xff] %v225
                %v227 = vld [vmem:[%s211 + $0xa8] sm:$0xff]
                %228 = vst [vmem:[%s212 + $0x38] sm:$0xff] %v227
                %v229 = vld [vmem:[%s211 + $0xc0] sm:$0xff]
                %230 = vst [vmem:[%s212 + $0x40] sm:$0xff] %v229
                %v231 = vld [vmem:[%s211 + $0xd8] sm:$0xff]
                %232 = vst [vmem:[%s212 + $0x48] sm:$0xff] %v231
                %v233 = vld [vmem:[%s211 + $0xf0] sm:$0xff]
                %234 = vst [vmem:[%s212 + $0x50] sm:$0xff] %v233
                %v235 = vld [vmem:[%s211 + $0x108] sm:$0xff]
                %236 = vst [vmem:[%s212 + $0x58] sm:$0xff] %v235
                %v237 = vld [vmem:[%s211 + $0x120] sm:$0xff]
                %238 = vst [vmem:[%s212 + $0x60] sm:$0xff] %v237
                %v239 = vld [vmem:[%s211 + $0x138] sm:$0xff]
                %240 = vst [vmem:[%s212 + $0x68] sm:$0xff] %v239
                %v241 = vld [vmem:[%s211 + $0x150] sm:$0xff]
                %242 = vst [vmem:[%s212 + $0x70] sm:$0xff] %v241
                %v243 = vld [vmem:[%s211 + $0x168] sm:$0xff]
                %244 = vst [vmem:[%s212 + $0x78] sm:$0xff] %v243
                %v245 = vld [vmem:[%s211 + $0x180] sm:$0xff]
                %246 = vst [vmem:[%s212 + $0x80] sm:$0xff] %v245
                %v247 = vld [vmem:[%s211 + $0x198] sm:$0xff]
                %248 = vst [vmem:[%s212 + $0x88] sm:$0xff] %v247
                %v249 = vld [vmem:[%s211 + $0x1b0] sm:$0xff]
                %250 = vst [vmem:[%s212 + $0x90] sm:$0xff] %v249
                %v251 = vld [vmem:[%s211 + $0x1c8] sm:$0xff]
                %252 = vst [vmem:[%s212 + $0x98] sm:$0xff] %v251
                %v253 = vld [vmem:[%s211 + $0x1e0] sm:$0xff]
                %254 = vst [vmem:[%s212 + $0xa0] sm:$0xff] %v253
                %v255 = vld [vmem:[%s211 + $0x1f8] sm:$0xff]
                %256 = vst [vmem:[%s212 + $0xa8] sm:$0xff] %v255
                %v257 = vld [vmem:[%s211 + $0x210] sm:$0xff]
                %258 = vst [vmem:[%s212 + $0xb0] sm:$0xff] %v257
                %v259 = vld [vmem:[%s211 + $0x228] sm:$0xff]
                %260 = vst [vmem:[%s212 + $0xb8] sm:$0xff] %v259
                %v261 = vld [vmem:[%s211 + $0x240] sm:$0xff]
                %262 = vst [vmem:[%s212 + $0xc0] sm:$0xff] %v261
                %v263 = vld [vmem:[%s211 + $0x258] sm:$0xff]
                %264 = vst [vmem:[%s212 + $0xc8] sm:$0xff] %v263
                %v265 = vld [vmem:[%s211 + $0x270] sm:$0xff]
                %266 = vst [vmem:[%s212 + $0xd0] sm:$0xff] %v265
                %v267 = vld [vmem:[%s211 + $0x288] sm:$0xff]
                %268 = vst [vmem:[%s212 + $0xd8] sm:$0xff] %v267
                %v269 = vld [vmem:[%s211 + $0x2a0] sm:$0xff]
                %270 = vst [vmem:[%s212 + $0xe0] sm:$0xff] %v269
                %v271 = vld [vmem:[%s211 + $0x2b8] sm:$0xff]
                %272 = vst [vmem:[%s212 + $0xe8] sm:$0xff] %v271
                %v273 = vld [vmem:[%s211 + $0x2d0] sm:$0xff]
                %274 = vst [vmem:[%s212 + $0xf0] sm:$0xff] %v273
                %v275 = vld [vmem:[%s211 + $0x2e8] sm:$0xff]
                %276 = vst [vmem:[%s212 + $0xf8] sm:$0xff] %v275
                %v277 = vld [vmem:[%s211 + $0x300] sm:$0xff]
                %278 = vst [vmem:[%s212 + $0x100] sm:$0xff] %v277
                %v279 = vld [vmem:[%s211 + $0x318] sm:$0xff]
                %280 = vst [vmem:[%s212 + $0x108] sm:$0xff] %v279
                %v281 = vld [vmem:[%s211 + $0x330] sm:$0xff]
                %282 = vst [vmem:[%s212 + $0x110] sm:$0xff] %v281
                %v283 = vld [vmem:[%s211 + $0x348] sm:$0xff]
                %284 = vst [vmem:[%s212 + $0x118] sm:$0xff] %v283
                %v285 = vld [vmem:[%s211 + $0x360] sm:$0xff]
                %286 = vst [vmem:[%s212 + $0x120] sm:$0xff] %v285
                %v287 = vld [vmem:[%s211 + $0x378] sm:$0xff]
                %288 = vst [vmem:[%s212 + $0x128] sm:$0xff] %v287
                %v289 = vld [vmem:[%s211 + $0x390] sm:$0xff]
                %290 = vst [vmem:[%s212 + $0x130] sm:$0xff] %v289
                %v291 = vld [vmem:[%s211 + $0x3a8] sm:$0xff]
                %292 = vst [vmem:[%s212 + $0x138] sm:$0xff] %v291
                %v293 = vld [vmem:[%s211 + $0x3c0] sm:$0xff]
                %294 = vst [vmem:[%s212 + $0x140] sm:$0xff] %v293
                %v295 = vld [vmem:[%s211 + $0x3d8] sm:$0xff]
                %296 = vst [vmem:[%s212 + $0x148] sm:$0xff] %v295
                %v297 = vld [vmem:[%s211 + $0x3f0] sm:$0xff]
                %298 = vst [vmem:[%s212 + $0x150] sm:$0xff] %v297
                %v299 = vld [vmem:[%s211 + $0x408] sm:$0xff]
                %300 = vst [vmem:[%s212 + $0x158] sm:$0xff] %v299
                %v301 = vld [vmem:[%s211 + $0x420] sm:$0xff]
                %302 = vst [vmem:[%s212 + $0x160] sm:$0xff] %v301
                %v303 = vld [vmem:[%s211 + $0x438] sm:$0xff]
                %304 = vst [vmem:[%s212 + $0x168] sm:$0xff] %v303
                %v305 = vld [vmem:[%s211 + $0x450] sm:$0xff]
                %306 = vst [vmem:[%s212 + $0x170] sm:$0xff] %v305
                %v307 = vld [vmem:[%s211 + $0x468] sm:$0xff]
                %308 = vst [vmem:[%s212 + $0x178] sm:$0xff] %v307
                %v309 = vld [vmem:[%s211 + $0x480] sm:$0xff]
                %310 = vst [vmem:[%s212 + $0x180] sm:$0xff] %v309
                %v311 = vld [vmem:[%s211 + $0x498] sm:$0xff]
                %312 = vst [vmem:[%s212 + $0x188] sm:$0xff] %v311
                %v313 = vld [vmem:[%s211 + $0x4b0] sm:$0xff]
                %314 = vst [vmem:[%s212 + $0x190] sm:$0xff] %v313
                %v315 = vld [vmem:[%s211 + $0x4c8] sm:$0xff]
                %316 = vst [vmem:[%s212 + $0x198] sm:$0xff] %v315
                %v317 = vld [vmem:[%s211 + $0x4e0] sm:$0xff]
                %318 = vst [vmem:[%s212 + $0x1a0] sm:$0xff] %v317
                %v319 = vld [vmem:[%s211 + $0x4f8] sm:$0xff]
                %320 = vst [vmem:[%s212 + $0x1a8] sm:$0xff] %v319
                %v321 = vld [vmem:[%s211 + $0x510] sm:$0xff]
                %322 = vst [vmem:[%s212 + $0x1b0] sm:$0xff] %v321
                %v323 = vld [vmem:[%s211 + $0x528] sm:$0xff]
                %324 = vst [vmem:[%s212 + $0x1b8] sm:$0xff] %v323
                %v325 = vld [vmem:[%s211 + $0x540] sm:$0xff]
                %326 = vst [vmem:[%s212 + $0x1c0] sm:$0xff] %v325
                %v327 = vld [vmem:[%s211 + $0x558] sm:$0xff]
                %328 = vst [vmem:[%s212 + $0x1c8] sm:$0xff] %v327
                %v329 = vld [vmem:[%s211 + $0x570] sm:$0xff]
                %330 = vst [vmem:[%s212 + $0x1d0] sm:$0xff] %v329
                %v331 = vld [vmem:[%s211 + $0x588] sm:$0xff]
                %332 = vst [vmem:[%s212 + $0x1d8] sm:$0xff] %v331
                %v333 = vld [vmem:[%s211 + $0x5a0] sm:$0xff]
                %334 = vst [vmem:[%s212 + $0x1e0] sm:$0xff] %v333
                %v335 = vld [vmem:[%s211 + $0x5b8] sm:$0xff]
                %336 = vst [vmem:[%s212 + $0x1e8] sm:$0xff] %v335
                %v337 = vld [vmem:[%s211 + $0x5d0] sm:$0xff]
                %338 = vst [vmem:[%s212 + $0x1f0] sm:$0xff] %v337
                %v339 = vld [vmem:[%s211 + $0x5e8] sm:$0xff]
                %340 = vst [vmem:[%s212 + $0x1f8] sm:$0xff] %v339
              $region45: #{tpu_custom_call.1} parent=39 // loop_footer
                %s210 = sadd.s32 1, %s206
              $region46: #{tpu_custom_call.1} parent=39 // loop_footer_branch
                %205 = sbr.rel target = $region42
              $region47: #{tpu_custom_call.1} parent=39 // loop_exit
                _
            $region40: #{tpu_custom_call.1} parent=31 // pred_fallthru
              _
          $region32: #{tpu_custom_call.1} parent=27 // pred_fallthru
            _
          %481 = vnop
        $region28: #{tpu_custom_call.1} parent=23 // pred_fallthru
          _
        // Predicated region
        $region63: #{tpu_custom_call.1} parent=23 // pred_check
          %p482 = pneg %p76
        $region64: #{tpu_custom_call.1} parent=23 // pred_check_branch
          %484 = sbr.rel (%p482) target = $region66
        $region65: #{tpu_custom_call.1} parent=23 // pred_region
          %p485 = scmp.lt.s32.totalorder %s21, 1
          %s486 = scalar_select %p485, %s21, 1
          %p487 = scmp.lt.s32.totalorder %s22, 2
          %s488 = scalar_select %p487, %s22, 2
          %s489 = smul.addr %s488, 64
          %s490 = smul.addr %s486, 192
          %s491 = sadd.s32 %s489, %s490
          %s492 = smul.addr %s491, 8
          %s493 = scalar_lea.vmem %s1, %s492
        $region66: #{tpu_custom_call.1} parent=23 // pred_fallthru
          _
      $region24: #{tpu_custom_call.1} parent=5 // pred_fallthru
        _
      %p494 = scmp.le.s32.totalorder 1, %s14
      %p495 = scmp.lt.s32.totalorder %s14, 7
      %p496 = pnand %p494, %p495
      %p497 = pneg %p496
      // Predicated region
      $region67: #{tpu_custom_call.1} parent=5 // pred_check
        _
      $region68: #{tpu_custom_call.1} parent=5 // pred_check_branch
        %499 = sbr.rel (%p496) target = $region70
      $region69: #{tpu_custom_call.1} parent=5 // pred_region
        %s500 = ssub.s32 %s14, 1
        %s501 = sand.u32 %s41, 1
        %s502 = sand.u32 %s41, 1
        %s503 = smul.addr %s502, 512
        %s504 = scalar_lea.vmem [#allocation2], %s503
        // Predicated region
        $region71: #{tpu_custom_call.1} parent=69 // pred_check
          %p505 = pneg %p54
        $region72: #{tpu_custom_call.1} parent=69 // pred_check_branch
          %507 = sbr.rel (%p505) target = $region74
        $region73: #{tpu_custom_call.1} parent=69 // pred_region
          _
        $region74: #{tpu_custom_call.1} parent=69 // pred_fallthru
          _
        // Predicated region
        $region75: #{tpu_custom_call.1} parent=69 // pred_check
          %p508 = pneg %p124
        $region76: #{tpu_custom_call.1} parent=69 // pred_check_branch
          %510 = sbr.rel (%p508) target = $region78
        $region77: #{tpu_custom_call.1} parent=69 // pred_region
          %511 = dma.done [#allocation4], 16384
        $region78: #{tpu_custom_call.1} parent=69 // pred_fallthru
          _
        %s512 = sand.u32 %s41, 1
        %s513 = sand.u32 %s41, 1
        %s514 = smul.addr %s513, 512
        %s515 = scalar_lea.vmem [#allocation2], %s514
        %p516 = pneg %p54
        %p517 = pneg %p51
        %p518 = scmp.lt.s32.totalorder %s23, 1
        %s519 = scalar_select %p518, %s23, 1
        %p520 = scmp.lt.s32.totalorder %s24, 2
        %s521 = scalar_select %p520, %s24, 2
        %s522 = smul.addr %s521, 64
        %s523 = smul.addr %s519, 192
        %s524 = sadd.s32 %s522, %s523
        %s525 = smul.addr %s524, 8
        %s526 = scalar_lea.vmem %s1, %s525
        %p527 = pneg %p82
        %p528 = pneg %p79
        %p529 = pneg %p103
        %p530 = pneg %p100
        %p531 = pneg %p124
        %p532 = pneg %p121
        %p533 = pneg %p152
        %p534 = pneg %p149
        %s535 = sand.u32 %s139, 1
        %s536 = scalar_lea.sflag [#allocation5], %s535
        %s537 = sand.u32 %s139, 1
        %s538 = smul.addr %s537, 512
        %s539 = scalar_lea.vmem [#allocation6], %s538
        %p540 = scmp.lt.s32.totalorder %s23, 1
        %s541 = scalar_select %p540, %s23, 1
        %p542 = scmp.lt.s32.totalorder %s24, 2
        %s543 = scalar_select %p542, %s24, 2
        %s544 = smul.addr %s543, 64
        %s545 = smul.addr %s541, 192
        %s546 = sadd.s32 %s544, %s545
        %s547 = smul.addr %s546, 8
        %s548 = scalar_lea.vmem %s1, %s547
        %v550 = vld [vmem:[%s504] sm:$0xff]
        %v551 = vld [vmem:[%s504 + $0x8] sm:$0xff]
        %v552 = vld [vmem:[%s504 + $0x10] sm:$0xff]
        %v553 = vld [vmem:[%s504 + $0x18] sm:$0xff]
        %v554 = vld [vmem:[%s504 + $0x20] sm:$0xff]
        %v555 = vld [vmem:[%s504 + $0x28] sm:$0xff]
        %v556 = vld [vmem:[%s504 + $0x30] sm:$0xff]
        %v557 = vld [vmem:[%s504 + $0x38] sm:$0xff]
        %v558 = vld [vmem:[%s504 + $0x40] sm:$0xff]
        %v559 = vld [vmem:[%s504 + $0x48] sm:$0xff]
        %v560 = vld [vmem:[%s504 + $0x50] sm:$0xff]
        %v561 = vld [vmem:[%s504 + $0x58] sm:$0xff]
        %v562 = vld [vmem:[%s504 + $0x60] sm:$0xff]
        %v563 = vld [vmem:[%s504 + $0x68] sm:$0xff]
        %v564 = vld [vmem:[%s504 + $0x70] sm:$0xff]
        %v565 = vld [vmem:[%s504 + $0x78] sm:$0xff]
        %v566 = vld [vmem:[%s504 + $0x80] sm:$0xff]
        %v567 = vld [vmem:[%s504 + $0x88] sm:$0xff]
        %v568 = vld [vmem:[%s504 + $0x90] sm:$0xff]
        %v569 = vld [vmem:[%s504 + $0x98] sm:$0xff]
        %v570 = vld [vmem:[%s504 + $0xa0] sm:$0xff]
        %v571 = vld [vmem:[%s504 + $0xa8] sm:$0xff]
        %v572 = vld [vmem:[%s504 + $0xb0] sm:$0xff]
        %v573 = vld [vmem:[%s504 + $0xb8] sm:$0xff]
        %v574 = vld [vmem:[%s504 + $0xc0] sm:$0xff]
        %v575 = vld [vmem:[%s504 + $0xc8] sm:$0xff]
        %v576 = vld [vmem:[%s504 + $0xd0] sm:$0xff]
        %v577 = vld [vmem:[%s504 + $0xd8] sm:$0xff]
        %v578 = vld [vmem:[%s504 + $0xe0] sm:$0xff]
        %v579 = vld [vmem:[%s504 + $0xe8] sm:$0xff]
        %v580 = vld [vmem:[%s504 + $0xf0] sm:$0xff]
        %v581 = vld [vmem:[%s504 + $0xf8] sm:$0xff]
        %v582 = vld [vmem:[%s504 + $0x100] sm:$0xff]
        %v583 = vld [vmem:[%s504 + $0x108] sm:$0xff]
        %v584 = vld [vmem:[%s504 + $0x110] sm:$0xff]
        %v585 = vld [vmem:[%s504 + $0x118] sm:$0xff]
        %v586 = vld [vmem:[%s504 + $0x120] sm:$0xff]
        %v587 = vld [vmem:[%s504 + $0x128] sm:$0xff]
        %v588 = vld [vmem:[%s504 + $0x130] sm:$0xff]
        %v589 = vld [vmem:[%s504 + $0x138] sm:$0xff]
        %v590 = vld [vmem:[%s504 + $0x140] sm:$0xff]
        %v591 = vld [vmem:[%s504 + $0x148] sm:$0xff]
        %v592 = vld [vmem:[%s504 + $0x150] sm:$0xff]
        %v593 = vld [vmem:[%s504 + $0x158] sm:$0xff]
        %v594 = vld [vmem:[%s504 + $0x160] sm:$0xff]
        %v595 = vld [vmem:[%s504 + $0x168] sm:$0xff]
        %v596 = vld [vmem:[%s504 + $0x170] sm:$0xff]
        %v597 = vld [vmem:[%s504 + $0x178] sm:$0xff]
        %v598 = vld [vmem:[%s504 + $0x180] sm:$0xff]
        %v599 = vld [vmem:[%s504 + $0x188] sm:$0xff]
        %v600 = vld [vmem:[%s504 + $0x190] sm:$0xff]
        %v601 = vld [vmem:[%s504 + $0x198] sm:$0xff]
        %v602 = vld [vmem:[%s504 + $0x1a0] sm:$0xff]
        %v603 = vld [vmem:[%s504 + $0x1a8] sm:$0xff]
        %v604 = vld [vmem:[%s504 + $0x1b0] sm:$0xff]
        %v605 = vld [vmem:[%s504 + $0x1b8] sm:$0xff]
        %v606 = vld [vmem:[%s504 + $0x1c0] sm:$0xff]
        %v607 = vld [vmem:[%s504 + $0x1c8] sm:$0xff]
        %v608 = vld [vmem:[%s504 + $0x1d0] sm:$0xff]
        %v609 = vld [vmem:[%s504 + $0x1d8] sm:$0xff]
        %v610 = vld [vmem:[%s504 + $0x1e0] sm:$0xff]
        %v611 = vld [vmem:[%s504 + $0x1e8] sm:$0xff]
        %v612 = vld [vmem:[%s504 + $0x1f0] sm:$0xff]
        %v613 = vld [vmem:[%s504 + $0x1f8] sm:$0xff]
        %v614 = vld [vmem:[%s2] sm:$0xff]
        %v615 = vld [vmem:[%s2 + $0x8] sm:$0xff]
        %v616 = vld [vmem:[%s2 + $0x10] sm:$0xff]
        %v617 = vld [vmem:[%s2 + $0x18] sm:$0xff]
        %v618 = vld [vmem:[%s2 + $0x20] sm:$0xff]
        %v619 = vld [vmem:[%s2 + $0x28] sm:$0xff]
        %v620 = vld [vmem:[%s2 + $0x30] sm:$0xff]
        %v621 = vld [vmem:[%s2 + $0x38] sm:$0xff]
        %v622 = vld [vmem:[%s2 + $0x40] sm:$0xff]
        %v623 = vld [vmem:[%s2 + $0x48] sm:$0xff]
        %v624 = vld [vmem:[%s2 + $0x50] sm:$0xff]
        %v625 = vld [vmem:[%s2 + $0x58] sm:$0xff]
        %v626 = vld [vmem:[%s2 + $0x60] sm:$0xff]
        %v627 = vld [vmem:[%s2 + $0x68] sm:$0xff]
        %v628 = vld [vmem:[%s2 + $0x70] sm:$0xff]
        %v629 = vld [vmem:[%s2 + $0x78] sm:$0xff]
        %v630 = vld [vmem:[%s2 + $0x80] sm:$0xff]
        %v631 = vld [vmem:[%s2 + $0x88] sm:$0xff]
        %v632 = vld [vmem:[%s2 + $0x90] sm:$0xff]
        %v633 = vld [vmem:[%s2 + $0x98] sm:$0xff]
        %v634 = vld [vmem:[%s2 + $0xa0] sm:$0xff]
        %v635 = vld [vmem:[%s2 + $0xa8] sm:$0xff]
        %v636 = vld [vmem:[%s2 + $0xb0] sm:$0xff]
        %v637 = vld [vmem:[%s2 + $0xb8] sm:$0xff]
        %v638 = vld [vmem:[%s2 + $0xc0] sm:$0xff]
        %v639 = vld [vmem:[%s2 + $0xc8] sm:$0xff]
        %v640 = vld [vmem:[%s2 + $0xd0] sm:$0xff]
        %v641 = vld [vmem:[%s2 + $0xd8] sm:$0xff]
        %v642 = vld [vmem:[%s2 + $0xe0] sm:$0xff]
        %v643 = vld [vmem:[%s2 + $0xe8] sm:$0xff]
        %v644 = vld [vmem:[%s2 + $0xf0] sm:$0xff]
        %v645 = vld [vmem:[%s2 + $0xf8] sm:$0xff]
        %v646 = vld [vmem:[%s2 + $0x100] sm:$0xff]
        %v647 = vld [vmem:[%s2 + $0x108] sm:$0xff]
        %v648 = vld [vmem:[%s2 + $0x110] sm:$0xff]
        %v649 = vld [vmem:[%s2 + $0x118] sm:$0xff]
        %v650 = vld [vmem:[%s2 + $0x120] sm:$0xff]
        %v651 = vld [vmem:[%s2 + $0x128] sm:$0xff]
        %v652 = vld [vmem:[%s2 + $0x130] sm:$0xff]
        %v653 = vld [vmem:[%s2 + $0x138] sm:$0xff]
        %v654 = vld [vmem:[%s2 + $0x140] sm:$0xff]
        %v655 = vld [vmem:[%s2 + $0x148] sm:$0xff]
        %v656 = vld [vmem:[%s2 + $0x150] sm:$0xff]
        %v657 = vld [vmem:[%s2 + $0x158] sm:$0xff]
        %v658 = vld [vmem:[%s2 + $0x160] sm:$0xff]
        %v659 = vld [vmem:[%s2 + $0x168] sm:$0xff]
        %v660 = vld [vmem:[%s2 + $0x170] sm:$0xff]
        %v661 = vld [vmem:[%s2 + $0x178] sm:$0xff]
        %v662 = vld [vmem:[%s2 + $0x180] sm:$0xff]
        %v663 = vld [vmem:[%s2 + $0x188] sm:$0xff]
        %v664 = vld [vmem:[%s2 + $0x190] sm:$0xff]
        %v665 = vld [vmem:[%s2 + $0x198] sm:$0xff]
        %v666 = vld [vmem:[%s2 + $0x1a0] sm:$0xff]
        %v667 = vld [vmem:[%s2 + $0x1a8] sm:$0xff]
        %v668 = vld [vmem:[%s2 + $0x1b0] sm:$0xff]
        %v669 = vld [vmem:[%s2 + $0x1b8] sm:$0xff]
        %v670 = vld [vmem:[%s2 + $0x1c0] sm:$0xff]
        %v671 = vld [vmem:[%s2 + $0x1c8] sm:$0xff]
        %v672 = vld [vmem:[%s2 + $0x1d0] sm:$0xff]
        %v673 = vld [vmem:[%s2 + $0x1d8] sm:$0xff]
        %v674 = vld [vmem:[%s2 + $0x1e0] sm:$0xff]
        %v675 = vld [vmem:[%s2 + $0x1e8] sm:$0xff]
        %v676 = vld [vmem:[%s2 + $0x1f0] sm:$0xff]
        %v677 = vld [vmem:[%s2 + $0x1f8] sm:$0xff]
        %v678 = vmax.f32 %v550, 0.0
        %v679 = vmax.f32 %v551, 0.0
        %v680 = vmax.f32 %v552, 0.0
        %v681 = vmax.f32 %v553, 0.0
        %v682 = vmax.f32 %v554, 0.0
        %v683 = vmax.f32 %v555, 0.0
        %v684 = vmax.f32 %v556, 0.0
        %v685 = vmax.f32 %v557, 0.0
        %v686 = vmax.f32 %v558, 0.0
        %v687 = vmax.f32 %v559, 0.0
        %v688 = vmax.f32 %v560, 0.0
        %v689 = vmax.f32 %v561, 0.0
        %v690 = vmax.f32 %v562, 0.0
        %v691 = vmax.f32 %v563, 0.0
        %v692 = vmax.f32 %v564, 0.0
        %v693 = vmax.f32 %v565, 0.0
        %v694 = vmax.f32 %v566, 0.0
        %v695 = vmax.f32 %v567, 0.0
        %v696 = vmax.f32 %v568, 0.0
        %v697 = vmax.f32 %v569, 0.0
        %v698 = vmax.f32 %v570, 0.0
        %v699 = vmax.f32 %v571, 0.0
        %v700 = vmax.f32 %v572, 0.0
        %v701 = vmax.f32 %v573, 0.0
        %v702 = vmax.f32 %v574, 0.0
        %v703 = vmax.f32 %v575, 0.0
        %v704 = vmax.f32 %v576, 0.0
        %v705 = vmax.f32 %v577, 0.0
        %v706 = vmax.f32 %v578, 0.0
        %v707 = vmax.f32 %v579, 0.0
        %v708 = vmax.f32 %v580, 0.0
        %v709 = vmax.f32 %v581, 0.0
        %v710 = vmax.f32 %v582, 0.0
        %v711 = vmax.f32 %v583, 0.0
        %v712 = vmax.f32 %v584, 0.0
        %v713 = vmax.f32 %v585, 0.0
        %v714 = vmax.f32 %v586, 0.0
        %v715 = vmax.f32 %v587, 0.0
        %v716 = vmax.f32 %v588, 0.0
        %v717 = vmax.f32 %v589, 0.0
        %v718 = vmax.f32 %v590, 0.0
        %v719 = vmax.f32 %v591, 0.0
        %v720 = vmax.f32 %v592, 0.0
        %v721 = vmax.f32 %v593, 0.0
        %v722 = vmax.f32 %v594, 0.0
        %v723 = vmax.f32 %v595, 0.0
        %v724 = vmax.f32 %v596, 0.0
        %v725 = vmax.f32 %v597, 0.0
        %v726 = vmax.f32 %v598, 0.0
        %v727 = vmax.f32 %v599, 0.0
        %v728 = vmax.f32 %v600, 0.0
        %v729 = vmax.f32 %v601, 0.0
        %v730 = vmax.f32 %v602, 0.0
        %v731 = vmax.f32 %v603, 0.0
        %v732 = vmax.f32 %v604, 0.0
        %v733 = vmax.f32 %v605, 0.0
        %v734 = vmax.f32 %v606, 0.0
        %v735 = vmax.f32 %v607, 0.0
        %v736 = vmax.f32 %v608, 0.0
        %v737 = vmax.f32 %v609, 0.0
        %v738 = vmax.f32 %v610, 0.0
        %v739 = vmax.f32 %v611, 0.0
        %v740 = vmax.f32 %v612, 0.0
        %v741 = vmax.f32 %v613, 0.0
        %743 = vset.pattern.permute.xlu0 0
        %744 = vperm.xlu0 %743, %v614
        %v745 = vpop.permute.xlu0 %744
        %748 = vset.pattern.permute.xlu0 0
        %749 = vperm.xlu0 %748, %v615
        %v750 = vpop.permute.xlu0 %749
        %753 = vset.pattern.permute.xlu0 0
        %754 = vperm.xlu0 %753, %v616
        %v755 = vpop.permute.xlu0 %754
        %758 = vset.pattern.permute.xlu0 0
        %759 = vperm.xlu0 %758, %v617
        %v760 = vpop.permute.xlu0 %759
        %763 = vset.pattern.permute.xlu0 0
        %764 = vperm.xlu0 %763, %v618
        %v765 = vpop.permute.xlu0 %764
        %768 = vset.pattern.permute.xlu0 0
        %769 = vperm.xlu0 %768, %v619
        %v770 = vpop.permute.xlu0 %769
        %773 = vset.pattern.permute.xlu0 0
        %774 = vperm.xlu0 %773, %v620
        %v775 = vpop.permute.xlu0 %774
        %778 = vset.pattern.permute.xlu0 0
        %779 = vperm.xlu0 %778, %v621
        %v780 = vpop.permute.xlu0 %779
        %783 = vset.pattern.permute.xlu0 0
        %784 = vperm.xlu0 %783, %v622
        %v785 = vpop.permute.xlu0 %784
        %788 = vset.pattern.permute.xlu0 0
        %789 = vperm.xlu0 %788, %v623
        %v790 = vpop.permute.xlu0 %789
        %793 = vset.pattern.permute.xlu0 0
        %794 = vperm.xlu0 %793, %v624
        %v795 = vpop.permute.xlu0 %794
        %798 = vset.pattern.permute.xlu0 0
        %799 = vperm.xlu0 %798, %v625
        %v800 = vpop.permute.xlu0 %799
        %803 = vset.pattern.permute.xlu0 0
        %804 = vperm.xlu0 %803, %v626
        %v805 = vpop.permute.xlu0 %804
        %808 = vset.pattern.permute.xlu0 0
        %809 = vperm.xlu0 %808, %v627
        %v810 = vpop.permute.xlu0 %809
        %813 = vset.pattern.permute.xlu0 0
        %814 = vperm.xlu0 %813, %v628
        %v815 = vpop.permute.xlu0 %814
        %818 = vset.pattern.permute.xlu0 0
        %819 = vperm.xlu0 %818, %v629
        %v820 = vpop.permute.xlu0 %819
        %823 = vset.pattern.permute.xlu0 0
        %824 = vperm.xlu0 %823, %v630
        %v825 = vpop.permute.xlu0 %824
        %828 = vset.pattern.permute.xlu0 0
        %829 = vperm.xlu0 %828, %v631
        %v830 = vpop.permute.xlu0 %829
        %833 = vset.pattern.permute.xlu0 0
        %834 = vperm.xlu0 %833, %v632
        %v835 = vpop.permute.xlu0 %834
        %838 = vset.pattern.permute.xlu0 0
        %839 = vperm.xlu0 %838, %v633
        %v840 = vpop.permute.xlu0 %839
        %843 = vset.pattern.permute.xlu0 0
        %844 = vperm.xlu0 %843, %v634
        %v845 = vpop.permute.xlu0 %844
        %848 = vset.pattern.permute.xlu0 0
        %849 = vperm.xlu0 %848, %v635
        %v850 = vpop.permute.xlu0 %849
        %853 = vset.pattern.permute.xlu0 0
        %854 = vperm.xlu0 %853, %v636
        %v855 = vpop.permute.xlu0 %854
        %858 = vset.pattern.permute.xlu0 0
        %859 = vperm.xlu0 %858, %v637
        %v860 = vpop.permute.xlu0 %859
        %863 = vset.pattern.permute.xlu0 0
        %864 = vperm.xlu0 %863, %v638
        %v865 = vpop.permute.xlu0 %864
        %868 = vset.pattern.permute.xlu0 0
        %869 = vperm.xlu0 %868, %v639
        %v870 = vpop.permute.xlu0 %869
        %873 = vset.pattern.permute.xlu0 0
        %874 = vperm.xlu0 %873, %v640
        %v875 = vpop.permute.xlu0 %874
        %878 = vset.pattern.permute.xlu0 0
        %879 = vperm.xlu0 %878, %v641
        %v880 = vpop.permute.xlu0 %879
        %883 = vset.pattern.permute.xlu0 0
        %884 = vperm.xlu0 %883, %v642
        %v885 = vpop.permute.xlu0 %884
        %888 = vset.pattern.permute.xlu0 0
        %889 = vperm.xlu0 %888, %v643
        %v890 = vpop.permute.xlu0 %889
        %893 = vset.pattern.permute.xlu0 0
        %894 = vperm.xlu0 %893, %v644
        %v895 = vpop.permute.xlu0 %894
        %898 = vset.pattern.permute.xlu0 0
        %899 = vperm.xlu0 %898, %v645
        %v900 = vpop.permute.xlu0 %899
        %903 = vset.pattern.permute.xlu0 0
        %904 = vperm.xlu0 %903, %v646
        %v905 = vpop.permute.xlu0 %904
        %908 = vset.pattern.permute.xlu0 0
        %909 = vperm.xlu0 %908, %v647
        %v910 = vpop.permute.xlu0 %909
        %913 = vset.pattern.permute.xlu0 0
        %914 = vperm.xlu0 %913, %v648
        %v915 = vpop.permute.xlu0 %914
        %918 = vset.pattern.permute.xlu0 0
        %919 = vperm.xlu0 %918, %v649
        %v920 = vpop.permute.xlu0 %919
        %923 = vset.pattern.permute.xlu0 0
        %924 = vperm.xlu0 %923, %v650
        %v925 = vpop.permute.xlu0 %924
        %928 = vset.pattern.permute.xlu0 0
        %929 = vperm.xlu0 %928, %v651
        %v930 = vpop.permute.xlu0 %929
        %933 = vset.pattern.permute.xlu0 0
        %934 = vperm.xlu0 %933, %v652
        %v935 = vpop.permute.xlu0 %934
        %938 = vset.pattern.permute.xlu0 0
        %939 = vperm.xlu0 %938, %v653
        %v940 = vpop.permute.xlu0 %939
        %943 = vset.pattern.permute.xlu0 0
        %944 = vperm.xlu0 %943, %v654
        %v945 = vpop.permute.xlu0 %944
        %948 = vset.pattern.permute.xlu0 0
        %949 = vperm.xlu0 %948, %v655
        %v950 = vpop.permute.xlu0 %949
        %953 = vset.pattern.permute.xlu0 0
        %954 = vperm.xlu0 %953, %v656
        %v955 = vpop.permute.xlu0 %954
        %958 = vset.pattern.permute.xlu0 0
        %959 = vperm.xlu0 %958, %v657
        %v960 = vpop.permute.xlu0 %959
        %963 = vset.pattern.permute.xlu0 0
        %964 = vperm.xlu0 %963, %v658
        %v965 = vpop.permute.xlu0 %964
        %968 = vset.pattern.permute.xlu0 0
        %969 = vperm.xlu0 %968, %v659
        %v970 = vpop.permute.xlu0 %969
        %973 = vset.pattern.permute.xlu0 0
        %974 = vperm.xlu0 %973, %v660
        %v975 = vpop.permute.xlu0 %974
        %978 = vset.pattern.permute.xlu0 0
        %979 = vperm.xlu0 %978, %v661
        %v980 = vpop.permute.xlu0 %979
        %983 = vset.pattern.permute.xlu0 0
        %984 = vperm.xlu0 %983, %v662
        %v985 = vpop.permute.xlu0 %984
        %988 = vset.pattern.permute.xlu0 0
        %989 = vperm.xlu0 %988, %v663
        %v990 = vpop.permute.xlu0 %989
        %993 = vset.pattern.permute.xlu0 0
        %994 = vperm.xlu0 %993, %v664
        %v995 = vpop.permute.xlu0 %994
        %998 = vset.pattern.permute.xlu0 0
        %999 = vperm.xlu0 %998, %v665
        %v1000 = vpop.permute.xlu0 %999
        %1003 = vset.pattern.permute.xlu0 0
        %1004 = vperm.xlu0 %1003, %v666
        %v1005 = vpop.permute.xlu0 %1004
        %1008 = vset.pattern.permute.xlu0 0
        %1009 = vperm.xlu0 %1008, %v667
        %v1010 = vpop.permute.xlu0 %1009
        %1013 = vset.pattern.permute.xlu0 0
        %1014 = vperm.xlu0 %1013, %v668
        %v1015 = vpop.permute.xlu0 %1014
        %1018 = vset.pattern.permute.xlu0 0
        %1019 = vperm.xlu0 %1018, %v669
        %v1020 = vpop.permute.xlu0 %1019
        %1023 = vset.pattern.permute.xlu0 0
        %1024 = vperm.xlu0 %1023, %v670
        %v1025 = vpop.permute.xlu0 %1024
        %1028 = vset.pattern.permute.xlu0 0
        %1029 = vperm.xlu0 %1028, %v671
        %v1030 = vpop.permute.xlu0 %1029
        %1033 = vset.pattern.permute.xlu0 0
        %1034 = vperm.xlu0 %1033, %v672
        %v1035 = vpop.permute.xlu0 %1034
        %1038 = vset.pattern.permute.xlu0 0
        %1039 = vperm.xlu0 %1038, %v673
        %v1040 = vpop.permute.xlu0 %1039
        %1043 = vset.pattern.permute.xlu0 0
        %1044 = vperm.xlu0 %1043, %v674
        %v1045 = vpop.permute.xlu0 %1044
        %1048 = vset.pattern.permute.xlu0 0
        %1049 = vperm.xlu0 %1048, %v675
        %v1050 = vpop.permute.xlu0 %1049
        %1053 = vset.pattern.permute.xlu0 0
        %1054 = vperm.xlu0 %1053, %v676
        %v1055 = vpop.permute.xlu0 %1054
        %1058 = vset.pattern.permute.xlu0 0
        %1059 = vperm.xlu0 %1058, %v677
        %v1060 = vpop.permute.xlu0 %1059
        %v1062 = vmul.f32 %v678, %v745
        %v1063 = vmul.f32 %v679, %v750
        %v1064 = vmul.f32 %v680, %v755
        %v1065 = vmul.f32 %v681, %v760
        %v1066 = vmul.f32 %v682, %v765
        %v1067 = vmul.f32 %v683, %v770
        %v1068 = vmul.f32 %v684, %v775
        %v1069 = vmul.f32 %v685, %v780
        %v1070 = vmul.f32 %v686, %v785
        %v1071 = vmul.f32 %v687, %v790
        %v1072 = vmul.f32 %v688, %v795
        %v1073 = vmul.f32 %v689, %v800
        %v1074 = vmul.f32 %v690, %v805
        %v1075 = vmul.f32 %v691, %v810
        %v1076 = vmul.f32 %v692, %v815
        %v1077 = vmul.f32 %v693, %v820
        %v1078 = vmul.f32 %v694, %v825
        %v1079 = vmul.f32 %v695, %v830
        %v1080 = vmul.f32 %v696, %v835
        %v1081 = vmul.f32 %v697, %v840
        %v1082 = vmul.f32 %v698, %v845
        %v1083 = vmul.f32 %v699, %v850
        %v1084 = vmul.f32 %v700, %v855
        %v1085 = vmul.f32 %v701, %v860
        %v1086 = vmul.f32 %v702, %v865
        %v1087 = vmul.f32 %v703, %v870
        %v1088 = vmul.f32 %v704, %v875
        %v1089 = vmul.f32 %v705, %v880
        %v1090 = vmul.f32 %v706, %v885
        %v1091 = vmul.f32 %v707, %v890
        %v1092 = vmul.f32 %v708, %v895
        %v1093 = vmul.f32 %v709, %v900
        %v1094 = vmul.f32 %v710, %v905
        %v1095 = vmul.f32 %v711, %v910
        %v1096 = vmul.f32 %v712, %v915
        %v1097 = vmul.f32 %v713, %v920
        %v1098 = vmul.f32 %v714, %v925
        %v1099 = vmul.f32 %v715, %v930
        %v1100 = vmul.f32 %v716, %v935
        %v1101 = vmul.f32 %v717, %v940
        %v1102 = vmul.f32 %v718, %v945
        %v1103 = vmul.f32 %v719, %v950
        %v1104 = vmul.f32 %v720, %v955
        %v1105 = vmul.f32 %v721, %v960
        %v1106 = vmul.f32 %v722, %v965
        %v1107 = vmul.f32 %v723, %v970
        %v1108 = vmul.f32 %v724, %v975
        %v1109 = vmul.f32 %v725, %v980
        %v1110 = vmul.f32 %v726, %v985
        %v1111 = vmul.f32 %v727, %v990
        %v1112 = vmul.f32 %v728, %v995
        %v1113 = vmul.f32 %v729, %v1000
        %v1114 = vmul.f32 %v730, %v1005
        %v1115 = vmul.f32 %v731, %v1010
        %v1116 = vmul.f32 %v732, %v1015
        %v1117 = vmul.f32 %v733, %v1020
        %v1118 = vmul.f32 %v734, %v1025
        %v1119 = vmul.f32 %v735, %v1030
        %v1120 = vmul.f32 %v736, %v1035
        %v1121 = vmul.f32 %v737, %v1040
        %v1122 = vmul.f32 %v738, %v1045
        %v1123 = vmul.f32 %v739, %v1050
        %v1124 = vmul.f32 %v740, %v1055
        %v1125 = vmul.f32 %v741, %v1060
        %1126 = vset.pattern.permute.xlu0 1
        %1127 = vperm.xlu0 %1126, %v614
        %v1128 = vpop.permute.xlu0 %1127
        %1130 = vset.pattern.permute.xlu0 1
        %1131 = vperm.xlu0 %1130, %v615
        %v1132 = vpop.permute.xlu0 %1131
        %1134 = vset.pattern.permute.xlu0 1
        %1135 = vperm.xlu0 %1134, %v616
        %v1136 = vpop.permute.xlu0 %1135
        %1138 = vset.pattern.permute.xlu0 1
        %1139 = vperm.xlu0 %1138, %v617
        %v1140 = vpop.permute.xlu0 %1139
        %1142 = vset.pattern.permute.xlu0 1
        %1143 = vperm.xlu0 %1142, %v618
        %v1144 = vpop.permute.xlu0 %1143
        %1146 = vset.pattern.permute.xlu0 1
        %1147 = vperm.xlu0 %1146, %v619
        %v1148 = vpop.permute.xlu0 %1147
        %1150 = vset.pattern.permute.xlu0 1
        %1151 = vperm.xlu0 %1150, %v620
        %v1152 = vpop.permute.xlu0 %1151
        %1154 = vset.pattern.permute.xlu0 1
        %1155 = vperm.xlu0 %1154, %v621
        %v1156 = vpop.permute.xlu0 %1155
        %1158 = vset.pattern.permute.xlu0 1
        %1159 = vperm.xlu0 %1158, %v622
        %v1160 = vpop.permute.xlu0 %1159
        %1162 = vset.pattern.permute.xlu0 1
        %1163 = vperm.xlu0 %1162, %v623
        %v1164 = vpop.permute.xlu0 %1163
        %1166 = vset.pattern.permute.xlu0 1
        %1167 = vperm.xlu0 %1166, %v624
        %v1168 = vpop.permute.xlu0 %1167
        %1170 = vset.pattern.permute.xlu0 1
        %1171 = vperm.xlu0 %1170, %v625
        %v1172 = vpop.permute.xlu0 %1171
        %1174 = vset.pattern.permute.xlu0 1
        %1175 = vperm.xlu0 %1174, %v626
        %v1176 = vpop.permute.xlu0 %1175
        %1178 = vset.pattern.permute.xlu0 1
        %1179 = vperm.xlu0 %1178, %v627
        %v1180 = vpop.permute.xlu0 %1179
        %1182 = vset.pattern.permute.xlu0 1
        %1183 = vperm.xlu0 %1182, %v628
        %v1184 = vpop.permute.xlu0 %1183
        %1186 = vset.pattern.permute.xlu0 1
        %1187 = vperm.xlu0 %1186, %v629
        %v1188 = vpop.permute.xlu0 %1187
        %1190 = vset.pattern.permute.xlu0 1
        %1191 = vperm.xlu0 %1190, %v630
        %v1192 = vpop.permute.xlu0 %1191
        %1194 = vset.pattern.permute.xlu0 1
        %1195 = vperm.xlu0 %1194, %v631
        %v1196 = vpop.permute.xlu0 %1195
        %1198 = vset.pattern.permute.xlu0 1
        %1199 = vperm.xlu0 %1198, %v632
        %v1200 = vpop.permute.xlu0 %1199
        %1202 = vset.pattern.permute.xlu0 1
        %1203 = vperm.xlu0 %1202, %v633
        %v1204 = vpop.permute.xlu0 %1203
        %1206 = vset.pattern.permute.xlu0 1
        %1207 = vperm.xlu0 %1206, %v634
        %v1208 = vpop.permute.xlu0 %1207
        %1210 = vset.pattern.permute.xlu0 1
        %1211 = vperm.xlu0 %1210, %v635
        %v1212 = vpop.permute.xlu0 %1211
        %1214 = vset.pattern.permute.xlu0 1
        %1215 = vperm.xlu0 %1214, %v636
        %v1216 = vpop.permute.xlu0 %1215
        %1218 = vset.pattern.permute.xlu0 1
        %1219 = vperm.xlu0 %1218, %v637
        %v1220 = vpop.permute.xlu0 %1219
        %1222 = vset.pattern.permute.xlu0 1
        %1223 = vperm.xlu0 %1222, %v638
        %v1224 = vpop.permute.xlu0 %1223
        %1226 = vset.pattern.permute.xlu0 1
        %1227 = vperm.xlu0 %1226, %v639
        %v1228 = vpop.permute.xlu0 %1227
        %1230 = vset.pattern.permute.xlu0 1
        %1231 = vperm.xlu0 %1230, %v640
        %v1232 = vpop.permute.xlu0 %1231
        %1234 = vset.pattern.permute.xlu0 1
        %1235 = vperm.xlu0 %1234, %v641
        %v1236 = vpop.permute.xlu0 %1235
        %1238 = vset.pattern.permute.xlu0 1
        %1239 = vperm.xlu0 %1238, %v642
        %v1240 = vpop.permute.xlu0 %1239
        %1242 = vset.pattern.permute.xlu0 1
        %1243 = vperm.xlu0 %1242, %v643
        %v1244 = vpop.permute.xlu0 %1243
        %1246 = vset.pattern.permute.xlu0 1
        %1247 = vperm.xlu0 %1246, %v644
        %v1248 = vpop.permute.xlu0 %1247
        %1250 = vset.pattern.permute.xlu0 1
        %1251 = vperm.xlu0 %1250, %v645
        %v1252 = vpop.permute.xlu0 %1251
        %1254 = vset.pattern.permute.xlu0 1
        %1255 = vperm.xlu0 %1254, %v646
        %v1256 = vpop.permute.xlu0 %1255
        %1258 = vset.pattern.permute.xlu0 1
        %1259 = vperm.xlu0 %1258, %v647
        %v1260 = vpop.permute.xlu0 %1259
        %1262 = vset.pattern.permute.xlu0 1
        %1263 = vperm.xlu0 %1262, %v648
        %v1264 = vpop.permute.xlu0 %1263
        %1266 = vset.pattern.permute.xlu0 1
        %1267 = vperm.xlu0 %1266, %v649
        %v1268 = vpop.permute.xlu0 %1267
        %1270 = vset.pattern.permute.xlu0 1
        %1271 = vperm.xlu0 %1270, %v650
        %v1272 = vpop.permute.xlu0 %1271
        %1274 = vset.pattern.permute.xlu0 1
        %1275 = vperm.xlu0 %1274, %v651
        %v1276 = vpop.permute.xlu0 %1275
        %1278 = vset.pattern.permute.xlu0 1
        %1279 = vperm.xlu0 %1278, %v652
        %v1280 = vpop.permute.xlu0 %1279
        %1282 = vset.pattern.permute.xlu0 1
        %1283 = vperm.xlu0 %1282, %v653
        %v1284 = vpop.permute.xlu0 %1283
        %1286 = vset.pattern.permute.xlu0 1
        %1287 = vperm.xlu0 %1286, %v654
        %v1288 = vpop.permute.xlu0 %1287
        %1290 = vset.pattern.permute.xlu0 1
        %1291 = vperm.xlu0 %1290, %v655
        %v1292 = vpop.permute.xlu0 %1291
        %1294 = vset.pattern.permute.xlu0 1
        %1295 = vperm.xlu0 %1294, %v656
        %v1296 = vpop.permute.xlu0 %1295
        %1298 = vset.pattern.permute.xlu0 1
        %1299 = vperm.xlu0 %1298, %v657
        %v1300 = vpop.permute.xlu0 %1299
        %1302 = vset.pattern.permute.xlu0 1
        %1303 = vperm.xlu0 %1302, %v658
        %v1304 = vpop.permute.xlu0 %1303
        %1306 = vset.pattern.permute.xlu0 1
        %1307 = vperm.xlu0 %1306, %v659
        %v1308 = vpop.permute.xlu0 %1307
        %1310 = vset.pattern.permute.xlu0 1
        %1311 = vperm.xlu0 %1310, %v660
        %v1312 = vpop.permute.xlu0 %1311
        %1314 = vset.pattern.permute.xlu0 1
        %1315 = vperm.xlu0 %1314, %v661
        %v1316 = vpop.permute.xlu0 %1315
        %1318 = vset.pattern.permute.xlu0 1
        %1319 = vperm.xlu0 %1318, %v662
        %v1320 = vpop.permute.xlu0 %1319
        %1322 = vset.pattern.permute.xlu0 1
        %1323 = vperm.xlu0 %1322, %v663
        %v1324 = vpop.permute.xlu0 %1323
        %1326 = vset.pattern.permute.xlu0 1
        %1327 = vperm.xlu0 %1326, %v664
        %v1328 = vpop.permute.xlu0 %1327
        %1330 = vset.pattern.permute.xlu0 1
        %1331 = vperm.xlu0 %1330, %v665
        %v1332 = vpop.permute.xlu0 %1331
        %1334 = vset.pattern.permute.xlu0 1
        %1335 = vperm.xlu0 %1334, %v666
        %v1336 = vpop.permute.xlu0 %1335
        %1338 = vset.pattern.permute.xlu0 1
        %1339 = vperm.xlu0 %1338, %v667
        %v1340 = vpop.permute.xlu0 %1339
        %1342 = vset.pattern.permute.xlu0 1
        %1343 = vperm.xlu0 %1342, %v668
        %v1344 = vpop.permute.xlu0 %1343
        %1346 = vset.pattern.permute.xlu0 1
        %1347 = vperm.xlu0 %1346, %v669
        %v1348 = vpop.permute.xlu0 %1347
        %1350 = vset.pattern.permute.xlu0 1
        %1351 = vperm.xlu0 %1350, %v670
        %v1352 = vpop.permute.xlu0 %1351
        %1354 = vset.pattern.permute.xlu0 1
        %1355 = vperm.xlu0 %1354, %v671
        %v1356 = vpop.permute.xlu0 %1355
        %1358 = vset.pattern.permute.xlu0 1
        %1359 = vperm.xlu0 %1358, %v672
        %v1360 = vpop.permute.xlu0 %1359
        %1362 = vset.pattern.permute.xlu0 1
        %1363 = vperm.xlu0 %1362, %v673
        %v1364 = vpop.permute.xlu0 %1363
        %1366 = vset.pattern.permute.xlu0 1
        %1367 = vperm.xlu0 %1366, %v674
        %v1368 = vpop.permute.xlu0 %1367
        %1370 = vset.pattern.permute.xlu0 1
        %1371 = vperm.xlu0 %1370, %v675
        %v1372 = vpop.permute.xlu0 %1371
        %1374 = vset.pattern.permute.xlu0 1
        %1375 = vperm.xlu0 %1374, %v676
        %v1376 = vpop.permute.xlu0 %1375
        %1378 = vset.pattern.permute.xlu0 1
        %1379 = vperm.xlu0 %1378, %v677
        %v1380 = vpop.permute.xlu0 %1379
        %v1382 = vadd.f32 %v1062, %v1128
        %v1383 = vadd.f32 %v1063, %v1132
        %v1384 = vadd.f32 %v1064, %v1136
        %v1385 = vadd.f32 %v1065, %v1140
        %v1386 = vadd.f32 %v1066, %v1144
        %v1387 = vadd.f32 %v1067, %v1148
        %v1388 = vadd.f32 %v1068, %v1152
        %v1389 = vadd.f32 %v1069, %v1156
        %v1390 = vadd.f32 %v1070, %v1160
        %v1391 = vadd.f32 %v1071, %v1164
        %v1392 = vadd.f32 %v1072, %v1168
        %v1393 = vadd.f32 %v1073, %v1172
        %v1394 = vadd.f32 %v1074, %v1176
        %v1395 = vadd.f32 %v1075, %v1180
        %v1396 = vadd.f32 %v1076, %v1184
        %v1397 = vadd.f32 %v1077, %v1188
        %v1398 = vadd.f32 %v1078, %v1192
        %v1399 = vadd.f32 %v1079, %v1196
        %v1400 = vadd.f32 %v1080, %v1200
        %v1401 = vadd.f32 %v1081, %v1204
        %v1402 = vadd.f32 %v1082, %v1208
        %v1403 = vadd.f32 %v1083, %v1212
        %v1404 = vadd.f32 %v1084, %v1216
        %v1405 = vadd.f32 %v1085, %v1220
        %v1406 = vadd.f32 %v1086, %v1224
        %v1407 = vadd.f32 %v1087, %v1228
        %v1408 = vadd.f32 %v1088, %v1232
        %v1409 = vadd.f32 %v1089, %v1236
        %v1410 = vadd.f32 %v1090, %v1240
        %v1411 = vadd.f32 %v1091, %v1244
        %v1412 = vadd.f32 %v1092, %v1248
        %v1413 = vadd.f32 %v1093, %v1252
        %v1414 = vadd.f32 %v1094, %v1256
        %v1415 = vadd.f32 %v1095, %v1260
        %v1416 = vadd.f32 %v1096, %v1264
        %v1417 = vadd.f32 %v1097, %v1268
        %v1418 = vadd.f32 %v1098, %v1272
        %v1419 = vadd.f32 %v1099, %v1276
        %v1420 = vadd.f32 %v1100, %v1280
        %v1421 = vadd.f32 %v1101, %v1284
        %v1422 = vadd.f32 %v1102, %v1288
        %v1423 = vadd.f32 %v1103, %v1292
        %v1424 = vadd.f32 %v1104, %v1296
        %v1425 = vadd.f32 %v1105, %v1300
        %v1426 = vadd.f32 %v1106, %v1304
        %v1427 = vadd.f32 %v1107, %v1308
        %v1428 = vadd.f32 %v1108, %v1312
        %v1429 = vadd.f32 %v1109, %v1316
        %v1430 = vadd.f32 %v1110, %v1320
        %v1431 = vadd.f32 %v1111, %v1324
        %v1432 = vadd.f32 %v1112, %v1328
        %v1433 = vadd.f32 %v1113, %v1332
        %v1434 = vadd.f32 %v1114, %v1336
        %v1435 = vadd.f32 %v1115, %v1340
        %v1436 = vadd.f32 %v1116, %v1344
        %v1437 = vadd.f32 %v1117, %v1348
        %v1438 = vadd.f32 %v1118, %v1352
        %v1439 = vadd.f32 %v1119, %v1356
        %v1440 = vadd.f32 %v1120, %v1360
        %v1441 = vadd.f32 %v1121, %v1364
        %v1442 = vadd.f32 %v1122, %v1368
        %v1443 = vadd.f32 %v1123, %v1372
        %v1444 = vadd.f32 %v1124, %v1376
        %v1445 = vadd.f32 %v1125, %v1380
        %v1446 = vlaneseq
        %v1447 = vand.u32 %v1446, 127
        %s1448 = smul.u32 %s24, 128
        %v1449 = vstv %s1448
        %v1450 = vadd.s32 %v1449, %v1447
        %vm1451 = vcmp.lt.s32.totalorder %v1450, 300
        %v1452 = vsel %vm1451, %v1382, 0.0
        %v1453 = vsel %vm1451, %v1383, 0.0
        %v1454 = vsel %vm1451, %v1384, 0.0
        %v1455 = vsel %vm1451, %v1385, 0.0
        %v1456 = vsel %vm1451, %v1386, 0.0
        %v1457 = vsel %vm1451, %v1387, 0.0
        %v1458 = vsel %vm1451, %v1388, 0.0
        %v1459 = vsel %vm1451, %v1389, 0.0
        %v1460 = vsel %vm1451, %v1390, 0.0
        %v1461 = vsel %vm1451, %v1391, 0.0
        %v1462 = vsel %vm1451, %v1392, 0.0
        %v1463 = vsel %vm1451, %v1393, 0.0
        %v1464 = vsel %vm1451, %v1394, 0.0
        %v1465 = vsel %vm1451, %v1395, 0.0
        %v1466 = vsel %vm1451, %v1396, 0.0
        %v1467 = vsel %vm1451, %v1397, 0.0
        %v1468 = vsel %vm1451, %v1398, 0.0
        %v1469 = vsel %vm1451, %v1399, 0.0
        %v1470 = vsel %vm1451, %v1400, 0.0
        %v1471 = vsel %vm1451, %v1401, 0.0
        %v1472 = vsel %vm1451, %v1402, 0.0
        %v1473 = vsel %vm1451, %v1403, 0.0
        %v1474 = vsel %vm1451, %v1404, 0.0
        %v1475 = vsel %vm1451, %v1405, 0.0
        %v1476 = vsel %vm1451, %v1406, 0.0
        %v1477 = vsel %vm1451, %v1407, 0.0
        %v1478 = vsel %vm1451, %v1408, 0.0
        %v1479 = vsel %vm1451, %v1409, 0.0
        %v1480 = vsel %vm1451, %v1410, 0.0
        %v1481 = vsel %vm1451, %v1411, 0.0
        %v1482 = vsel %vm1451, %v1412, 0.0
        %v1483 = vsel %vm1451, %v1413, 0.0
        %v1484 = vsel %vm1451, %v1414, 0.0
        %v1485 = vsel %vm1451, %v1415, 0.0
        %v1486 = vsel %vm1451, %v1416, 0.0
        %v1487 = vsel %vm1451, %v1417, 0.0
        %v1488 = vsel %vm1451, %v1418, 0.0
        %v1489 = vsel %vm1451, %v1419, 0.0
        %v1490 = vsel %vm1451, %v1420, 0.0
        %v1491 = vsel %vm1451, %v1421, 0.0
        %v1492 = vsel %vm1451, %v1422, 0.0
        %v1493 = vsel %vm1451, %v1423, 0.0
        %v1494 = vsel %vm1451, %v1424, 0.0
        %v1495 = vsel %vm1451, %v1425, 0.0
        %v1496 = vsel %vm1451, %v1426, 0.0
        %v1497 = vsel %vm1451, %v1427, 0.0
        %v1498 = vsel %vm1451, %v1428, 0.0
        %v1499 = vsel %vm1451, %v1429, 0.0
        %v1500 = vsel %vm1451, %v1430, 0.0
        %v1501 = vsel %vm1451, %v1431, 0.0
        %v1502 = vsel %vm1451, %v1432, 0.0
        %v1503 = vsel %vm1451, %v1433, 0.0
        %v1504 = vsel %vm1451, %v1434, 0.0
        %v1505 = vsel %vm1451, %v1435, 0.0
        %v1506 = vsel %vm1451, %v1436, 0.0
        %v1507 = vsel %vm1451, %v1437, 0.0
        %v1508 = vsel %vm1451, %v1438, 0.0
        %v1509 = vsel %vm1451, %v1439, 0.0
        %v1510 = vsel %vm1451, %v1440, 0.0
        %v1511 = vsel %vm1451, %v1441, 0.0
        %v1512 = vsel %vm1451, %v1442, 0.0
        %v1513 = vsel %vm1451, %v1443, 0.0
        %v1514 = vsel %vm1451, %v1444, 0.0
        %v1515 = vsel %vm1451, %v1445, 0.0
        %v1516 = vld [vmem:[%s548] sm:$0xff]
        %v1517 = vld [vmem:[%s548 + $0x8] sm:$0xff]
        %v1518 = vld [vmem:[%s548 + $0x10] sm:$0xff]
        %v1519 = vld [vmem:[%s548 + $0x18] sm:$0xff]
        %v1520 = vld [vmem:[%s548 + $0x20] sm:$0xff]
        %v1521 = vld [vmem:[%s548 + $0x28] sm:$0xff]
        %v1522 = vld [vmem:[%s548 + $0x30] sm:$0xff]
        %v1523 = vld [vmem:[%s548 + $0x38] sm:$0xff]
        %v1524 = vld [vmem:[%s548 + $0x40] sm:$0xff]
        %v1525 = vld [vmem:[%s548 + $0x48] sm:$0xff]
        %v1526 = vld [vmem:[%s548 + $0x50] sm:$0xff]
        %v1527 = vld [vmem:[%s548 + $0x58] sm:$0xff]
        %v1528 = vld [vmem:[%s548 + $0x60] sm:$0xff]
        %v1529 = vld [vmem:[%s548 + $0x68] sm:$0xff]
        %v1530 = vld [vmem:[%s548 + $0x70] sm:$0xff]
        %v1531 = vld [vmem:[%s548 + $0x78] sm:$0xff]
        %v1532 = vld [vmem:[%s548 + $0x80] sm:$0xff]
        %v1533 = vld [vmem:[%s548 + $0x88] sm:$0xff]
        %v1534 = vld [vmem:[%s548 + $0x90] sm:$0xff]
        %v1535 = vld [vmem:[%s548 + $0x98] sm:$0xff]
        %v1536 = vld [vmem:[%s548 + $0xa0] sm:$0xff]
        %v1537 = vld [vmem:[%s548 + $0xa8] sm:$0xff]
        %v1538 = vld [vmem:[%s548 + $0xb0] sm:$0xff]
        %v1539 = vld [vmem:[%s548 + $0xb8] sm:$0xff]
        %v1540 = vld [vmem:[%s548 + $0xc0] sm:$0xff]
        %v1541 = vld [vmem:[%s548 + $0xc8] sm:$0xff]
        %v1542 = vld [vmem:[%s548 + $0xd0] sm:$0xff]
        %v1543 = vld [vmem:[%s548 + $0xd8] sm:$0xff]
        %v1544 = vld [vmem:[%s548 + $0xe0] sm:$0xff]
        %v1545 = vld [vmem:[%s548 + $0xe8] sm:$0xff]
        %v1546 = vld [vmem:[%s548 + $0xf0] sm:$0xff]
        %v1547 = vld [vmem:[%s548 + $0xf8] sm:$0xff]
        %v1548 = vld [vmem:[%s548 + $0x100] sm:$0xff]
        %v1549 = vld [vmem:[%s548 + $0x108] sm:$0xff]
        %v1550 = vld [vmem:[%s548 + $0x110] sm:$0xff]
        %v1551 = vld [vmem:[%s548 + $0x118] sm:$0xff]
        %v1552 = vld [vmem:[%s548 + $0x120] sm:$0xff]
        %v1553 = vld [vmem:[%s548 + $0x128] sm:$0xff]
        %v1554 = vld [vmem:[%s548 + $0x130] sm:$0xff]
        %v1555 = vld [vmem:[%s548 + $0x138] sm:$0xff]
        %v1556 = vld [vmem:[%s548 + $0x140] sm:$0xff]
        %v1557 = vld [vmem:[%s548 + $0x148] sm:$0xff]
        %v1558 = vld [vmem:[%s548 + $0x150] sm:$0xff]
        %v1559 = vld [vmem:[%s548 + $0x158] sm:$0xff]
        %v1560 = vld [vmem:[%s548 + $0x160] sm:$0xff]
        %v1561 = vld [vmem:[%s548 + $0x168] sm:$0xff]
        %v1562 = vld [vmem:[%s548 + $0x170] sm:$0xff]
        %v1563 = vld [vmem:[%s548 + $0x178] sm:$0xff]
        %v1564 = vld [vmem:[%s548 + $0x180] sm:$0xff]
        %v1565 = vld [vmem:[%s548 + $0x188] sm:$0xff]
        %v1566 = vld [vmem:[%s548 + $0x190] sm:$0xff]
        %v1567 = vld [vmem:[%s548 + $0x198] sm:$0xff]
        %v1568 = vld [vmem:[%s548 + $0x1a0] sm:$0xff]
        %v1569 = vld [vmem:[%s548 + $0x1a8] sm:$0xff]
        %v1570 = vld [vmem:[%s548 + $0x1b0] sm:$0xff]
        %v1571 = vld [vmem:[%s548 + $0x1b8] sm:$0xff]
        %v1572 = vld [vmem:[%s548 + $0x1c0] sm:$0xff]
        %v1573 = vld [vmem:[%s548 + $0x1c8] sm:$0xff]
        %v1574 = vld [vmem:[%s548 + $0x1d0] sm:$0xff]
        %v1575 = vld [vmem:[%s548 + $0x1d8] sm:$0xff]
        %v1576 = vld [vmem:[%s548 + $0x1e0] sm:$0xff]
        %v1577 = vld [vmem:[%s548 + $0x1e8] sm:$0xff]
        %v1578 = vld [vmem:[%s548 + $0x1f0] sm:$0xff]
        %v1579 = vld [vmem:[%s548 + $0x1f8] sm:$0xff]
        %v1580 = vmax.f32 %v1516, 0.0
        %v1581 = vmax.f32 %v1517, 0.0
        %v1582 = vmax.f32 %v1518, 0.0
        %v1583 = vmax.f32 %v1519, 0.0
        %v1584 = vmax.f32 %v1520, 0.0
        %v1585 = vmax.f32 %v1521, 0.0
        %v1586 = vmax.f32 %v1522, 0.0
        %v1587 = vmax.f32 %v1523, 0.0
        %v1588 = vmax.f32 %v1524, 0.0
        %v1589 = vmax.f32 %v1525, 0.0
        %v1590 = vmax.f32 %v1526, 0.0
        %v1591 = vmax.f32 %v1527, 0.0
        %v1592 = vmax.f32 %v1528, 0.0
        %v1593 = vmax.f32 %v1529, 0.0
        %v1594 = vmax.f32 %v1530, 0.0
        %v1595 = vmax.f32 %v1531, 0.0
        %v1596 = vmax.f32 %v1532, 0.0
        %v1597 = vmax.f32 %v1533, 0.0
        %v1598 = vmax.f32 %v1534, 0.0
        %v1599 = vmax.f32 %v1535, 0.0
        %v1600 = vmax.f32 %v1536, 0.0
        %v1601 = vmax.f32 %v1537, 0.0
        %v1602 = vmax.f32 %v1538, 0.0
        %v1603 = vmax.f32 %v1539, 0.0
        %v1604 = vmax.f32 %v1540, 0.0
        %v1605 = vmax.f32 %v1541, 0.0
        %v1606 = vmax.f32 %v1542, 0.0
        %v1607 = vmax.f32 %v1543, 0.0
        %v1608 = vmax.f32 %v1544, 0.0
        %v1609 = vmax.f32 %v1545, 0.0
        %v1610 = vmax.f32 %v1546, 0.0
        %v1611 = vmax.f32 %v1547, 0.0
        %v1612 = vmax.f32 %v1548, 0.0
        %v1613 = vmax.f32 %v1549, 0.0
        %v1614 = vmax.f32 %v1550, 0.0
        %v1615 = vmax.f32 %v1551, 0.0
        %v1616 = vmax.f32 %v1552, 0.0
        %v1617 = vmax.f32 %v1553, 0.0
        %v1618 = vmax.f32 %v1554, 0.0
        %v1619 = vmax.f32 %v1555, 0.0
        %v1620 = vmax.f32 %v1556, 0.0
        %v1621 = vmax.f32 %v1557, 0.0
        %v1622 = vmax.f32 %v1558, 0.0
        %v1623 = vmax.f32 %v1559, 0.0
        %v1624 = vmax.f32 %v1560, 0.0
        %v1625 = vmax.f32 %v1561, 0.0
        %v1626 = vmax.f32 %v1562, 0.0
        %v1627 = vmax.f32 %v1563, 0.0
        %v1628 = vmax.f32 %v1564, 0.0
        %v1629 = vmax.f32 %v1565, 0.0
        %v1630 = vmax.f32 %v1566, 0.0
        %v1631 = vmax.f32 %v1567, 0.0
        %v1632 = vmax.f32 %v1568, 0.0
        %v1633 = vmax.f32 %v1569, 0.0
        %v1634 = vmax.f32 %v1570, 0.0
        %v1635 = vmax.f32 %v1571, 0.0
        %v1636 = vmax.f32 %v1572, 0.0
        %v1637 = vmax.f32 %v1573, 0.0
        %v1638 = vmax.f32 %v1574, 0.0
        %v1639 = vmax.f32 %v1575, 0.0
        %v1640 = vmax.f32 %v1576, 0.0
        %v1641 = vmax.f32 %v1577, 0.0
        %v1642 = vmax.f32 %v1578, 0.0
        %v1643 = vmax.f32 %v1579, 0.0
        %v1644 = vmul.f32 %v1580, %v614
        %v1645 = vmul.f32 %v1581, %v615
        %v1646 = vmul.f32 %v1582, %v616
        %v1647 = vmul.f32 %v1583, %v617
        %v1648 = vmul.f32 %v1584, %v618
        %v1649 = vmul.f32 %v1585, %v619
        %v1650 = vmul.f32 %v1586, %v620
        %v1651 = vmul.f32 %v1587, %v621
        %v1652 = vmul.f32 %v1588, %v622
        %v1653 = vmul.f32 %v1589, %v623
        %v1654 = vmul.f32 %v1590, %v624
        %v1655 = vmul.f32 %v1591, %v625
        %v1656 = vmul.f32 %v1592, %v626
        %v1657 = vmul.f32 %v1593, %v627
        %v1658 = vmul.f32 %v1594, %v628
        %v1659 = vmul.f32 %v1595, %v629
        %v1660 = vmul.f32 %v1596, %v630
        %v1661 = vmul.f32 %v1597, %v631
        %v1662 = vmul.f32 %v1598, %v632
        %v1663 = vmul.f32 %v1599, %v633
        %v1664 = vmul.f32 %v1600, %v634
        %v1665 = vmul.f32 %v1601, %v635
        %v1666 = vmul.f32 %v1602, %v636
        %v1667 = vmul.f32 %v1603, %v637
        %v1668 = vmul.f32 %v1604, %v638
        %v1669 = vmul.f32 %v1605, %v639
        %v1670 = vmul.f32 %v1606, %v640
        %v1671 = vmul.f32 %v1607, %v641
        %v1672 = vmul.f32 %v1608, %v642
        %v1673 = vmul.f32 %v1609, %v643
        %v1674 = vmul.f32 %v1610, %v644
        %v1675 = vmul.f32 %v1611, %v645
        %v1676 = vmul.f32 %v1612, %v646
        %v1677 = vmul.f32 %v1613, %v647
        %v1678 = vmul.f32 %v1614, %v648
        %v1679 = vmul.f32 %v1615, %v649
        %v1680 = vmul.f32 %v1616, %v650
        %v1681 = vmul.f32 %v1617, %v651
        %v1682 = vmul.f32 %v1618, %v652
        %v1683 = vmul.f32 %v1619, %v653
        %v1684 = vmul.f32 %v1620, %v654
        %v1685 = vmul.f32 %v1621, %v655
        %v1686 = vmul.f32 %v1622, %v656
        %v1687 = vmul.f32 %v1623, %v657
        %v1688 = vmul.f32 %v1624, %v658
        %v1689 = vmul.f32 %v1625, %v659
        %v1690 = vmul.f32 %v1626, %v660
        %v1691 = vmul.f32 %v1627, %v661
        %v1692 = vmul.f32 %v1628, %v662
        %v1693 = vmul.f32 %v1629, %v663
        %v1694 = vmul.f32 %v1630, %v664
        %v1695 = vmul.f32 %v1631, %v665
        %v1696 = vmul.f32 %v1632, %v666
        %v1697 = vmul.f32 %v1633, %v667
        %v1698 = vmul.f32 %v1634, %v668
        %v1699 = vmul.f32 %v1635, %v669
        %v1700 = vmul.f32 %v1636, %v670
        %v1701 = vmul.f32 %v1637, %v671
        %v1702 = vmul.f32 %v1638, %v672
        %v1703 = vmul.f32 %v1639, %v673
        %v1704 = vmul.f32 %v1640, %v674
        %v1705 = vmul.f32 %v1641, %v675
        %v1706 = vmul.f32 %v1642, %v676
        %v1707 = vmul.f32 %v1643, %v677
        %1708 = vrot.lane.b32.xlu0 %v614, 127
        %v1709 = vpop.permute.xlu0 %1708
        %1710 = vrot.lane.b32.xlu0 %v615, 127
        %v1711 = vpop.permute.xlu0 %1710
        %1712 = vrot.lane.b32.xlu0 %v616, 127
        %v1713 = vpop.permute.xlu0 %1712
        %1714 = vrot.lane.b32.xlu0 %v617, 127
        %v1715 = vpop.permute.xlu0 %1714
        %1716 = vrot.lane.b32.xlu0 %v618, 127
        %v1717 = vpop.permute.xlu0 %1716
        %1718 = vrot.lane.b32.xlu0 %v619, 127
        %v1719 = vpop.permute.xlu0 %1718
        %1720 = vrot.lane.b32.xlu0 %v620, 127
        %v1721 = vpop.permute.xlu0 %1720
        %1722 = vrot.lane.b32.xlu0 %v621, 127
        %v1723 = vpop.permute.xlu0 %1722
        %1724 = vrot.lane.b32.xlu0 %v622, 127
        %v1725 = vpop.permute.xlu0 %1724
        %1726 = vrot.lane.b32.xlu0 %v623, 127
        %v1727 = vpop.permute.xlu0 %1726
        %1728 = vrot.lane.b32.xlu0 %v624, 127
        %v1729 = vpop.permute.xlu0 %1728
        %1730 = vrot.lane.b32.xlu0 %v625, 127
        %v1731 = vpop.permute.xlu0 %1730
        %1732 = vrot.lane.b32.xlu0 %v626, 127
        %v1733 = vpop.permute.xlu0 %1732
        %1734 = vrot.lane.b32.xlu0 %v627, 127
        %v1735 = vpop.permute.xlu0 %1734
        %1736 = vrot.lane.b32.xlu0 %v628, 127
        %v1737 = vpop.permute.xlu0 %1736
        %1738 = vrot.lane.b32.xlu0 %v629, 127
        %v1739 = vpop.permute.xlu0 %1738
        %1740 = vrot.lane.b32.xlu0 %v630, 127
        %v1741 = vpop.permute.xlu0 %1740
        %1742 = vrot.lane.b32.xlu0 %v631, 127
        %v1743 = vpop.permute.xlu0 %1742
        %1744 = vrot.lane.b32.xlu0 %v632, 127
        %v1745 = vpop.permute.xlu0 %1744
        %1746 = vrot.lane.b32.xlu0 %v633, 127
        %v1747 = vpop.permute.xlu0 %1746
        %1748 = vrot.lane.b32.xlu0 %v634, 127
        %v1749 = vpop.permute.xlu0 %1748
        %1750 = vrot.lane.b32.xlu0 %v635, 127
        %v1751 = vpop.permute.xlu0 %1750
        %1752 = vrot.lane.b32.xlu0 %v636, 127
        %v1753 = vpop.permute.xlu0 %1752
        %1754 = vrot.lane.b32.xlu0 %v637, 127
        %v1755 = vpop.permute.xlu0 %1754
        %1756 = vrot.lane.b32.xlu0 %v638, 127
        %v1757 = vpop.permute.xlu0 %1756
        %1758 = vrot.lane.b32.xlu0 %v639, 127
        %v1759 = vpop.permute.xlu0 %1758
        %1760 = vrot.lane.b32.xlu0 %v640, 127
        %v1761 = vpop.permute.xlu0 %1760
        %1762 = vrot.lane.b32.xlu0 %v641, 127
        %v1763 = vpop.permute.xlu0 %1762
        %1764 = vrot.lane.b32.xlu0 %v642, 127
        %v1765 = vpop.permute.xlu0 %1764
        %1766 = vrot.lane.b32.xlu0 %v643, 127
        %v1767 = vpop.permute.xlu0 %1766
        %1768 = vrot.lane.b32.xlu0 %v644, 127
        %v1769 = vpop.permute.xlu0 %1768
        %1770 = vrot.lane.b32.xlu0 %v645, 127
        %v1771 = vpop.permute.xlu0 %1770
        %1772 = vrot.lane.b32.xlu0 %v646, 127
        %v1773 = vpop.permute.xlu0 %1772
        %1774 = vrot.lane.b32.xlu0 %v647, 127
        %v1775 = vpop.permute.xlu0 %1774
        %1776 = vrot.lane.b32.xlu0 %v648, 127
        %v1777 = vpop.permute.xlu0 %1776
        %1778 = vrot.lane.b32.xlu0 %v649, 127
        %v1779 = vpop.permute.xlu0 %1778
        %1780 = vrot.lane.b32.xlu0 %v650, 127
        %v1781 = vpop.permute.xlu0 %1780
        %1782 = vrot.lane.b32.xlu0 %v651, 127
        %v1783 = vpop.permute.xlu0 %1782
        %1784 = vrot.lane.b32.xlu0 %v652, 127
        %v1785 = vpop.permute.xlu0 %1784
        %1786 = vrot.lane.b32.xlu0 %v653, 127
        %v1787 = vpop.permute.xlu0 %1786
        %1788 = vrot.lane.b32.xlu0 %v654, 127
        %v1789 = vpop.permute.xlu0 %1788
        %1790 = vrot.lane.b32.xlu0 %v655, 127
        %v1791 = vpop.permute.xlu0 %1790
        %1792 = vrot.lane.b32.xlu0 %v656, 127
        %v1793 = vpop.permute.xlu0 %1792
        %1794 = vrot.lane.b32.xlu0 %v657, 127
        %v1795 = vpop.permute.xlu0 %1794
        %1796 = vrot.lane.b32.xlu0 %v658, 127
        %v1797 = vpop.permute.xlu0 %1796
        %1798 = vrot.lane.b32.xlu0 %v659, 127
        %v1799 = vpop.permute.xlu0 %1798
        %1800 = vrot.lane.b32.xlu0 %v660, 127
        %v1801 = vpop.permute.xlu0 %1800
        %1802 = vrot.lane.b32.xlu0 %v661, 127
        %v1803 = vpop.permute.xlu0 %1802
        %1804 = vrot.lane.b32.xlu0 %v662, 127
        %v1805 = vpop.permute.xlu0 %1804
        %1806 = vrot.lane.b32.xlu0 %v663, 127
        %v1807 = vpop.permute.xlu0 %1806
        %1808 = vrot.lane.b32.xlu0 %v664, 127
        %v1809 = vpop.permute.xlu0 %1808
        %1810 = vrot.lane.b32.xlu0 %v665, 127
        %v1811 = vpop.permute.xlu0 %1810
        %1812 = vrot.lane.b32.xlu0 %v666, 127
        %v1813 = vpop.permute.xlu0 %1812
        %1814 = vrot.lane.b32.xlu0 %v667, 127
        %v1815 = vpop.permute.xlu0 %1814
        %1816 = vrot.lane.b32.xlu0 %v668, 127
        %v1817 = vpop.permute.xlu0 %1816
        %1818 = vrot.lane.b32.xlu0 %v669, 127
        %v1819 = vpop.permute.xlu0 %1818
        %1820 = vrot.lane.b32.xlu0 %v670, 127
        %v1821 = vpop.permute.xlu0 %1820
        %1822 = vrot.lane.b32.xlu0 %v671, 127
        %v1823 = vpop.permute.xlu0 %1822
        %1824 = vrot.lane.b32.xlu0 %v672, 127
        %v1825 = vpop.permute.xlu0 %1824
        %1826 = vrot.lane.b32.xlu0 %v673, 127
        %v1827 = vpop.permute.xlu0 %1826
        %1828 = vrot.lane.b32.xlu0 %v674, 127
        %v1829 = vpop.permute.xlu0 %1828
        %1830 = vrot.lane.b32.xlu0 %v675, 127
        %v1831 = vpop.permute.xlu0 %1830
        %1832 = vrot.lane.b32.xlu0 %v676, 127
        %v1833 = vpop.permute.xlu0 %1832
        %1834 = vrot.lane.b32.xlu0 %v677, 127
        %v1835 = vpop.permute.xlu0 %1834
        %v1900 = vadd.f32 %v1644, %v1709
        %v1901 = vadd.f32 %v1645, %v1711
        %v1902 = vadd.f32 %v1646, %v1713
        %v1903 = vadd.f32 %v1647, %v1715
        %v1904 = vadd.f32 %v1648, %v1717
        %v1905 = vadd.f32 %v1649, %v1719
        %v1906 = vadd.f32 %v1650, %v1721
        %v1907 = vadd.f32 %v1651, %v1723
        %v1908 = vadd.f32 %v1652, %v1725
        %v1909 = vadd.f32 %v1653, %v1727
        %v1910 = vadd.f32 %v1654, %v1729
        %v1911 = vadd.f32 %v1655, %v1731
        %v1912 = vadd.f32 %v1656, %v1733
        %v1913 = vadd.f32 %v1657, %v1735
        %v1914 = vadd.f32 %v1658, %v1737
        %v1915 = vadd.f32 %v1659, %v1739
        %v1916 = vadd.f32 %v1660, %v1741
        %v1917 = vadd.f32 %v1661, %v1743
        %v1918 = vadd.f32 %v1662, %v1745
        %v1919 = vadd.f32 %v1663, %v1747
        %v1920 = vadd.f32 %v1664, %v1749
        %v1921 = vadd.f32 %v1665, %v1751
        %v1922 = vadd.f32 %v1666, %v1753
        %v1923 = vadd.f32 %v1667, %v1755
        %v1924 = vadd.f32 %v1668, %v1757
        %v1925 = vadd.f32 %v1669, %v1759
        %v1926 = vadd.f32 %v1670, %v1761
        %v1927 = vadd.f32 %v1671, %v1763
        %v1928 = vadd.f32 %v1672, %v1765
        %v1929 = vadd.f32 %v1673, %v1767
        %v1930 = vadd.f32 %v1674, %v1769
        %v1931 = vadd.f32 %v1675, %v1771
        %v1932 = vadd.f32 %v1676, %v1773
        %v1933 = vadd.f32 %v1677, %v1775
        %v1934 = vadd.f32 %v1678, %v1777
        %v1935 = vadd.f32 %v1679, %v1779
        %v1936 = vadd.f32 %v1680, %v1781
        %v1937 = vadd.f32 %v1681, %v1783
        %v1938 = vadd.f32 %v1682, %v1785
        %v1939 = vadd.f32 %v1683, %v1787
        %v1940 = vadd.f32 %v1684, %v1789
        %v1941 = vadd.f32 %v1685, %v1791
        %v1942 = vadd.f32 %v1686, %v1793
        %v1943 = vadd.f32 %v1687, %v1795
        %v1944 = vadd.f32 %v1688, %v1797
        %v1945 = vadd.f32 %v1689, %v1799
        %v1946 = vadd.f32 %v1690, %v1801
        %v1947 = vadd.f32 %v1691, %v1803
        %v1948 = vadd.f32 %v1692, %v1805
        %v1949 = vadd.f32 %v1693, %v1807
        %v1950 = vadd.f32 %v1694, %v1809
        %v1951 = vadd.f32 %v1695, %v1811
        %v1952 = vadd.f32 %v1696, %v1813
        %v1953 = vadd.f32 %v1697, %v1815
        %v1954 = vadd.f32 %v1698, %v1817
        %v1955 = vadd.f32 %v1699, %v1819
        %v1956 = vadd.f32 %v1700, %v1821
        %v1957 = vadd.f32 %v1701, %v1823
        %v1958 = vadd.f32 %v1702, %v1825
        %v1959 = vadd.f32 %v1703, %v1827
        %v1960 = vadd.f32 %v1704, %v1829
        %v1961 = vadd.f32 %v1705, %v1831
        %v1962 = vadd.f32 %v1706, %v1833
        %v1963 = vadd.f32 %v1707, %v1835
        %1964 = vrot.lane.b32.xlu0 %v614, 1
        %v1965 = vpop.permute.xlu0 %1964
        %1966 = vrot.lane.b32.xlu0 %v615, 1
        %v1967 = vpop.permute.xlu0 %1966
        %1968 = vrot.lane.b32.xlu0 %v616, 1
        %v1969 = vpop.permute.xlu0 %1968
        %1970 = vrot.lane.b32.xlu0 %v617, 1
        %v1971 = vpop.permute.xlu0 %1970
        %1972 = vrot.lane.b32.xlu0 %v618, 1
        %v1973 = vpop.permute.xlu0 %1972
        %1974 = vrot.lane.b32.xlu0 %v619, 1
        %v1975 = vpop.permute.xlu0 %1974
        %1976 = vrot.lane.b32.xlu0 %v620, 1
        %v1977 = vpop.permute.xlu0 %1976
        %1978 = vrot.lane.b32.xlu0 %v621, 1
        %v1979 = vpop.permute.xlu0 %1978
        %1980 = vrot.lane.b32.xlu0 %v622, 1
        %v1981 = vpop.permute.xlu0 %1980
        %1982 = vrot.lane.b32.xlu0 %v623, 1
        %v1983 = vpop.permute.xlu0 %1982
        %1984 = vrot.lane.b32.xlu0 %v624, 1
        %v1985 = vpop.permute.xlu0 %1984
        %1986 = vrot.lane.b32.xlu0 %v625, 1
        %v1987 = vpop.permute.xlu0 %1986
        %1988 = vrot.lane.b32.xlu0 %v626, 1
        %v1989 = vpop.permute.xlu0 %1988
        %1990 = vrot.lane.b32.xlu0 %v627, 1
        %v1991 = vpop.permute.xlu0 %1990
        %1992 = vrot.lane.b32.xlu0 %v628, 1
        %v1993 = vpop.permute.xlu0 %1992
        %1994 = vrot.lane.b32.xlu0 %v629, 1
        %v1995 = vpop.permute.xlu0 %1994
        %1996 = vrot.lane.b32.xlu0 %v630, 1
        %v1997 = vpop.permute.xlu0 %1996
        %1998 = vrot.lane.b32.xlu0 %v631, 1
        %v1999 = vpop.permute.xlu0 %1998
        %2000 = vrot.lane.b32.xlu0 %v632, 1
        %v2001 = vpop.permute.xlu0 %2000
        %2002 = vrot.lane.b32.xlu0 %v633, 1
        %v2003 = vpop.permute.xlu0 %2002
        %2004 = vrot.lane.b32.xlu0 %v634, 1
        %v2005 = vpop.permute.xlu0 %2004
        %2006 = vrot.lane.b32.xlu0 %v635, 1
        %v2007 = vpop.permute.xlu0 %2006
        %2008 = vrot.lane.b32.xlu0 %v636, 1
        %v2009 = vpop.permute.xlu0 %2008
        %2010 = vrot.lane.b32.xlu0 %v637, 1
        %v2011 = vpop.permute.xlu0 %2010
        %2012 = vrot.lane.b32.xlu0 %v638, 1
        %v2013 = vpop.permute.xlu0 %2012
        %2014 = vrot.lane.b32.xlu0 %v639, 1
        %v2015 = vpop.permute.xlu0 %2014
        %2016 = vrot.lane.b32.xlu0 %v640, 1
        %v2017 = vpop.permute.xlu0 %2016
        %2018 = vrot.lane.b32.xlu0 %v641, 1
        %v2019 = vpop.permute.xlu0 %2018
        %2020 = vrot.lane.b32.xlu0 %v642, 1
        %v2021 = vpop.permute.xlu0 %2020
        %2022 = vrot.lane.b32.xlu0 %v643, 1
        %v2023 = vpop.permute.xlu0 %2022
        %2024 = vrot.lane.b32.xlu0 %v644, 1
        %v2025 = vpop.permute.xlu0 %2024
        %2026 = vrot.lane.b32.xlu0 %v645, 1
        %v2027 = vpop.permute.xlu0 %2026
        %2028 = vrot.lane.b32.xlu0 %v646, 1
        %v2029 = vpop.permute.xlu0 %2028
        %2030 = vrot.lane.b32.xlu0 %v647, 1
        %v2031 = vpop.permute.xlu0 %2030
        %2032 = vrot.lane.b32.xlu0 %v648, 1
        %v2033 = vpop.permute.xlu0 %2032
        %2034 = vrot.lane.b32.xlu0 %v649, 1
        %v2035 = vpop.permute.xlu0 %2034
        %2036 = vrot.lane.b32.xlu0 %v650, 1
        %v2037 = vpop.permute.xlu0 %2036
        %2038 = vrot.lane.b32.xlu0 %v651, 1
        %v2039 = vpop.permute.xlu0 %2038
        %2040 = vrot.lane.b32.xlu0 %v652, 1
        %v2041 = vpop.permute.xlu0 %2040
        %2042 = vrot.lane.b32.xlu0 %v653, 1
        %v2043 = vpop.permute.xlu0 %2042
        %2044 = vrot.lane.b32.xlu0 %v654, 1
        %v2045 = vpop.permute.xlu0 %2044
        %2046 = vrot.lane.b32.xlu0 %v655, 1
        %v2047 = vpop.permute.xlu0 %2046
        %2048 = vrot.lane.b32.xlu0 %v656, 1
        %v2049 = vpop.permute.xlu0 %2048
        %2050 = vrot.lane.b32.xlu0 %v657, 1
        %v2051 = vpop.permute.xlu0 %2050
        %2052 = vrot.lane.b32.xlu0 %v658, 1
        %v2053 = vpop.permute.xlu0 %2052
        %2054 = vrot.lane.b32.xlu0 %v659, 1
        %v2055 = vpop.permute.xlu0 %2054
        %2056 = vrot.lane.b32.xlu0 %v660, 1
        %v2057 = vpop.permute.xlu0 %2056
        %2058 = vrot.lane.b32.xlu0 %v661, 1
        %v2059 = vpop.permute.xlu0 %2058
        %2060 = vrot.lane.b32.xlu0 %v662, 1
        %v2061 = vpop.permute.xlu0 %2060
        %2062 = vrot.lane.b32.xlu0 %v663, 1
        %v2063 = vpop.permute.xlu0 %2062
        %2064 = vrot.lane.b32.xlu0 %v664, 1
        %v2065 = vpop.permute.xlu0 %2064
        %2066 = vrot.lane.b32.xlu0 %v665, 1
        %v2067 = vpop.permute.xlu0 %2066
        %2068 = vrot.lane.b32.xlu0 %v666, 1
        %v2069 = vpop.permute.xlu0 %2068
        %2070 = vrot.lane.b32.xlu0 %v667, 1
        %v2071 = vpop.permute.xlu0 %2070
        %2072 = vrot.lane.b32.xlu0 %v668, 1
        %v2073 = vpop.permute.xlu0 %2072
        %2074 = vrot.lane.b32.xlu0 %v669, 1
        %v2075 = vpop.permute.xlu0 %2074
        %2076 = vrot.lane.b32.xlu0 %v670, 1
        %v2077 = vpop.permute.xlu0 %2076
        %2078 = vrot.lane.b32.xlu0 %v671, 1
        %v2079 = vpop.permute.xlu0 %2078
        %2080 = vrot.lane.b32.xlu0 %v672, 1
        %v2081 = vpop.permute.xlu0 %2080
        %2082 = vrot.lane.b32.xlu0 %v673, 1
        %v2083 = vpop.permute.xlu0 %2082
        %2084 = vrot.lane.b32.xlu0 %v674, 1
        %v2085 = vpop.permute.xlu0 %2084
        %2086 = vrot.lane.b32.xlu0 %v675, 1
        %v2087 = vpop.permute.xlu0 %2086
        %2088 = vrot.lane.b32.xlu0 %v676, 1
        %v2089 = vpop.permute.xlu0 %2088
        %2090 = vrot.lane.b32.xlu0 %v677, 1
        %v2091 = vpop.permute.xlu0 %2090
        %v2156 = vmul.f32 %v1580, %v1965
        %v2157 = vmul.f32 %v1581, %v1967
        %v2158 = vmul.f32 %v1582, %v1969
        %v2159 = vmul.f32 %v1583, %v1971
        %v2160 = vmul.f32 %v1584, %v1973
        %v2161 = vmul.f32 %v1585, %v1975
        %v2162 = vmul.f32 %v1586, %v1977
        %v2163 = vmul.f32 %v1587, %v1979
        %v2164 = vmul.f32 %v1588, %v1981
        %v2165 = vmul.f32 %v1589, %v1983
        %v2166 = vmul.f32 %v1590, %v1985
        %v2167 = vmul.f32 %v1591, %v1987
        %v2168 = vmul.f32 %v1592, %v1989
        %v2169 = vmul.f32 %v1593, %v1991
        %v2170 = vmul.f32 %v1594, %v1993
        %v2171 = vmul.f32 %v1595, %v1995
        %v2172 = vmul.f32 %v1596, %v1997
        %v2173 = vmul.f32 %v1597, %v1999
        %v2174 = vmul.f32 %v1598, %v2001
        %v2175 = vmul.f32 %v1599, %v2003
        %v2176 = vmul.f32 %v1600, %v2005
        %v2177 = vmul.f32 %v1601, %v2007
        %v2178 = vmul.f32 %v1602, %v2009
        %v2179 = vmul.f32 %v1603, %v2011
        %v2180 = vmul.f32 %v1604, %v2013
        %v2181 = vmul.f32 %v1605, %v2015
        %v2182 = vmul.f32 %v1606, %v2017
        %v2183 = vmul.f32 %v1607, %v2019
        %v2184 = vmul.f32 %v1608, %v2021
        %v2185 = vmul.f32 %v1609, %v2023
        %v2186 = vmul.f32 %v1610, %v2025
        %v2187 = vmul.f32 %v1611, %v2027
        %v2188 = vmul.f32 %v1612, %v2029
        %v2189 = vmul.f32 %v1613, %v2031
        %v2190 = vmul.f32 %v1614, %v2033
        %v2191 = vmul.f32 %v1615, %v2035
        %v2192 = vmul.f32 %v1616, %v2037
        %v2193 = vmul.f32 %v1617, %v2039
        %v2194 = vmul.f32 %v1618, %v2041
        %v2195 = vmul.f32 %v1619, %v2043
        %v2196 = vmul.f32 %v1620, %v2045
        %v2197 = vmul.f32 %v1621, %v2047
        %v2198 = vmul.f32 %v1622, %v2049
        %v2199 = vmul.f32 %v1623, %v2051
        %v2200 = vmul.f32 %v1624, %v2053
        %v2201 = vmul.f32 %v1625, %v2055
        %v2202 = vmul.f32 %v1626, %v2057
        %v2203 = vmul.f32 %v1627, %v2059
        %v2204 = vmul.f32 %v1628, %v2061
        %v2205 = vmul.f32 %v1629, %v2063
        %v2206 = vmul.f32 %v1630, %v2065
        %v2207 = vmul.f32 %v1631, %v2067
        %v2208 = vmul.f32 %v1632, %v2069
        %v2209 = vmul.f32 %v1633, %v2071
        %v2210 = vmul.f32 %v1634, %v2073
        %v2211 = vmul.f32 %v1635, %v2075
        %v2212 = vmul.f32 %v1636, %v2077
        %v2213 = vmul.f32 %v1637, %v2079
        %v2214 = vmul.f32 %v1638, %v2081
        %v2215 = vmul.f32 %v1639, %v2083
        %v2216 = vmul.f32 %v1640, %v2085
        %v2217 = vmul.f32 %v1641, %v2087
        %v2218 = vmul.f32 %v1642, %v2089
        %v2219 = vmul.f32 %v1643, %v2091
        %v2220 = vadd.f32 %v2156, %v614
        %v2221 = vadd.f32 %v2157, %v615
        %v2222 = vadd.f32 %v2158, %v616
        %v2223 = vadd.f32 %v2159, %v617
        %v2224 = vadd.f32 %v2160, %v618
        %v2225 = vadd.f32 %v2161, %v619
        %v2226 = vadd.f32 %v2162, %v620
        %v2227 = vadd.f32 %v2163, %v621
        %v2228 = vadd.f32 %v2164, %v622
        %v2229 = vadd.f32 %v2165, %v623
        %v2230 = vadd.f32 %v2166, %v624
        %v2231 = vadd.f32 %v2167, %v625
        %v2232 = vadd.f32 %v2168, %v626
        %v2233 = vadd.f32 %v2169, %v627
        %v2234 = vadd.f32 %v2170, %v628
        %v2235 = vadd.f32 %v2171, %v629
        %v2236 = vadd.f32 %v2172, %v630
        %v2237 = vadd.f32 %v2173, %v631
        %v2238 = vadd.f32 %v2174, %v632
        %v2239 = vadd.f32 %v2175, %v633
        %v2240 = vadd.f32 %v2176, %v634
        %v2241 = vadd.f32 %v2177, %v635
        %v2242 = vadd.f32 %v2178, %v636
        %v2243 = vadd.f32 %v2179, %v637
        %v2244 = vadd.f32 %v2180, %v638
        %v2245 = vadd.f32 %v2181, %v639
        %v2246 = vadd.f32 %v2182, %v640
        %v2247 = vadd.f32 %v2183, %v641
        %v2248 = vadd.f32 %v2184, %v642
        %v2249 = vadd.f32 %v2185, %v643
        %v2250 = vadd.f32 %v2186, %v644
        %v2251 = vadd.f32 %v2187, %v645
        %v2252 = vadd.f32 %v2188, %v646
        %v2253 = vadd.f32 %v2189, %v647
        %v2254 = vadd.f32 %v2190, %v648
        %v2255 = vadd.f32 %v2191, %v649
        %v2256 = vadd.f32 %v2192, %v650
        %v2257 = vadd.f32 %v2193, %v651
        %v2258 = vadd.f32 %v2194, %v652
        %v2259 = vadd.f32 %v2195, %v653
        %v2260 = vadd.f32 %v2196, %v654
        %v2261 = vadd.f32 %v2197, %v655
        %v2262 = vadd.f32 %v2198, %v656
        %v2263 = vadd.f32 %v2199, %v657
        %v2264 = vadd.f32 %v2200, %v658
        %v2265 = vadd.f32 %v2201, %v659
        %v2266 = vadd.f32 %v2202, %v660
        %v2267 = vadd.f32 %v2203, %v661
        %v2268 = vadd.f32 %v2204, %v662
        %v2269 = vadd.f32 %v2205, %v663
        %v2270 = vadd.f32 %v2206, %v664
        %v2271 = vadd.f32 %v2207, %v665
        %v2272 = vadd.f32 %v2208, %v666
        %v2273 = vadd.f32 %v2209, %v667
        %v2274 = vadd.f32 %v2210, %v668
        %v2275 = vadd.f32 %v2211, %v669
        %v2276 = vadd.f32 %v2212, %v670
        %v2277 = vadd.f32 %v2213, %v671
        %v2278 = vadd.f32 %v2214, %v672
        %v2279 = vadd.f32 %v2215, %v673
        %v2280 = vadd.f32 %v2216, %v674
        %v2281 = vadd.f32 %v2217, %v675
        %v2282 = vadd.f32 %v2218, %v676
        %v2283 = vadd.f32 %v2219, %v677
        %p2284 = scmp.gt.s32.totalorder %s24, 0
        %s2285 = scalar_select %p2284, 1.0, 0.0
        %v2286 = vstv %s2285
        %v2287 = vmul.f32 %v1900, %v2286
        %v2288 = vmul.f32 %v1901, %v2286
        %v2289 = vmul.f32 %v1902, %v2286
        %v2290 = vmul.f32 %v1903, %v2286
        %v2291 = vmul.f32 %v1904, %v2286
        %v2292 = vmul.f32 %v1905, %v2286
        %v2293 = vmul.f32 %v1906, %v2286
        %v2294 = vmul.f32 %v1907, %v2286
        %v2295 = vmul.f32 %v1908, %v2286
        %v2296 = vmul.f32 %v1909, %v2286
        %v2297 = vmul.f32 %v1910, %v2286
        %v2298 = vmul.f32 %v1911, %v2286
        %v2299 = vmul.f32 %v1912, %v2286
        %v2300 = vmul.f32 %v1913, %v2286
        %v2301 = vmul.f32 %v1914, %v2286
        %v2302 = vmul.f32 %v1915, %v2286
        %v2303 = vmul.f32 %v1916, %v2286
        %v2304 = vmul.f32 %v1917, %v2286
        %v2305 = vmul.f32 %v1918, %v2286
        %v2306 = vmul.f32 %v1919, %v2286
        %v2307 = vmul.f32 %v1920, %v2286
        %v2308 = vmul.f32 %v1921, %v2286
        %v2309 = vmul.f32 %v1922, %v2286
        %v2310 = vmul.f32 %v1923, %v2286
        %v2311 = vmul.f32 %v1924, %v2286
        %v2312 = vmul.f32 %v1925, %v2286
        %v2313 = vmul.f32 %v1926, %v2286
        %v2314 = vmul.f32 %v1927, %v2286
        %v2315 = vmul.f32 %v1928, %v2286
        %v2316 = vmul.f32 %v1929, %v2286
        %v2317 = vmul.f32 %v1930, %v2286
        %v2318 = vmul.f32 %v1931, %v2286
        %v2319 = vmul.f32 %v1932, %v2286
        %v2320 = vmul.f32 %v1933, %v2286
        %v2321 = vmul.f32 %v1934, %v2286
        %v2322 = vmul.f32 %v1935, %v2286
        %v2323 = vmul.f32 %v1936, %v2286
        %v2324 = vmul.f32 %v1937, %v2286
        %v2325 = vmul.f32 %v1938, %v2286
        %v2326 = vmul.f32 %v1939, %v2286
        %v2327 = vmul.f32 %v1940, %v2286
        %v2328 = vmul.f32 %v1941, %v2286
        %v2329 = vmul.f32 %v1942, %v2286
        %v2330 = vmul.f32 %v1943, %v2286
        %v2331 = vmul.f32 %v1944, %v2286
        %v2332 = vmul.f32 %v1945, %v2286
        %v2333 = vmul.f32 %v1946, %v2286
        %v2334 = vmul.f32 %v1947, %v2286
        %v2335 = vmul.f32 %v1948, %v2286
        %v2336 = vmul.f32 %v1949, %v2286
        %v2337 = vmul.f32 %v1950, %v2286
        %v2338 = vmul.f32 %v1951, %v2286
        %v2339 = vmul.f32 %v1952, %v2286
        %v2340 = vmul.f32 %v1953, %v2286
        %v2341 = vmul.f32 %v1954, %v2286
        %v2342 = vmul.f32 %v1955, %v2286
        %v2343 = vmul.f32 %v1956, %v2286
        %v2344 = vmul.f32 %v1957, %v2286
        %v2345 = vmul.f32 %v1958, %v2286
        %v2346 = vmul.f32 %v1959, %v2286
        %v2347 = vmul.f32 %v1960, %v2286
        %v2348 = vmul.f32 %v1961, %v2286
        %v2349 = vmul.f32 %v1962, %v2286
        %v2350 = vmul.f32 %v1963, %v2286
        %s2351 = sadd.s32 %s24, 1
        %s2352 = smul.u32 %s2351, 128
        %p2353 = scmp.lt.s32.totalorder %s2352, 300
        %s2354 = scalar_select %p2353, 1.0, 0.0
        %v2355 = vstv %s2354
        %v2356 = vmul.f32 %v2220, %v2355
        %v2357 = vmul.f32 %v2221, %v2355
        %v2358 = vmul.f32 %v2222, %v2355
        %v2359 = vmul.f32 %v2223, %v2355
        %v2360 = vmul.f32 %v2224, %v2355
        %v2361 = vmul.f32 %v2225, %v2355
        %v2362 = vmul.f32 %v2226, %v2355
        %v2363 = vmul.f32 %v2227, %v2355
        %v2364 = vmul.f32 %v2228, %v2355
        %v2365 = vmul.f32 %v2229, %v2355
        %v2366 = vmul.f32 %v2230, %v2355
        %v2367 = vmul.f32 %v2231, %v2355
        %v2368 = vmul.f32 %v2232, %v2355
        %v2369 = vmul.f32 %v2233, %v2355
        %v2370 = vmul.f32 %v2234, %v2355
        %v2371 = vmul.f32 %v2235, %v2355
        %v2372 = vmul.f32 %v2236, %v2355
        %v2373 = vmul.f32 %v2237, %v2355
        %v2374 = vmul.f32 %v2238, %v2355
        %v2375 = vmul.f32 %v2239, %v2355
        %v2376 = vmul.f32 %v2240, %v2355
        %v2377 = vmul.f32 %v2241, %v2355
        %v2378 = vmul.f32 %v2242, %v2355
        %v2379 = vmul.f32 %v2243, %v2355
        %v2380 = vmul.f32 %v2244, %v2355
        %v2381 = vmul.f32 %v2245, %v2355
        %v2382 = vmul.f32 %v2246, %v2355
        %v2383 = vmul.f32 %v2247, %v2355
        %v2384 = vmul.f32 %v2248, %v2355
        %v2385 = vmul.f32 %v2249, %v2355
        %v2386 = vmul.f32 %v2250, %v2355
        %v2387 = vmul.f32 %v2251, %v2355
        %v2388 = vmul.f32 %v2252, %v2355
        %v2389 = vmul.f32 %v2253, %v2355
        %v2390 = vmul.f32 %v2254, %v2355
        %v2391 = vmul.f32 %v2255, %v2355
        %v2392 = vmul.f32 %v2256, %v2355
        %v2393 = vmul.f32 %v2257, %v2355
        %v2394 = vmul.f32 %v2258, %v2355
        %v2395 = vmul.f32 %v2259, %v2355
        %v2396 = vmul.f32 %v2260, %v2355
        %v2397 = vmul.f32 %v2261, %v2355
        %v2398 = vmul.f32 %v2262, %v2355
        %v2399 = vmul.f32 %v2263, %v2355
        %v2400 = vmul.f32 %v2264, %v2355
        %v2401 = vmul.f32 %v2265, %v2355
        %v2402 = vmul.f32 %v2266, %v2355
        %v2403 = vmul.f32 %v2267, %v2355
        %v2404 = vmul.f32 %v2268, %v2355
        %v2405 = vmul.f32 %v2269, %v2355
        %v2406 = vmul.f32 %v2270, %v2355
        %v2407 = vmul.f32 %v2271, %v2355
        %v2408 = vmul.f32 %v2272, %v2355
        %v2409 = vmul.f32 %v2273, %v2355
        %v2410 = vmul.f32 %v2274, %v2355
        %v2411 = vmul.f32 %v2275, %v2355
        %v2412 = vmul.f32 %v2276, %v2355
        %v2413 = vmul.f32 %v2277, %v2355
        %v2414 = vmul.f32 %v2278, %v2355
        %v2415 = vmul.f32 %v2279, %v2355
        %v2416 = vmul.f32 %v2280, %v2355
        %v2417 = vmul.f32 %v2281, %v2355
        %v2418 = vmul.f32 %v2282, %v2355
        %v2419 = vmul.f32 %v2283, %v2355
        %vm2420 = vcmp.eq.s32.totalorder %v1447, 0
        %2421 = vrot.lane.b32.xlu0 %v1452, 1
        %v2422 = vpop.permute.xlu0 %2421
        %2423 = vrot.lane.b32.xlu0 %v1453, 1
        %v2424 = vpop.permute.xlu0 %2423
        %2425 = vrot.lane.b32.xlu0 %v1454, 1
        %v2426 = vpop.permute.xlu0 %2425
        %2427 = vrot.lane.b32.xlu0 %v1455, 1
        %v2428 = vpop.permute.xlu0 %2427
        %2429 = vrot.lane.b32.xlu0 %v1456, 1
        %v2430 = vpop.permute.xlu0 %2429
        %2431 = vrot.lane.b32.xlu0 %v1457, 1
        %v2432 = vpop.permute.xlu0 %2431
        %2433 = vrot.lane.b32.xlu0 %v1458, 1
        %v2434 = vpop.permute.xlu0 %2433
        %2435 = vrot.lane.b32.xlu0 %v1459, 1
        %v2436 = vpop.permute.xlu0 %2435
        %2437 = vrot.lane.b32.xlu0 %v1460, 1
        %v2438 = vpop.permute.xlu0 %2437
        %2439 = vrot.lane.b32.xlu0 %v1461, 1
        %v2440 = vpop.permute.xlu0 %2439
        %2441 = vrot.lane.b32.xlu0 %v1462, 1
        %v2442 = vpop.permute.xlu0 %2441
        %2443 = vrot.lane.b32.xlu0 %v1463, 1
        %v2444 = vpop.permute.xlu0 %2443
        %2445 = vrot.lane.b32.xlu0 %v1464, 1
        %v2446 = vpop.permute.xlu0 %2445
        %2447 = vrot.lane.b32.xlu0 %v1465, 1
        %v2448 = vpop.permute.xlu0 %2447
        %2449 = vrot.lane.b32.xlu0 %v1466, 1
        %v2450 = vpop.permute.xlu0 %2449
        %2451 = vrot.lane.b32.xlu0 %v1467, 1
        %v2452 = vpop.permute.xlu0 %2451
        %2453 = vrot.lane.b32.xlu0 %v1468, 1
        %v2454 = vpop.permute.xlu0 %2453
        %2455 = vrot.lane.b32.xlu0 %v1469, 1
        %v2456 = vpop.permute.xlu0 %2455
        %2457 = vrot.lane.b32.xlu0 %v1470, 1
        %v2458 = vpop.permute.xlu0 %2457
        %2459 = vrot.lane.b32.xlu0 %v1471, 1
        %v2460 = vpop.permute.xlu0 %2459
        %2461 = vrot.lane.b32.xlu0 %v1472, 1
        %v2462 = vpop.permute.xlu0 %2461
        %2463 = vrot.lane.b32.xlu0 %v1473, 1
        %v2464 = vpop.permute.xlu0 %2463
        %2465 = vrot.lane.b32.xlu0 %v1474, 1
        %v2466 = vpop.permute.xlu0 %2465
        %2467 = vrot.lane.b32.xlu0 %v1475, 1
        %v2468 = vpop.permute.xlu0 %2467
        %2469 = vrot.lane.b32.xlu0 %v1476, 1
        %v2470 = vpop.permute.xlu0 %2469
        %2471 = vrot.lane.b32.xlu0 %v1477, 1
        %v2472 = vpop.permute.xlu0 %2471
        %2473 = vrot.lane.b32.xlu0 %v1478, 1
        %v2474 = vpop.permute.xlu0 %2473
        %2475 = vrot.lane.b32.xlu0 %v1479, 1
        %v2476 = vpop.permute.xlu0 %2475
        %2477 = vrot.lane.b32.xlu0 %v1480, 1
        %v2478 = vpop.permute.xlu0 %2477
        %2479 = vrot.lane.b32.xlu0 %v1481, 1
        %v2480 = vpop.permute.xlu0 %2479
        %2481 = vrot.lane.b32.xlu0 %v1482, 1
        %v2482 = vpop.permute.xlu0 %2481
        %2483 = vrot.lane.b32.xlu0 %v1483, 1
        %v2484 = vpop.permute.xlu0 %2483
        %2485 = vrot.lane.b32.xlu0 %v1484, 1
        %v2486 = vpop.permute.xlu0 %2485
        %2487 = vrot.lane.b32.xlu0 %v1485, 1
        %v2488 = vpop.permute.xlu0 %2487
        %2489 = vrot.lane.b32.xlu0 %v1486, 1
        %v2490 = vpop.permute.xlu0 %2489
        %2491 = vrot.lane.b32.xlu0 %v1487, 1
        %v2492 = vpop.permute.xlu0 %2491
        %2493 = vrot.lane.b32.xlu0 %v1488, 1
        %v2494 = vpop.permute.xlu0 %2493
        %2495 = vrot.lane.b32.xlu0 %v1489, 1
        %v2496 = vpop.permute.xlu0 %2495
        %2497 = vrot.lane.b32.xlu0 %v1490, 1
        %v2498 = vpop.permute.xlu0 %2497
        %2499 = vrot.lane.b32.xlu0 %v1491, 1
        %v2500 = vpop.permute.xlu0 %2499
        %2501 = vrot.lane.b32.xlu0 %v1492, 1
        %v2502 = vpop.permute.xlu0 %2501
        %2503 = vrot.lane.b32.xlu0 %v1493, 1
        %v2504 = vpop.permute.xlu0 %2503
        %2505 = vrot.lane.b32.xlu0 %v1494, 1
        %v2506 = vpop.permute.xlu0 %2505
        %2507 = vrot.lane.b32.xlu0 %v1495, 1
        %v2508 = vpop.permute.xlu0 %2507
        %2509 = vrot.lane.b32.xlu0 %v1496, 1
        %v2510 = vpop.permute.xlu0 %2509
        %2511 = vrot.lane.b32.xlu0 %v1497, 1
        %v2512 = vpop.permute.xlu0 %2511
        %2513 = vrot.lane.b32.xlu0 %v1498, 1
        %v2514 = vpop.permute.xlu0 %2513
        %2515 = vrot.lane.b32.xlu0 %v1499, 1
        %v2516 = vpop.permute.xlu0 %2515
        %2517 = vrot.lane.b32.xlu0 %v1500, 1
        %v2518 = vpop.permute.xlu0 %2517
        %2519 = vrot.lane.b32.xlu0 %v1501, 1
        %v2520 = vpop.permute.xlu0 %2519
        %2521 = vrot.lane.b32.xlu0 %v1502, 1
        %v2522 = vpop.permute.xlu0 %2521
        %2523 = vrot.lane.b32.xlu0 %v1503, 1
        %v2524 = vpop.permute.xlu0 %2523
        %2525 = vrot.lane.b32.xlu0 %v1504, 1
        %v2526 = vpop.permute.xlu0 %2525
        %2527 = vrot.lane.b32.xlu0 %v1505, 1
        %v2528 = vpop.permute.xlu0 %2527
        %2529 = vrot.lane.b32.xlu0 %v1506, 1
        %v2530 = vpop.permute.xlu0 %2529
        %2531 = vrot.lane.b32.xlu0 %v1507, 1
        %v2532 = vpop.permute.xlu0 %2531
        %2533 = vrot.lane.b32.xlu0 %v1508, 1
        %v2534 = vpop.permute.xlu0 %2533
        %2535 = vrot.lane.b32.xlu0 %v1509, 1
        %v2536 = vpop.permute.xlu0 %2535
        %2537 = vrot.lane.b32.xlu0 %v1510, 1
        %v2538 = vpop.permute.xlu0 %2537
        %2539 = vrot.lane.b32.xlu0 %v1511, 1
        %v2540 = vpop.permute.xlu0 %2539
        %2541 = vrot.lane.b32.xlu0 %v1512, 1
        %v2542 = vpop.permute.xlu0 %2541
        %2543 = vrot.lane.b32.xlu0 %v1513, 1
        %v2544 = vpop.permute.xlu0 %2543
        %2545 = vrot.lane.b32.xlu0 %v1514, 1
        %v2546 = vpop.permute.xlu0 %2545
        %2547 = vrot.lane.b32.xlu0 %v1515, 1
        %v2548 = vpop.permute.xlu0 %2547
        %2550 = vset.pattern.permute.xlu0 0
        %2551 = vperm.xlu0 %2550, %v2287
        %v2552 = vpop.permute.xlu0 %2551
        %2555 = vset.pattern.permute.xlu0 0
        %2556 = vperm.xlu0 %2555, %v2288
        %v2557 = vpop.permute.xlu0 %2556
        %2560 = vset.pattern.permute.xlu0 0
        %2561 = vperm.xlu0 %2560, %v2289
        %v2562 = vpop.permute.xlu0 %2561
        %2565 = vset.pattern.permute.xlu0 0
        %2566 = vperm.xlu0 %2565, %v2290
        %v2567 = vpop.permute.xlu0 %2566
        %2570 = vset.pattern.permute.xlu0 0
        %2571 = vperm.xlu0 %2570, %v2291
        %v2572 = vpop.permute.xlu0 %2571
        %2575 = vset.pattern.permute.xlu0 0
        %2576 = vperm.xlu0 %2575, %v2292
        %v2577 = vpop.permute.xlu0 %2576
        %2580 = vset.pattern.permute.xlu0 0
        %2581 = vperm.xlu0 %2580, %v2293
        %v2582 = vpop.permute.xlu0 %2581
        %2585 = vset.pattern.permute.xlu0 0
        %2586 = vperm.xlu0 %2585, %v2294
        %v2587 = vpop.permute.xlu0 %2586
        %2590 = vset.pattern.permute.xlu0 0
        %2591 = vperm.xlu0 %2590, %v2295
        %v2592 = vpop.permute.xlu0 %2591
        %2595 = vset.pattern.permute.xlu0 0
        %2596 = vperm.xlu0 %2595, %v2296
        %v2597 = vpop.permute.xlu0 %2596
        %2600 = vset.pattern.permute.xlu0 0
        %2601 = vperm.xlu0 %2600, %v2297
        %v2602 = vpop.permute.xlu0 %2601
        %2605 = vset.pattern.permute.xlu0 0
        %2606 = vperm.xlu0 %2605, %v2298
        %v2607 = vpop.permute.xlu0 %2606
        %2610 = vset.pattern.permute.xlu0 0
        %2611 = vperm.xlu0 %2610, %v2299
        %v2612 = vpop.permute.xlu0 %2611
        %2615 = vset.pattern.permute.xlu0 0
        %2616 = vperm.xlu0 %2615, %v2300
        %v2617 = vpop.permute.xlu0 %2616
        %2620 = vset.pattern.permute.xlu0 0
        %2621 = vperm.xlu0 %2620, %v2301
        %v2622 = vpop.permute.xlu0 %2621
        %2625 = vset.pattern.permute.xlu0 0
        %2626 = vperm.xlu0 %2625, %v2302
        %v2627 = vpop.permute.xlu0 %2626
        %2630 = vset.pattern.permute.xlu0 0
        %2631 = vperm.xlu0 %2630, %v2303
        %v2632 = vpop.permute.xlu0 %2631
        %2635 = vset.pattern.permute.xlu0 0
        %2636 = vperm.xlu0 %2635, %v2304
        %v2637 = vpop.permute.xlu0 %2636
        %2640 = vset.pattern.permute.xlu0 0
        %2641 = vperm.xlu0 %2640, %v2305
        %v2642 = vpop.permute.xlu0 %2641
        %2645 = vset.pattern.permute.xlu0 0
        %2646 = vperm.xlu0 %2645, %v2306
        %v2647 = vpop.permute.xlu0 %2646
        %2650 = vset.pattern.permute.xlu0 0
        %2651 = vperm.xlu0 %2650, %v2307
        %v2652 = vpop.permute.xlu0 %2651
        %2655 = vset.pattern.permute.xlu0 0
        %2656 = vperm.xlu0 %2655, %v2308
        %v2657 = vpop.permute.xlu0 %2656
        %2660 = vset.pattern.permute.xlu0 0
        %2661 = vperm.xlu0 %2660, %v2309
        %v2662 = vpop.permute.xlu0 %2661
        %2665 = vset.pattern.permute.xlu0 0
        %2666 = vperm.xlu0 %2665, %v2310
        %v2667 = vpop.permute.xlu0 %2666
        %2670 = vset.pattern.permute.xlu0 0
        %2671 = vperm.xlu0 %2670, %v2311
        %v2672 = vpop.permute.xlu0 %2671
        %2675 = vset.pattern.permute.xlu0 0
        %2676 = vperm.xlu0 %2675, %v2312
        %v2677 = vpop.permute.xlu0 %2676
        %2680 = vset.pattern.permute.xlu0 0
        %2681 = vperm.xlu0 %2680, %v2313
        %v2682 = vpop.permute.xlu0 %2681
        %2685 = vset.pattern.permute.xlu0 0
        %2686 = vperm.xlu0 %2685, %v2314
        %v2687 = vpop.permute.xlu0 %2686
        %2690 = vset.pattern.permute.xlu0 0
        %2691 = vperm.xlu0 %2690, %v2315
        %v2692 = vpop.permute.xlu0 %2691
        %2695 = vset.pattern.permute.xlu0 0
        %2696 = vperm.xlu0 %2695, %v2316
        %v2697 = vpop.permute.xlu0 %2696
        %2700 = vset.pattern.permute.xlu0 0
        %2701 = vperm.xlu0 %2700, %v2317
        %v2702 = vpop.permute.xlu0 %2701
        %2705 = vset.pattern.permute.xlu0 0
        %2706 = vperm.xlu0 %2705, %v2318
        %v2707 = vpop.permute.xlu0 %2706
        %2710 = vset.pattern.permute.xlu0 0
        %2711 = vperm.xlu0 %2710, %v2319
        %v2712 = vpop.permute.xlu0 %2711
        %2715 = vset.pattern.permute.xlu0 0
        %2716 = vperm.xlu0 %2715, %v2320
        %v2717 = vpop.permute.xlu0 %2716
        %2720 = vset.pattern.permute.xlu0 0
        %2721 = vperm.xlu0 %2720, %v2321
        %v2722 = vpop.permute.xlu0 %2721
        %2725 = vset.pattern.permute.xlu0 0
        %2726 = vperm.xlu0 %2725, %v2322
        %v2727 = vpop.permute.xlu0 %2726
        %2730 = vset.pattern.permute.xlu0 0
        %2731 = vperm.xlu0 %2730, %v2323
        %v2732 = vpop.permute.xlu0 %2731
        %2735 = vset.pattern.permute.xlu0 0
        %2736 = vperm.xlu0 %2735, %v2324
        %v2737 = vpop.permute.xlu0 %2736
        %2740 = vset.pattern.permute.xlu0 0
        %2741 = vperm.xlu0 %2740, %v2325
        %v2742 = vpop.permute.xlu0 %2741
        %2745 = vset.pattern.permute.xlu0 0
        %2746 = vperm.xlu0 %2745, %v2326
        %v2747 = vpop.permute.xlu0 %2746
        %2750 = vset.pattern.permute.xlu0 0
        %2751 = vperm.xlu0 %2750, %v2327
        %v2752 = vpop.permute.xlu0 %2751
        %2755 = vset.pattern.permute.xlu0 0
        %2756 = vperm.xlu0 %2755, %v2328
        %v2757 = vpop.permute.xlu0 %2756
        %2760 = vset.pattern.permute.xlu0 0
        %2761 = vperm.xlu0 %2760, %v2329
        %v2762 = vpop.permute.xlu0 %2761
        %2765 = vset.pattern.permute.xlu0 0
        %2766 = vperm.xlu0 %2765, %v2330
        %v2767 = vpop.permute.xlu0 %2766
        %2770 = vset.pattern.permute.xlu0 0
        %2771 = vperm.xlu0 %2770, %v2331
        %v2772 = vpop.permute.xlu0 %2771
        %2775 = vset.pattern.permute.xlu0 0
        %2776 = vperm.xlu0 %2775, %v2332
        %v2777 = vpop.permute.xlu0 %2776
        %2780 = vset.pattern.permute.xlu0 0
        %2781 = vperm.xlu0 %2780, %v2333
        %v2782 = vpop.permute.xlu0 %2781
        %2785 = vset.pattern.permute.xlu0 0
        %2786 = vperm.xlu0 %2785, %v2334
        %v2787 = vpop.permute.xlu0 %2786
        %2790 = vset.pattern.permute.xlu0 0
        %2791 = vperm.xlu0 %2790, %v2335
        %v2792 = vpop.permute.xlu0 %2791
        %2795 = vset.pattern.permute.xlu0 0
        %2796 = vperm.xlu0 %2795, %v2336
        %v2797 = vpop.permute.xlu0 %2796
        %2800 = vset.pattern.permute.xlu0 0
        %2801 = vperm.xlu0 %2800, %v2337
        %v2802 = vpop.permute.xlu0 %2801
        %2805 = vset.pattern.permute.xlu0 0
        %2806 = vperm.xlu0 %2805, %v2338
        %v2807 = vpop.permute.xlu0 %2806
        %2810 = vset.pattern.permute.xlu0 0
        %2811 = vperm.xlu0 %2810, %v2339
        %v2812 = vpop.permute.xlu0 %2811
        %2815 = vset.pattern.permute.xlu0 0
        %2816 = vperm.xlu0 %2815, %v2340
        %v2817 = vpop.permute.xlu0 %2816
        %2820 = vset.pattern.permute.xlu0 0
        %2821 = vperm.xlu0 %2820, %v2341
        %v2822 = vpop.permute.xlu0 %2821
        %2825 = vset.pattern.permute.xlu0 0
        %2826 = vperm.xlu0 %2825, %v2342
        %v2827 = vpop.permute.xlu0 %2826
        %2830 = vset.pattern.permute.xlu0 0
        %2831 = vperm.xlu0 %2830, %v2343
        %v2832 = vpop.permute.xlu0 %2831
        %2835 = vset.pattern.permute.xlu0 0
        %2836 = vperm.xlu0 %2835, %v2344
        %v2837 = vpop.permute.xlu0 %2836
        %2840 = vset.pattern.permute.xlu0 0
        %2841 = vperm.xlu0 %2840, %v2345
        %v2842 = vpop.permute.xlu0 %2841
        %2845 = vset.pattern.permute.xlu0 0
        %2846 = vperm.xlu0 %2845, %v2346
        %v2847 = vpop.permute.xlu0 %2846
        %2850 = vset.pattern.permute.xlu0 0
        %2851 = vperm.xlu0 %2850, %v2347
        %v2852 = vpop.permute.xlu0 %2851
        %2855 = vset.pattern.permute.xlu0 0
        %2856 = vperm.xlu0 %2855, %v2348
        %v2857 = vpop.permute.xlu0 %2856
        %2860 = vset.pattern.permute.xlu0 0
        %2861 = vperm.xlu0 %2860, %v2349
        %v2862 = vpop.permute.xlu0 %2861
        %2865 = vset.pattern.permute.xlu0 0
        %2866 = vperm.xlu0 %2865, %v2350
        %v2867 = vpop.permute.xlu0 %2866
        %v2869 = vsel %vm2420, %v2552, %v2422
        %v2870 = vsel %vm2420, %v2557, %v2424
        %v2871 = vsel %vm2420, %v2562, %v2426
        %v2872 = vsel %vm2420, %v2567, %v2428
        %v2873 = vsel %vm2420, %v2572, %v2430
        %v2874 = vsel %vm2420, %v2577, %v2432
        %v2875 = vsel %vm2420, %v2582, %v2434
        %v2876 = vsel %vm2420, %v2587, %v2436
        %v2877 = vsel %vm2420, %v2592, %v2438
        %v2878 = vsel %vm2420, %v2597, %v2440
        %v2879 = vsel %vm2420, %v2602, %v2442
        %v2880 = vsel %vm2420, %v2607, %v2444
        %v2881 = vsel %vm2420, %v2612, %v2446
        %v2882 = vsel %vm2420, %v2617, %v2448
        %v2883 = vsel %vm2420, %v2622, %v2450
        %v2884 = vsel %vm2420, %v2627, %v2452
        %v2885 = vsel %vm2420, %v2632, %v2454
        %v2886 = vsel %vm2420, %v2637, %v2456
        %v2887 = vsel %vm2420, %v2642, %v2458
        %v2888 = vsel %vm2420, %v2647, %v2460
        %v2889 = vsel %vm2420, %v2652, %v2462
        %v2890 = vsel %vm2420, %v2657, %v2464
        %v2891 = vsel %vm2420, %v2662, %v2466
        %v2892 = vsel %vm2420, %v2667, %v2468
        %v2893 = vsel %vm2420, %v2672, %v2470
        %v2894 = vsel %vm2420, %v2677, %v2472
        %v2895 = vsel %vm2420, %v2682, %v2474
        %v2896 = vsel %vm2420, %v2687, %v2476
        %v2897 = vsel %vm2420, %v2692, %v2478
        %v2898 = vsel %vm2420, %v2697, %v2480
        %v2899 = vsel %vm2420, %v2702, %v2482
        %v2900 = vsel %vm2420, %v2707, %v2484
        %v2901 = vsel %vm2420, %v2712, %v2486
        %v2902 = vsel %vm2420, %v2717, %v2488
        %v2903 = vsel %vm2420, %v2722, %v2490
        %v2904 = vsel %vm2420, %v2727, %v2492
        %v2905 = vsel %vm2420, %v2732, %v2494
        %v2906 = vsel %vm2420, %v2737, %v2496
        %v2907 = vsel %vm2420, %v2742, %v2498
        %v2908 = vsel %vm2420, %v2747, %v2500
        %v2909 = vsel %vm2420, %v2752, %v2502
        %v2910 = vsel %vm2420, %v2757, %v2504
        %v2911 = vsel %vm2420, %v2762, %v2506
        %v2912 = vsel %vm2420, %v2767, %v2508
        %v2913 = vsel %vm2420, %v2772, %v2510
        %v2914 = vsel %vm2420, %v2777, %v2512
        %v2915 = vsel %vm2420, %v2782, %v2514
        %v2916 = vsel %vm2420, %v2787, %v2516
        %v2917 = vsel %vm2420, %v2792, %v2518
        %v2918 = vsel %vm2420, %v2797, %v2520
        %v2919 = vsel %vm2420, %v2802, %v2522
        %v2920 = vsel %vm2420, %v2807, %v2524
        %v2921 = vsel %vm2420, %v2812, %v2526
        %v2922 = vsel %vm2420, %v2817, %v2528
        %v2923 = vsel %vm2420, %v2822, %v2530
        %v2924 = vsel %vm2420, %v2827, %v2532
        %v2925 = vsel %vm2420, %v2832, %v2534
        %v2926 = vsel %vm2420, %v2837, %v2536
        %v2927 = vsel %vm2420, %v2842, %v2538
        %v2928 = vsel %vm2420, %v2847, %v2540
        %v2929 = vsel %vm2420, %v2852, %v2542
        %v2930 = vsel %vm2420, %v2857, %v2544
        %v2931 = vsel %vm2420, %v2862, %v2546
        %v2932 = vsel %vm2420, %v2867, %v2548
        %vm2933 = vcmp.eq.s32.totalorder %v1447, 127
        %2934 = vrot.lane.b32.xlu0 %v1452, 127
        %v2935 = vpop.permute.xlu0 %2934
        %2936 = vrot.lane.b32.xlu0 %v1453, 127
        %v2937 = vpop.permute.xlu0 %2936
        %2938 = vrot.lane.b32.xlu0 %v1454, 127
        %v2939 = vpop.permute.xlu0 %2938
        %2940 = vrot.lane.b32.xlu0 %v1455, 127
        %v2941 = vpop.permute.xlu0 %2940
        %2942 = vrot.lane.b32.xlu0 %v1456, 127
        %v2943 = vpop.permute.xlu0 %2942
        %2944 = vrot.lane.b32.xlu0 %v1457, 127
        %v2945 = vpop.permute.xlu0 %2944
        %2946 = vrot.lane.b32.xlu0 %v1458, 127
        %v2947 = vpop.permute.xlu0 %2946
        %2948 = vrot.lane.b32.xlu0 %v1459, 127
        %v2949 = vpop.permute.xlu0 %2948
        %2950 = vrot.lane.b32.xlu0 %v1460, 127
        %v2951 = vpop.permute.xlu0 %2950
        %2952 = vrot.lane.b32.xlu0 %v1461, 127
        %v2953 = vpop.permute.xlu0 %2952
        %2954 = vrot.lane.b32.xlu0 %v1462, 127
        %v2955 = vpop.permute.xlu0 %2954
        %2956 = vrot.lane.b32.xlu0 %v1463, 127
        %v2957 = vpop.permute.xlu0 %2956
        %2958 = vrot.lane.b32.xlu0 %v1464, 127
        %v2959 = vpop.permute.xlu0 %2958
        %2960 = vrot.lane.b32.xlu0 %v1465, 127
        %v2961 = vpop.permute.xlu0 %2960
        %2962 = vrot.lane.b32.xlu0 %v1466, 127
        %v2963 = vpop.permute.xlu0 %2962
        %2964 = vrot.lane.b32.xlu0 %v1467, 127
        %v2965 = vpop.permute.xlu0 %2964
        %2966 = vrot.lane.b32.xlu0 %v1468, 127
        %v2967 = vpop.permute.xlu0 %2966
        %2968 = vrot.lane.b32.xlu0 %v1469, 127
        %v2969 = vpop.permute.xlu0 %2968
        %2970 = vrot.lane.b32.xlu0 %v1470, 127
        %v2971 = vpop.permute.xlu0 %2970
        %2972 = vrot.lane.b32.xlu0 %v1471, 127
        %v2973 = vpop.permute.xlu0 %2972
        %2974 = vrot.lane.b32.xlu0 %v1472, 127
        %v2975 = vpop.permute.xlu0 %2974
        %2976 = vrot.lane.b32.xlu0 %v1473, 127
        %v2977 = vpop.permute.xlu0 %2976
        %2978 = vrot.lane.b32.xlu0 %v1474, 127
        %v2979 = vpop.permute.xlu0 %2978
        %2980 = vrot.lane.b32.xlu0 %v1475, 127
        %v2981 = vpop.permute.xlu0 %2980
        %2982 = vrot.lane.b32.xlu0 %v1476, 127
        %v2983 = vpop.permute.xlu0 %2982
        %2984 = vrot.lane.b32.xlu0 %v1477, 127
        %v2985 = vpop.permute.xlu0 %2984
        %2986 = vrot.lane.b32.xlu0 %v1478, 127
        %v2987 = vpop.permute.xlu0 %2986
        %2988 = vrot.lane.b32.xlu0 %v1479, 127
        %v2989 = vpop.permute.xlu0 %2988
        %2990 = vrot.lane.b32.xlu0 %v1480, 127
        %v2991 = vpop.permute.xlu0 %2990
        %2992 = vrot.lane.b32.xlu0 %v1481, 127
        %v2993 = vpop.permute.xlu0 %2992
        %2994 = vrot.lane.b32.xlu0 %v1482, 127
        %v2995 = vpop.permute.xlu0 %2994
        %2996 = vrot.lane.b32.xlu0 %v1483, 127
        %v2997 = vpop.permute.xlu0 %2996
        %2998 = vrot.lane.b32.xlu0 %v1484, 127
        %v2999 = vpop.permute.xlu0 %2998
        %3000 = vrot.lane.b32.xlu0 %v1485, 127
        %v3001 = vpop.permute.xlu0 %3000
        %3002 = vrot.lane.b32.xlu0 %v1486, 127
        %v3003 = vpop.permute.xlu0 %3002
        %3004 = vrot.lane.b32.xlu0 %v1487, 127
        %v3005 = vpop.permute.xlu0 %3004
        %3006 = vrot.lane.b32.xlu0 %v1488, 127
        %v3007 = vpop.permute.xlu0 %3006
        %3008 = vrot.lane.b32.xlu0 %v1489, 127
        %v3009 = vpop.permute.xlu0 %3008
        %3010 = vrot.lane.b32.xlu0 %v1490, 127
        %v3011 = vpop.permute.xlu0 %3010
        %3012 = vrot.lane.b32.xlu0 %v1491, 127
        %v3013 = vpop.permute.xlu0 %3012
        %3014 = vrot.lane.b32.xlu0 %v1492, 127
        %v3015 = vpop.permute.xlu0 %3014
        %3016 = vrot.lane.b32.xlu0 %v1493, 127
        %v3017 = vpop.permute.xlu0 %3016
        %3018 = vrot.lane.b32.xlu0 %v1494, 127
        %v3019 = vpop.permute.xlu0 %3018
        %3020 = vrot.lane.b32.xlu0 %v1495, 127
        %v3021 = vpop.permute.xlu0 %3020
        %3022 = vrot.lane.b32.xlu0 %v1496, 127
        %v3023 = vpop.permute.xlu0 %3022
        %3024 = vrot.lane.b32.xlu0 %v1497, 127
        %v3025 = vpop.permute.xlu0 %3024
        %3026 = vrot.lane.b32.xlu0 %v1498, 127
        %v3027 = vpop.permute.xlu0 %3026
        %3028 = vrot.lane.b32.xlu0 %v1499, 127
        %v3029 = vpop.permute.xlu0 %3028
        %3030 = vrot.lane.b32.xlu0 %v1500, 127
        %v3031 = vpop.permute.xlu0 %3030
        %3032 = vrot.lane.b32.xlu0 %v1501, 127
        %v3033 = vpop.permute.xlu0 %3032
        %3034 = vrot.lane.b32.xlu0 %v1502, 127
        %v3035 = vpop.permute.xlu0 %3034
        %3036 = vrot.lane.b32.xlu0 %v1503, 127
        %v3037 = vpop.permute.xlu0 %3036
        %3038 = vrot.lane.b32.xlu0 %v1504, 127
        %v3039 = vpop.permute.xlu0 %3038
        %3040 = vrot.lane.b32.xlu0 %v1505, 127
        %v3041 = vpop.permute.xlu0 %3040
        %3042 = vrot.lane.b32.xlu0 %v1506, 127
        %v3043 = vpop.permute.xlu0 %3042
        %3044 = vrot.lane.b32.xlu0 %v1507, 127
        %v3045 = vpop.permute.xlu0 %3044
        %3046 = vrot.lane.b32.xlu0 %v1508, 127
        %v3047 = vpop.permute.xlu0 %3046
        %3048 = vrot.lane.b32.xlu0 %v1509, 127
        %v3049 = vpop.permute.xlu0 %3048
        %3050 = vrot.lane.b32.xlu0 %v1510, 127
        %v3051 = vpop.permute.xlu0 %3050
        %3052 = vrot.lane.b32.xlu0 %v1511, 127
        %v3053 = vpop.permute.xlu0 %3052
        %3054 = vrot.lane.b32.xlu0 %v1512, 127
        %v3055 = vpop.permute.xlu0 %3054
        %3056 = vrot.lane.b32.xlu0 %v1513, 127
        %v3057 = vpop.permute.xlu0 %3056
        %3058 = vrot.lane.b32.xlu0 %v1514, 127
        %v3059 = vpop.permute.xlu0 %3058
        %3060 = vrot.lane.b32.xlu0 %v1515, 127
        %v3061 = vpop.permute.xlu0 %3060
        %3063 = vset.pattern.permute.xlu0 1
        %3064 = vperm.xlu0 %3063, %v2356
        %v3065 = vpop.permute.xlu0 %3064
        %3068 = vset.pattern.permute.xlu0 1
        %3069 = vperm.xlu0 %3068, %v2357
        %v3070 = vpop.permute.xlu0 %3069
        %3073 = vset.pattern.permute.xlu0 1
        %3074 = vperm.xlu0 %3073, %v2358
        %v3075 = vpop.permute.xlu0 %3074
        %3078 = vset.pattern.permute.xlu0 1
        %3079 = vperm.xlu0 %3078, %v2359
        %v3080 = vpop.permute.xlu0 %3079
        %3083 = vset.pattern.permute.xlu0 1
        %3084 = vperm.xlu0 %3083, %v2360
        %v3085 = vpop.permute.xlu0 %3084
        %3088 = vset.pattern.permute.xlu0 1
        %3089 = vperm.xlu0 %3088, %v2361
        %v3090 = vpop.permute.xlu0 %3089
        %3093 = vset.pattern.permute.xlu0 1
        %3094 = vperm.xlu0 %3093, %v2362
        %v3095 = vpop.permute.xlu0 %3094
        %3098 = vset.pattern.permute.xlu0 1
        %3099 = vperm.xlu0 %3098, %v2363
        %v3100 = vpop.permute.xlu0 %3099
        %3103 = vset.pattern.permute.xlu0 1
        %3104 = vperm.xlu0 %3103, %v2364
        %v3105 = vpop.permute.xlu0 %3104
        %3108 = vset.pattern.permute.xlu0 1
        %3109 = vperm.xlu0 %3108, %v2365
        %v3110 = vpop.permute.xlu0 %3109
        %3113 = vset.pattern.permute.xlu0 1
        %3114 = vperm.xlu0 %3113, %v2366
        %v3115 = vpop.permute.xlu0 %3114
        %3118 = vset.pattern.permute.xlu0 1
        %3119 = vperm.xlu0 %3118, %v2367
        %v3120 = vpop.permute.xlu0 %3119
        %3123 = vset.pattern.permute.xlu0 1
        %3124 = vperm.xlu0 %3123, %v2368
        %v3125 = vpop.permute.xlu0 %3124
        %3128 = vset.pattern.permute.xlu0 1
        %3129 = vperm.xlu0 %3128, %v2369
        %v3130 = vpop.permute.xlu0 %3129
        %3133 = vset.pattern.permute.xlu0 1
        %3134 = vperm.xlu0 %3133, %v2370
        %v3135 = vpop.permute.xlu0 %3134
        %3138 = vset.pattern.permute.xlu0 1
        %3139 = vperm.xlu0 %3138, %v2371
        %v3140 = vpop.permute.xlu0 %3139
        %3143 = vset.pattern.permute.xlu0 1
        %3144 = vperm.xlu0 %3143, %v2372
        %v3145 = vpop.permute.xlu0 %3144
        %3148 = vset.pattern.permute.xlu0 1
        %3149 = vperm.xlu0 %3148, %v2373
        %v3150 = vpop.permute.xlu0 %3149
        %3153 = vset.pattern.permute.xlu0 1
        %3154 = vperm.xlu0 %3153, %v2374
        %v3155 = vpop.permute.xlu0 %3154
        %3158 = vset.pattern.permute.xlu0 1
        %3159 = vperm.xlu0 %3158, %v2375
        %v3160 = vpop.permute.xlu0 %3159
        %3163 = vset.pattern.permute.xlu0 1
        %3164 = vperm.xlu0 %3163, %v2376
        %v3165 = vpop.permute.xlu0 %3164
        %3168 = vset.pattern.permute.xlu0 1
        %3169 = vperm.xlu0 %3168, %v2377
        %v3170 = vpop.permute.xlu0 %3169
        %3173 = vset.pattern.permute.xlu0 1
        %3174 = vperm.xlu0 %3173, %v2378
        %v3175 = vpop.permute.xlu0 %3174
        %3178 = vset.pattern.permute.xlu0 1
        %3179 = vperm.xlu0 %3178, %v2379
        %v3180 = vpop.permute.xlu0 %3179
        %3183 = vset.pattern.permute.xlu0 1
        %3184 = vperm.xlu0 %3183, %v2380
        %v3185 = vpop.permute.xlu0 %3184
        %3188 = vset.pattern.permute.xlu0 1
        %3189 = vperm.xlu0 %3188, %v2381
        %v3190 = vpop.permute.xlu0 %3189
        %3193 = vset.pattern.permute.xlu0 1
        %3194 = vperm.xlu0 %3193, %v2382
        %v3195 = vpop.permute.xlu0 %3194
        %3198 = vset.pattern.permute.xlu0 1
        %3199 = vperm.xlu0 %3198, %v2383
        %v3200 = vpop.permute.xlu0 %3199
        %3203 = vset.pattern.permute.xlu0 1
        %3204 = vperm.xlu0 %3203, %v2384
        %v3205 = vpop.permute.xlu0 %3204
        %3208 = vset.pattern.permute.xlu0 1
        %3209 = vperm.xlu0 %3208, %v2385
        %v3210 = vpop.permute.xlu0 %3209
        %3213 = vset.pattern.permute.xlu0 1
        %3214 = vperm.xlu0 %3213, %v2386
        %v3215 = vpop.permute.xlu0 %3214
        %3218 = vset.pattern.permute.xlu0 1
        %3219 = vperm.xlu0 %3218, %v2387
        %v3220 = vpop.permute.xlu0 %3219
        %3223 = vset.pattern.permute.xlu0 1
        %3224 = vperm.xlu0 %3223, %v2388
        %v3225 = vpop.permute.xlu0 %3224
        %3228 = vset.pattern.permute.xlu0 1
        %3229 = vperm.xlu0 %3228, %v2389
        %v3230 = vpop.permute.xlu0 %3229
        %3233 = vset.pattern.permute.xlu0 1
        %3234 = vperm.xlu0 %3233, %v2390
        %v3235 = vpop.permute.xlu0 %3234
        %3238 = vset.pattern.permute.xlu0 1
        %3239 = vperm.xlu0 %3238, %v2391
        %v3240 = vpop.permute.xlu0 %3239
        %3243 = vset.pattern.permute.xlu0 1
        %3244 = vperm.xlu0 %3243, %v2392
        %v3245 = vpop.permute.xlu0 %3244
        %3248 = vset.pattern.permute.xlu0 1
        %3249 = vperm.xlu0 %3248, %v2393
        %v3250 = vpop.permute.xlu0 %3249
        %3253 = vset.pattern.permute.xlu0 1
        %3254 = vperm.xlu0 %3253, %v2394
        %v3255 = vpop.permute.xlu0 %3254
        %3258 = vset.pattern.permute.xlu0 1
        %3259 = vperm.xlu0 %3258, %v2395
        %v3260 = vpop.permute.xlu0 %3259
        %3263 = vset.pattern.permute.xlu0 1
        %3264 = vperm.xlu0 %3263, %v2396
        %v3265 = vpop.permute.xlu0 %3264
        %3268 = vset.pattern.permute.xlu0 1
        %3269 = vperm.xlu0 %3268, %v2397
        %v3270 = vpop.permute.xlu0 %3269
        %3273 = vset.pattern.permute.xlu0 1
        %3274 = vperm.xlu0 %3273, %v2398
        %v3275 = vpop.permute.xlu0 %3274
        %3278 = vset.pattern.permute.xlu0 1
        %3279 = vperm.xlu0 %3278, %v2399
        %v3280 = vpop.permute.xlu0 %3279
        %3283 = vset.pattern.permute.xlu0 1
        %3284 = vperm.xlu0 %3283, %v2400
        %v3285 = vpop.permute.xlu0 %3284
        %3288 = vset.pattern.permute.xlu0 1
        %3289 = vperm.xlu0 %3288, %v2401
        %v3290 = vpop.permute.xlu0 %3289
        %3293 = vset.pattern.permute.xlu0 1
        %3294 = vperm.xlu0 %3293, %v2402
        %v3295 = vpop.permute.xlu0 %3294
        %3298 = vset.pattern.permute.xlu0 1
        %3299 = vperm.xlu0 %3298, %v2403
        %v3300 = vpop.permute.xlu0 %3299
        %3303 = vset.pattern.permute.xlu0 1
        %3304 = vperm.xlu0 %3303, %v2404
        %v3305 = vpop.permute.xlu0 %3304
        %3308 = vset.pattern.permute.xlu0 1
        %3309 = vperm.xlu0 %3308, %v2405
        %v3310 = vpop.permute.xlu0 %3309
        %3313 = vset.pattern.permute.xlu0 1
        %3314 = vperm.xlu0 %3313, %v2406
        %v3315 = vpop.permute.xlu0 %3314
        %3318 = vset.pattern.permute.xlu0 1
        %3319 = vperm.xlu0 %3318, %v2407
        %v3320 = vpop.permute.xlu0 %3319
        %3323 = vset.pattern.permute.xlu0 1
        %3324 = vperm.xlu0 %3323, %v2408
        %v3325 = vpop.permute.xlu0 %3324
        %3328 = vset.pattern.permute.xlu0 1
        %3329 = vperm.xlu0 %3328, %v2409
        %v3330 = vpop.permute.xlu0 %3329
        %3333 = vset.pattern.permute.xlu0 1
        %3334 = vperm.xlu0 %3333, %v2410
        %v3335 = vpop.permute.xlu0 %3334
        %3338 = vset.pattern.permute.xlu0 1
        %3339 = vperm.xlu0 %3338, %v2411
        %v3340 = vpop.permute.xlu0 %3339
        %3343 = vset.pattern.permute.xlu0 1
        %3344 = vperm.xlu0 %3343, %v2412
        %v3345 = vpop.permute.xlu0 %3344
        %3348 = vset.pattern.permute.xlu0 1
        %3349 = vperm.xlu0 %3348, %v2413
        %v3350 = vpop.permute.xlu0 %3349
        %3353 = vset.pattern.permute.xlu0 1
        %3354 = vperm.xlu0 %3353, %v2414
        %v3355 = vpop.permute.xlu0 %3354
        %3358 = vset.pattern.permute.xlu0 1
        %3359 = vperm.xlu0 %3358, %v2415
        %v3360 = vpop.permute.xlu0 %3359
        %3363 = vset.pattern.permute.xlu0 1
        %3364 = vperm.xlu0 %3363, %v2416
        %v3365 = vpop.permute.xlu0 %3364
        %3368 = vset.pattern.permute.xlu0 1
        %3369 = vperm.xlu0 %3368, %v2417
        %v3370 = vpop.permute.xlu0 %3369
        %3373 = vset.pattern.permute.xlu0 1
        %3374 = vperm.xlu0 %3373, %v2418
        %v3375 = vpop.permute.xlu0 %3374
        %3378 = vset.pattern.permute.xlu0 1
        %3379 = vperm.xlu0 %3378, %v2419
        %v3380 = vpop.permute.xlu0 %3379
        %v3382 = vsel %vm2933, %v3065, %v2935
        %v3383 = vsel %vm2933, %v3070, %v2937
        %v3384 = vsel %vm2933, %v3075, %v2939
        %v3385 = vsel %vm2933, %v3080, %v2941
        %v3386 = vsel %vm2933, %v3085, %v2943
        %v3387 = vsel %vm2933, %v3090, %v2945
        %v3388 = vsel %vm2933, %v3095, %v2947
        %v3389 = vsel %vm2933, %v3100, %v2949
        %v3390 = vsel %vm2933, %v3105, %v2951
        %v3391 = vsel %vm2933, %v3110, %v2953
        %v3392 = vsel %vm2933, %v3115, %v2955
        %v3393 = vsel %vm2933, %v3120, %v2957
        %v3394 = vsel %vm2933, %v3125, %v2959
        %v3395 = vsel %vm2933, %v3130, %v2961
        %v3396 = vsel %vm2933, %v3135, %v2963
        %v3397 = vsel %vm2933, %v3140, %v2965
        %v3398 = vsel %vm2933, %v3145, %v2967
        %v3399 = vsel %vm2933, %v3150, %v2969
        %v3400 = vsel %vm2933, %v3155, %v2971
        %v3401 = vsel %vm2933, %v3160, %v2973
        %v3402 = vsel %vm2933, %v3165, %v2975
        %v3403 = vsel %vm2933, %v3170, %v2977
        %v3404 = vsel %vm2933, %v3175, %v2979
        %v3405 = vsel %vm2933, %v3180, %v2981
        %v3406 = vsel %vm2933, %v3185, %v2983
        %v3407 = vsel %vm2933, %v3190, %v2985
        %v3408 = vsel %vm2933, %v3195, %v2987
        %v3409 = vsel %vm2933, %v3200, %v2989
        %v3410 = vsel %vm2933, %v3205, %v2991
        %v3411 = vsel %vm2933, %v3210, %v2993
        %v3412 = vsel %vm2933, %v3215, %v2995
        %v3413 = vsel %vm2933, %v3220, %v2997
        %v3414 = vsel %vm2933, %v3225, %v2999
        %v3415 = vsel %vm2933, %v3230, %v3001
        %v3416 = vsel %vm2933, %v3235, %v3003
        %v3417 = vsel %vm2933, %v3240, %v3005
        %v3418 = vsel %vm2933, %v3245, %v3007
        %v3419 = vsel %vm2933, %v3250, %v3009
        %v3420 = vsel %vm2933, %v3255, %v3011
        %v3421 = vsel %vm2933, %v3260, %v3013
        %v3422 = vsel %vm2933, %v3265, %v3015
        %v3423 = vsel %vm2933, %v3270, %v3017
        %v3424 = vsel %vm2933, %v3275, %v3019
        %v3425 = vsel %vm2933, %v3280, %v3021
        %v3426 = vsel %vm2933, %v3285, %v3023
        %v3427 = vsel %vm2933, %v3290, %v3025
        %v3428 = vsel %vm2933, %v3295, %v3027
        %v3429 = vsel %vm2933, %v3300, %v3029
        %v3430 = vsel %vm2933, %v3305, %v3031
        %v3431 = vsel %vm2933, %v3310, %v3033
        %v3432 = vsel %vm2933, %v3315, %v3035
        %v3433 = vsel %vm2933, %v3320, %v3037
        %v3434 = vsel %vm2933, %v3325, %v3039
        %v3435 = vsel %vm2933, %v3330, %v3041
        %v3436 = vsel %vm2933, %v3335, %v3043
        %v3437 = vsel %vm2933, %v3340, %v3045
        %v3438 = vsel %vm2933, %v3345, %v3047
        %v3439 = vsel %vm2933, %v3350, %v3049
        %v3440 = vsel %vm2933, %v3355, %v3051
        %v3441 = vsel %vm2933, %v3360, %v3053
        %v3442 = vsel %vm2933, %v3365, %v3055
        %v3443 = vsel %vm2933, %v3370, %v3057
        %v3444 = vsel %vm2933, %v3375, %v3059
        %v3445 = vsel %vm2933, %v3380, %v3061
        %3446 = vset.pattern.permute.xlu0 2
        %3447 = vperm.xlu0 %3446, %v614
        %v3448 = vpop.permute.xlu0 %3447
        %3450 = vset.pattern.permute.xlu0 2
        %3451 = vperm.xlu0 %3450, %v615
        %v3452 = vpop.permute.xlu0 %3451
        %3454 = vset.pattern.permute.xlu0 2
        %3455 = vperm.xlu0 %3454, %v616
        %v3456 = vpop.permute.xlu0 %3455
        %3458 = vset.pattern.permute.xlu0 2
        %3459 = vperm.xlu0 %3458, %v617
        %v3460 = vpop.permute.xlu0 %3459
        %3462 = vset.pattern.permute.xlu0 2
        %3463 = vperm.xlu0 %3462, %v618
        %v3464 = vpop.permute.xlu0 %3463
        %3466 = vset.pattern.permute.xlu0 2
        %3467 = vperm.xlu0 %3466, %v619
        %v3468 = vpop.permute.xlu0 %3467
        %3470 = vset.pattern.permute.xlu0 2
        %3471 = vperm.xlu0 %3470, %v620
        %v3472 = vpop.permute.xlu0 %3471
        %3474 = vset.pattern.permute.xlu0 2
        %3475 = vperm.xlu0 %3474, %v621
        %v3476 = vpop.permute.xlu0 %3475
        %3478 = vset.pattern.permute.xlu0 2
        %3479 = vperm.xlu0 %3478, %v622
        %v3480 = vpop.permute.xlu0 %3479
        %3482 = vset.pattern.permute.xlu0 2
        %3483 = vperm.xlu0 %3482, %v623
        %v3484 = vpop.permute.xlu0 %3483
        %3486 = vset.pattern.permute.xlu0 2
        %3487 = vperm.xlu0 %3486, %v624
        %v3488 = vpop.permute.xlu0 %3487
        %3490 = vset.pattern.permute.xlu0 2
        %3491 = vperm.xlu0 %3490, %v625
        %v3492 = vpop.permute.xlu0 %3491
        %3494 = vset.pattern.permute.xlu0 2
        %3495 = vperm.xlu0 %3494, %v626
        %v3496 = vpop.permute.xlu0 %3495
        %3498 = vset.pattern.permute.xlu0 2
        %3499 = vperm.xlu0 %3498, %v627
        %v3500 = vpop.permute.xlu0 %3499
        %3502 = vset.pattern.permute.xlu0 2
        %3503 = vperm.xlu0 %3502, %v628
        %v3504 = vpop.permute.xlu0 %3503
        %3506 = vset.pattern.permute.xlu0 2
        %3507 = vperm.xlu0 %3506, %v629
        %v3508 = vpop.permute.xlu0 %3507
        %3510 = vset.pattern.permute.xlu0 2
        %3511 = vperm.xlu0 %3510, %v630
        %v3512 = vpop.permute.xlu0 %3511
        %3514 = vset.pattern.permute.xlu0 2
        %3515 = vperm.xlu0 %3514, %v631
        %v3516 = vpop.permute.xlu0 %3515
        %3518 = vset.pattern.permute.xlu0 2
        %3519 = vperm.xlu0 %3518, %v632
        %v3520 = vpop.permute.xlu0 %3519
        %3522 = vset.pattern.permute.xlu0 2
        %3523 = vperm.xlu0 %3522, %v633
        %v3524 = vpop.permute.xlu0 %3523
        %3526 = vset.pattern.permute.xlu0 2
        %3527 = vperm.xlu0 %3526, %v634
        %v3528 = vpop.permute.xlu0 %3527
        %3530 = vset.pattern.permute.xlu0 2
        %3531 = vperm.xlu0 %3530, %v635
        %v3532 = vpop.permute.xlu0 %3531
        %3534 = vset.pattern.permute.xlu0 2
        %3535 = vperm.xlu0 %3534, %v636
        %v3536 = vpop.permute.xlu0 %3535
        %3538 = vset.pattern.permute.xlu0 2
        %3539 = vperm.xlu0 %3538, %v637
        %v3540 = vpop.permute.xlu0 %3539
        %3542 = vset.pattern.permute.xlu0 2
        %3543 = vperm.xlu0 %3542, %v638
        %v3544 = vpop.permute.xlu0 %3543
        %3546 = vset.pattern.permute.xlu0 2
        %3547 = vperm.xlu0 %3546, %v639
        %v3548 = vpop.permute.xlu0 %3547
        %3550 = vset.pattern.permute.xlu0 2
        %3551 = vperm.xlu0 %3550, %v640
        %v3552 = vpop.permute.xlu0 %3551
        %3554 = vset.pattern.permute.xlu0 2
        %3555 = vperm.xlu0 %3554, %v641
        %v3556 = vpop.permute.xlu0 %3555
        %3558 = vset.pattern.permute.xlu0 2
        %3559 = vperm.xlu0 %3558, %v642
        %v3560 = vpop.permute.xlu0 %3559
        %3562 = vset.pattern.permute.xlu0 2
        %3563 = vperm.xlu0 %3562, %v643
        %v3564 = vpop.permute.xlu0 %3563
        %3566 = vset.pattern.permute.xlu0 2
        %3567 = vperm.xlu0 %3566, %v644
        %v3568 = vpop.permute.xlu0 %3567
        %3570 = vset.pattern.permute.xlu0 2
        %3571 = vperm.xlu0 %3570, %v645
        %v3572 = vpop.permute.xlu0 %3571
        %3574 = vset.pattern.permute.xlu0 2
        %3575 = vperm.xlu0 %3574, %v646
        %v3576 = vpop.permute.xlu0 %3575
        %3578 = vset.pattern.permute.xlu0 2
        %3579 = vperm.xlu0 %3578, %v647
        %v3580 = vpop.permute.xlu0 %3579
        %3582 = vset.pattern.permute.xlu0 2
        %3583 = vperm.xlu0 %3582, %v648
        %v3584 = vpop.permute.xlu0 %3583
        %3586 = vset.pattern.permute.xlu0 2
        %3587 = vperm.xlu0 %3586, %v649
        %v3588 = vpop.permute.xlu0 %3587
        %3590 = vset.pattern.permute.xlu0 2
        %3591 = vperm.xlu0 %3590, %v650
        %v3592 = vpop.permute.xlu0 %3591
        %3594 = vset.pattern.permute.xlu0 2
        %3595 = vperm.xlu0 %3594, %v651
        %v3596 = vpop.permute.xlu0 %3595
        %3598 = vset.pattern.permute.xlu0 2
        %3599 = vperm.xlu0 %3598, %v652
        %v3600 = vpop.permute.xlu0 %3599
        %3602 = vset.pattern.permute.xlu0 2
        %3603 = vperm.xlu0 %3602, %v653
        %v3604 = vpop.permute.xlu0 %3603
        %3606 = vset.pattern.permute.xlu0 2
        %3607 = vperm.xlu0 %3606, %v654
        %v3608 = vpop.permute.xlu0 %3607
        %3610 = vset.pattern.permute.xlu0 2
        %3611 = vperm.xlu0 %3610, %v655
        %v3612 = vpop.permute.xlu0 %3611
        %3614 = vset.pattern.permute.xlu0 2
        %3615 = vperm.xlu0 %3614, %v656
        %v3616 = vpop.permute.xlu0 %3615
        %3618 = vset.pattern.permute.xlu0 2
        %3619 = vperm.xlu0 %3618, %v657
        %v3620 = vpop.permute.xlu0 %3619
        %3622 = vset.pattern.permute.xlu0 2
        %3623 = vperm.xlu0 %3622, %v658
        %v3624 = vpop.permute.xlu0 %3623
        %3626 = vset.pattern.permute.xlu0 2
        %3627 = vperm.xlu0 %3626, %v659
        %v3628 = vpop.permute.xlu0 %3627
        %3630 = vset.pattern.permute.xlu0 2
        %3631 = vperm.xlu0 %3630, %v660
        %v3632 = vpop.permute.xlu0 %3631
        %3634 = vset.pattern.permute.xlu0 2
        %3635 = vperm.xlu0 %3634, %v661
        %v3636 = vpop.permute.xlu0 %3635
        %3638 = vset.pattern.permute.xlu0 2
        %3639 = vperm.xlu0 %3638, %v662
        %v3640 = vpop.permute.xlu0 %3639
        %3642 = vset.pattern.permute.xlu0 2
        %3643 = vperm.xlu0 %3642, %v663
        %v3644 = vpop.permute.xlu0 %3643
        %3646 = vset.pattern.permute.xlu0 2
        %3647 = vperm.xlu0 %3646, %v664
        %v3648 = vpop.permute.xlu0 %3647
        %3650 = vset.pattern.permute.xlu0 2
        %3651 = vperm.xlu0 %3650, %v665
        %v3652 = vpop.permute.xlu0 %3651
        %3654 = vset.pattern.permute.xlu0 2
        %3655 = vperm.xlu0 %3654, %v666
        %v3656 = vpop.permute.xlu0 %3655
        %3658 = vset.pattern.permute.xlu0 2
        %3659 = vperm.xlu0 %3658, %v667
        %v3660 = vpop.permute.xlu0 %3659
        %3662 = vset.pattern.permute.xlu0 2
        %3663 = vperm.xlu0 %3662, %v668
        %v3664 = vpop.permute.xlu0 %3663
        %3666 = vset.pattern.permute.xlu0 2
        %3667 = vperm.xlu0 %3666, %v669
        %v3668 = vpop.permute.xlu0 %3667
        %3670 = vset.pattern.permute.xlu0 2
        %3671 = vperm.xlu0 %3670, %v670
        %v3672 = vpop.permute.xlu0 %3671
        %3674 = vset.pattern.permute.xlu0 2
        %3675 = vperm.xlu0 %3674, %v671
        %v3676 = vpop.permute.xlu0 %3675
        %3678 = vset.pattern.permute.xlu0 2
        %3679 = vperm.xlu0 %3678, %v672
        %v3680 = vpop.permute.xlu0 %3679
        %3682 = vset.pattern.permute.xlu0 2
        %3683 = vperm.xlu0 %3682, %v673
        %v3684 = vpop.permute.xlu0 %3683
        %3686 = vset.pattern.permute.xlu0 2
        %3687 = vperm.xlu0 %3686, %v674
        %v3688 = vpop.permute.xlu0 %3687
        %3690 = vset.pattern.permute.xlu0 2
        %3691 = vperm.xlu0 %3690, %v675
        %v3692 = vpop.permute.xlu0 %3691
        %3694 = vset.pattern.permute.xlu0 2
        %3695 = vperm.xlu0 %3694, %v676
        %v3696 = vpop.permute.xlu0 %3695
        %3698 = vset.pattern.permute.xlu0 2
        %3699 = vperm.xlu0 %3698, %v677
        %v3700 = vpop.permute.xlu0 %3699
        %v3702 = vmul.f32 %v3448, %v2869
        %v3703 = vmul.f32 %v3452, %v2870
        %v3704 = vmul.f32 %v3456, %v2871
        %v3705 = vmul.f32 %v3460, %v2872
        %v3706 = vmul.f32 %v3464, %v2873
        %v3707 = vmul.f32 %v3468, %v2874
        %v3708 = vmul.f32 %v3472, %v2875
        %v3709 = vmul.f32 %v3476, %v2876
        %v3710 = vmul.f32 %v3480, %v2877
        %v3711 = vmul.f32 %v3484, %v2878
        %v3712 = vmul.f32 %v3488, %v2879
        %v3713 = vmul.f32 %v3492, %v2880
        %v3714 = vmul.f32 %v3496, %v2881
        %v3715 = vmul.f32 %v3500, %v2882
        %v3716 = vmul.f32 %v3504, %v2883
        %v3717 = vmul.f32 %v3508, %v2884
        %v3718 = vmul.f32 %v3512, %v2885
        %v3719 = vmul.f32 %v3516, %v2886
        %v3720 = vmul.f32 %v3520, %v2887
        %v3721 = vmul.f32 %v3524, %v2888
        %v3722 = vmul.f32 %v3528, %v2889
        %v3723 = vmul.f32 %v3532, %v2890
        %v3724 = vmul.f32 %v3536, %v2891
        %v3725 = vmul.f32 %v3540, %v2892
        %v3726 = vmul.f32 %v3544, %v2893
        %v3727 = vmul.f32 %v3548, %v2894
        %v3728 = vmul.f32 %v3552, %v2895
        %v3729 = vmul.f32 %v3556, %v2896
        %v3730 = vmul.f32 %v3560, %v2897
        %v3731 = vmul.f32 %v3564, %v2898
        %v3732 = vmul.f32 %v3568, %v2899
        %v3733 = vmul.f32 %v3572, %v2900
        %v3734 = vmul.f32 %v3576, %v2901
        %v3735 = vmul.f32 %v3580, %v2902
        %v3736 = vmul.f32 %v3584, %v2903
        %v3737 = vmul.f32 %v3588, %v2904
        %v3738 = vmul.f32 %v3592, %v2905
        %v3739 = vmul.f32 %v3596, %v2906
        %v3740 = vmul.f32 %v3600, %v2907
        %v3741 = vmul.f32 %v3604, %v2908
        %v3742 = vmul.f32 %v3608, %v2909
        %v3743 = vmul.f32 %v3612, %v2910
        %v3744 = vmul.f32 %v3616, %v2911
        %v3745 = vmul.f32 %v3620, %v2912
        %v3746 = vmul.f32 %v3624, %v2913
        %v3747 = vmul.f32 %v3628, %v2914
        %v3748 = vmul.f32 %v3632, %v2915
        %v3749 = vmul.f32 %v3636, %v2916
        %v3750 = vmul.f32 %v3640, %v2917
        %v3751 = vmul.f32 %v3644, %v2918
        %v3752 = vmul.f32 %v3648, %v2919
        %v3753 = vmul.f32 %v3652, %v2920
        %v3754 = vmul.f32 %v3656, %v2921
        %v3755 = vmul.f32 %v3660, %v2922
        %v3756 = vmul.f32 %v3664, %v2923
        %v3757 = vmul.f32 %v3668, %v2924
        %v3758 = vmul.f32 %v3672, %v2925
        %v3759 = vmul.f32 %v3676, %v2926
        %v3760 = vmul.f32 %v3680, %v2927
        %v3761 = vmul.f32 %v3684, %v2928
        %v3762 = vmul.f32 %v3688, %v2929
        %v3763 = vmul.f32 %v3692, %v2930
        %v3764 = vmul.f32 %v3696, %v2931
        %v3765 = vmul.f32 %v3700, %v2932
        %3766 = vset.pattern.permute.xlu0 3
        %3767 = vperm.xlu0 %3766, %v614
        %v3768 = vpop.permute.xlu0 %3767
        %3770 = vset.pattern.permute.xlu0 3
        %3771 = vperm.xlu0 %3770, %v615
        %v3772 = vpop.permute.xlu0 %3771
        %3774 = vset.pattern.permute.xlu0 3
        %3775 = vperm.xlu0 %3774, %v616
        %v3776 = vpop.permute.xlu0 %3775
        %3778 = vset.pattern.permute.xlu0 3
        %3779 = vperm.xlu0 %3778, %v617
        %v3780 = vpop.permute.xlu0 %3779
        %3782 = vset.pattern.permute.xlu0 3
        %3783 = vperm.xlu0 %3782, %v618
        %v3784 = vpop.permute.xlu0 %3783
        %3786 = vset.pattern.permute.xlu0 3
        %3787 = vperm.xlu0 %3786, %v619
        %v3788 = vpop.permute.xlu0 %3787
        %3790 = vset.pattern.permute.xlu0 3
        %3791 = vperm.xlu0 %3790, %v620
        %v3792 = vpop.permute.xlu0 %3791
        %3794 = vset.pattern.permute.xlu0 3
        %3795 = vperm.xlu0 %3794, %v621
        %v3796 = vpop.permute.xlu0 %3795
        %3798 = vset.pattern.permute.xlu0 3
        %3799 = vperm.xlu0 %3798, %v622
        %v3800 = vpop.permute.xlu0 %3799
        %3802 = vset.pattern.permute.xlu0 3
        %3803 = vperm.xlu0 %3802, %v623
        %v3804 = vpop.permute.xlu0 %3803
        %3806 = vset.pattern.permute.xlu0 3
        %3807 = vperm.xlu0 %3806, %v624
        %v3808 = vpop.permute.xlu0 %3807
        %3810 = vset.pattern.permute.xlu0 3
        %3811 = vperm.xlu0 %3810, %v625
        %v3812 = vpop.permute.xlu0 %3811
        %3814 = vset.pattern.permute.xlu0 3
        %3815 = vperm.xlu0 %3814, %v626
        %v3816 = vpop.permute.xlu0 %3815
        %3818 = vset.pattern.permute.xlu0 3
        %3819 = vperm.xlu0 %3818, %v627
        %v3820 = vpop.permute.xlu0 %3819
        %3822 = vset.pattern.permute.xlu0 3
        %3823 = vperm.xlu0 %3822, %v628
        %v3824 = vpop.permute.xlu0 %3823
        %3826 = vset.pattern.permute.xlu0 3
        %3827 = vperm.xlu0 %3826, %v629
        %v3828 = vpop.permute.xlu0 %3827
        %3830 = vset.pattern.permute.xlu0 3
        %3831 = vperm.xlu0 %3830, %v630
        %v3832 = vpop.permute.xlu0 %3831
        %3834 = vset.pattern.permute.xlu0 3
        %3835 = vperm.xlu0 %3834, %v631
        %v3836 = vpop.permute.xlu0 %3835
        %3838 = vset.pattern.permute.xlu0 3
        %3839 = vperm.xlu0 %3838, %v632
        %v3840 = vpop.permute.xlu0 %3839
        %3842 = vset.pattern.permute.xlu0 3
        %3843 = vperm.xlu0 %3842, %v633
        %v3844 = vpop.permute.xlu0 %3843
        %3846 = vset.pattern.permute.xlu0 3
        %3847 = vperm.xlu0 %3846, %v634
        %v3848 = vpop.permute.xlu0 %3847
        %3850 = vset.pattern.permute.xlu0 3
        %3851 = vperm.xlu0 %3850, %v635
        %v3852 = vpop.permute.xlu0 %3851
        %3854 = vset.pattern.permute.xlu0 3
        %3855 = vperm.xlu0 %3854, %v636
        %v3856 = vpop.permute.xlu0 %3855
        %3858 = vset.pattern.permute.xlu0 3
        %3859 = vperm.xlu0 %3858, %v637
        %v3860 = vpop.permute.xlu0 %3859
        %3862 = vset.pattern.permute.xlu0 3
        %3863 = vperm.xlu0 %3862, %v638
        %v3864 = vpop.permute.xlu0 %3863
        %3866 = vset.pattern.permute.xlu0 3
        %3867 = vperm.xlu0 %3866, %v639
        %v3868 = vpop.permute.xlu0 %3867
        %3870 = vset.pattern.permute.xlu0 3
        %3871 = vperm.xlu0 %3870, %v640
        %v3872 = vpop.permute.xlu0 %3871
        %3874 = vset.pattern.permute.xlu0 3
        %3875 = vperm.xlu0 %3874, %v641
        %v3876 = vpop.permute.xlu0 %3875
        %3878 = vset.pattern.permute.xlu0 3
        %3879 = vperm.xlu0 %3878, %v642
        %v3880 = vpop.permute.xlu0 %3879
        %3882 = vset.pattern.permute.xlu0 3
        %3883 = vperm.xlu0 %3882, %v643
        %v3884 = vpop.permute.xlu0 %3883
        %3886 = vset.pattern.permute.xlu0 3
        %3887 = vperm.xlu0 %3886, %v644
        %v3888 = vpop.permute.xlu0 %3887
        %3890 = vset.pattern.permute.xlu0 3
        %3891 = vperm.xlu0 %3890, %v645
        %v3892 = vpop.permute.xlu0 %3891
        %3894 = vset.pattern.permute.xlu0 3
        %3895 = vperm.xlu0 %3894, %v646
        %v3896 = vpop.permute.xlu0 %3895
        %3898 = vset.pattern.permute.xlu0 3
        %3899 = vperm.xlu0 %3898, %v647
        %v3900 = vpop.permute.xlu0 %3899
        %3902 = vset.pattern.permute.xlu0 3
        %3903 = vperm.xlu0 %3902, %v648
        %v3904 = vpop.permute.xlu0 %3903
        %3906 = vset.pattern.permute.xlu0 3
        %3907 = vperm.xlu0 %3906, %v649
        %v3908 = vpop.permute.xlu0 %3907
        %3910 = vset.pattern.permute.xlu0 3
        %3911 = vperm.xlu0 %3910, %v650
        %v3912 = vpop.permute.xlu0 %3911
        %3914 = vset.pattern.permute.xlu0 3
        %3915 = vperm.xlu0 %3914, %v651
        %v3916 = vpop.permute.xlu0 %3915
        %3918 = vset.pattern.permute.xlu0 3
        %3919 = vperm.xlu0 %3918, %v652
        %v3920 = vpop.permute.xlu0 %3919
        %3922 = vset.pattern.permute.xlu0 3
        %3923 = vperm.xlu0 %3922, %v653
        %v3924 = vpop.permute.xlu0 %3923
        %3926 = vset.pattern.permute.xlu0 3
        %3927 = vperm.xlu0 %3926, %v654
        %v3928 = vpop.permute.xlu0 %3927
        %3930 = vset.pattern.permute.xlu0 3
        %3931 = vperm.xlu0 %3930, %v655
        %v3932 = vpop.permute.xlu0 %3931
        %3934 = vset.pattern.permute.xlu0 3
        %3935 = vperm.xlu0 %3934, %v656
        %v3936 = vpop.permute.xlu0 %3935
        %3938 = vset.pattern.permute.xlu0 3
        %3939 = vperm.xlu0 %3938, %v657
        %v3940 = vpop.permute.xlu0 %3939
        %3942 = vset.pattern.permute.xlu0 3
        %3943 = vperm.xlu0 %3942, %v658
        %v3944 = vpop.permute.xlu0 %3943
        %3946 = vset.pattern.permute.xlu0 3
        %3947 = vperm.xlu0 %3946, %v659
        %v3948 = vpop.permute.xlu0 %3947
        %3950 = vset.pattern.permute.xlu0 3
        %3951 = vperm.xlu0 %3950, %v660
        %v3952 = vpop.permute.xlu0 %3951
        %3954 = vset.pattern.permute.xlu0 3
        %3955 = vperm.xlu0 %3954, %v661
        %v3956 = vpop.permute.xlu0 %3955
        %3958 = vset.pattern.permute.xlu0 3
        %3959 = vperm.xlu0 %3958, %v662
        %v3960 = vpop.permute.xlu0 %3959
        %3962 = vset.pattern.permute.xlu0 3
        %3963 = vperm.xlu0 %3962, %v663
        %v3964 = vpop.permute.xlu0 %3963
        %3966 = vset.pattern.permute.xlu0 3
        %3967 = vperm.xlu0 %3966, %v664
        %v3968 = vpop.permute.xlu0 %3967
        %3970 = vset.pattern.permute.xlu0 3
        %3971 = vperm.xlu0 %3970, %v665
        %v3972 = vpop.permute.xlu0 %3971
        %3974 = vset.pattern.permute.xlu0 3
        %3975 = vperm.xlu0 %3974, %v666
        %v3976 = vpop.permute.xlu0 %3975
        %3978 = vset.pattern.permute.xlu0 3
        %3979 = vperm.xlu0 %3978, %v667
        %v3980 = vpop.permute.xlu0 %3979
        %3982 = vset.pattern.permute.xlu0 3
        %3983 = vperm.xlu0 %3982, %v668
        %v3984 = vpop.permute.xlu0 %3983
        %3986 = vset.pattern.permute.xlu0 3
        %3987 = vperm.xlu0 %3986, %v669
        %v3988 = vpop.permute.xlu0 %3987
        %3990 = vset.pattern.permute.xlu0 3
        %3991 = vperm.xlu0 %3990, %v670
        %v3992 = vpop.permute.xlu0 %3991
        %3994 = vset.pattern.permute.xlu0 3
        %3995 = vperm.xlu0 %3994, %v671
        %v3996 = vpop.permute.xlu0 %3995
        %3998 = vset.pattern.permute.xlu0 3
        %3999 = vperm.xlu0 %3998, %v672
        %v4000 = vpop.permute.xlu0 %3999
        %4002 = vset.pattern.permute.xlu0 3
        %4003 = vperm.xlu0 %4002, %v673
        %v4004 = vpop.permute.xlu0 %4003
        %4006 = vset.pattern.permute.xlu0 3
        %4007 = vperm.xlu0 %4006, %v674
        %v4008 = vpop.permute.xlu0 %4007
        %4010 = vset.pattern.permute.xlu0 3
        %4011 = vperm.xlu0 %4010, %v675
        %v4012 = vpop.permute.xlu0 %4011
        %4014 = vset.pattern.permute.xlu0 3
        %4015 = vperm.xlu0 %4014, %v676
        %v4016 = vpop.permute.xlu0 %4015
        %4018 = vset.pattern.permute.xlu0 3
        %4019 = vperm.xlu0 %4018, %v677
        %v4020 = vpop.permute.xlu0 %4019
        %v4022 = vmul.f32 %v3768, %v1452
        %v4023 = vmul.f32 %v3772, %v1453
        %v4024 = vmul.f32 %v3776, %v1454
        %v4025 = vmul.f32 %v3780, %v1455
        %v4026 = vmul.f32 %v3784, %v1456
        %v4027 = vmul.f32 %v3788, %v1457
        %v4028 = vmul.f32 %v3792, %v1458
        %v4029 = vmul.f32 %v3796, %v1459
        %v4030 = vmul.f32 %v3800, %v1460
        %v4031 = vmul.f32 %v3804, %v1461
        %v4032 = vmul.f32 %v3808, %v1462
        %v4033 = vmul.f32 %v3812, %v1463
        %v4034 = vmul.f32 %v3816, %v1464
        %v4035 = vmul.f32 %v3820, %v1465
        %v4036 = vmul.f32 %v3824, %v1466
        %v4037 = vmul.f32 %v3828, %v1467
        %v4038 = vmul.f32 %v3832, %v1468
        %v4039 = vmul.f32 %v3836, %v1469
        %v4040 = vmul.f32 %v3840, %v1470
        %v4041 = vmul.f32 %v3844, %v1471
        %v4042 = vmul.f32 %v3848, %v1472
        %v4043 = vmul.f32 %v3852, %v1473
        %v4044 = vmul.f32 %v3856, %v1474
        %v4045 = vmul.f32 %v3860, %v1475
        %v4046 = vmul.f32 %v3864, %v1476
        %v4047 = vmul.f32 %v3868, %v1477
        %v4048 = vmul.f32 %v3872, %v1478
        %v4049 = vmul.f32 %v3876, %v1479
        %v4050 = vmul.f32 %v3880, %v1480
        %v4051 = vmul.f32 %v3884, %v1481
        %v4052 = vmul.f32 %v3888, %v1482
        %v4053 = vmul.f32 %v3892, %v1483
        %v4054 = vmul.f32 %v3896, %v1484
        %v4055 = vmul.f32 %v3900, %v1485
        %v4056 = vmul.f32 %v3904, %v1486
        %v4057 = vmul.f32 %v3908, %v1487
        %v4058 = vmul.f32 %v3912, %v1488
        %v4059 = vmul.f32 %v3916, %v1489
        %v4060 = vmul.f32 %v3920, %v1490
        %v4061 = vmul.f32 %v3924, %v1491
        %v4062 = vmul.f32 %v3928, %v1492
        %v4063 = vmul.f32 %v3932, %v1493
        %v4064 = vmul.f32 %v3936, %v1494
        %v4065 = vmul.f32 %v3940, %v1495
        %v4066 = vmul.f32 %v3944, %v1496
        %v4067 = vmul.f32 %v3948, %v1497
        %v4068 = vmul.f32 %v3952, %v1498
        %v4069 = vmul.f32 %v3956, %v1499
        %v4070 = vmul.f32 %v3960, %v1500
        %v4071 = vmul.f32 %v3964, %v1501
        %v4072 = vmul.f32 %v3968, %v1502
        %v4073 = vmul.f32 %v3972, %v1503
        %v4074 = vmul.f32 %v3976, %v1504
        %v4075 = vmul.f32 %v3980, %v1505
        %v4076 = vmul.f32 %v3984, %v1506
        %v4077 = vmul.f32 %v3988, %v1507
        %v4078 = vmul.f32 %v3992, %v1508
        %v4079 = vmul.f32 %v3996, %v1509
        %v4080 = vmul.f32 %v4000, %v1510
        %v4081 = vmul.f32 %v4004, %v1511
        %v4082 = vmul.f32 %v4008, %v1512
        %v4083 = vmul.f32 %v4012, %v1513
        %v4084 = vmul.f32 %v4016, %v1514
        %v4085 = vmul.f32 %v4020, %v1515
        %v4086 = vadd.f32 %v3702, %v4022
        %v4087 = vadd.f32 %v3703, %v4023
        %v4088 = vadd.f32 %v3704, %v4024
        %v4089 = vadd.f32 %v3705, %v4025
        %v4090 = vadd.f32 %v3706, %v4026
        %v4091 = vadd.f32 %v3707, %v4027
        %v4092 = vadd.f32 %v3708, %v4028
        %v4093 = vadd.f32 %v3709, %v4029
        %v4094 = vadd.f32 %v3710, %v4030
        %v4095 = vadd.f32 %v3711, %v4031
        %v4096 = vadd.f32 %v3712, %v4032
        %v4097 = vadd.f32 %v3713, %v4033
        %v4098 = vadd.f32 %v3714, %v4034
        %v4099 = vadd.f32 %v3715, %v4035
        %v4100 = vadd.f32 %v3716, %v4036
        %v4101 = vadd.f32 %v3717, %v4037
        %v4102 = vadd.f32 %v3718, %v4038
        %v4103 = vadd.f32 %v3719, %v4039
        %v4104 = vadd.f32 %v3720, %v4040
        %v4105 = vadd.f32 %v3721, %v4041
        %v4106 = vadd.f32 %v3722, %v4042
        %v4107 = vadd.f32 %v3723, %v4043
        %v4108 = vadd.f32 %v3724, %v4044
        %v4109 = vadd.f32 %v3725, %v4045
        %v4110 = vadd.f32 %v3726, %v4046
        %v4111 = vadd.f32 %v3727, %v4047
        %v4112 = vadd.f32 %v3728, %v4048
        %v4113 = vadd.f32 %v3729, %v4049
        %v4114 = vadd.f32 %v3730, %v4050
        %v4115 = vadd.f32 %v3731, %v4051
        %v4116 = vadd.f32 %v3732, %v4052
        %v4117 = vadd.f32 %v3733, %v4053
        %v4118 = vadd.f32 %v3734, %v4054
        %v4119 = vadd.f32 %v3735, %v4055
        %v4120 = vadd.f32 %v3736, %v4056
        %v4121 = vadd.f32 %v3737, %v4057
        %v4122 = vadd.f32 %v3738, %v4058
        %v4123 = vadd.f32 %v3739, %v4059
        %v4124 = vadd.f32 %v3740, %v4060
        %v4125 = vadd.f32 %v3741, %v4061
        %v4126 = vadd.f32 %v3742, %v4062
        %v4127 = vadd.f32 %v3743, %v4063
        %v4128 = vadd.f32 %v3744, %v4064
        %v4129 = vadd.f32 %v3745, %v4065
        %v4130 = vadd.f32 %v3746, %v4066
        %v4131 = vadd.f32 %v3747, %v4067
        %v4132 = vadd.f32 %v3748, %v4068
        %v4133 = vadd.f32 %v3749, %v4069
        %v4134 = vadd.f32 %v3750, %v4070
        %v4135 = vadd.f32 %v3751, %v4071
        %v4136 = vadd.f32 %v3752, %v4072
        %v4137 = vadd.f32 %v3753, %v4073
        %v4138 = vadd.f32 %v3754, %v4074
        %v4139 = vadd.f32 %v3755, %v4075
        %v4140 = vadd.f32 %v3756, %v4076
        %v4141 = vadd.f32 %v3757, %v4077
        %v4142 = vadd.f32 %v3758, %v4078
        %v4143 = vadd.f32 %v3759, %v4079
        %v4144 = vadd.f32 %v3760, %v4080
        %v4145 = vadd.f32 %v3761, %v4081
        %v4146 = vadd.f32 %v3762, %v4082
        %v4147 = vadd.f32 %v3763, %v4083
        %v4148 = vadd.f32 %v3764, %v4084
        %v4149 = vadd.f32 %v3765, %v4085
        %4150 = vset.pattern.permute.xlu0 4
        %4151 = vperm.xlu0 %4150, %v614
        %v4152 = vpop.permute.xlu0 %4151
        %4154 = vset.pattern.permute.xlu0 4
        %4155 = vperm.xlu0 %4154, %v615
        %v4156 = vpop.permute.xlu0 %4155
        %4158 = vset.pattern.permute.xlu0 4
        %4159 = vperm.xlu0 %4158, %v616
        %v4160 = vpop.permute.xlu0 %4159
        %4162 = vset.pattern.permute.xlu0 4
        %4163 = vperm.xlu0 %4162, %v617
        %v4164 = vpop.permute.xlu0 %4163
        %4166 = vset.pattern.permute.xlu0 4
        %4167 = vperm.xlu0 %4166, %v618
        %v4168 = vpop.permute.xlu0 %4167
        %4170 = vset.pattern.permute.xlu0 4
        %4171 = vperm.xlu0 %4170, %v619
        %v4172 = vpop.permute.xlu0 %4171
        %4174 = vset.pattern.permute.xlu0 4
        %4175 = vperm.xlu0 %4174, %v620
        %v4176 = vpop.permute.xlu0 %4175
        %4178 = vset.pattern.permute.xlu0 4
        %4179 = vperm.xlu0 %4178, %v621
        %v4180 = vpop.permute.xlu0 %4179
        %4182 = vset.pattern.permute.xlu0 4
        %4183 = vperm.xlu0 %4182, %v622
        %v4184 = vpop.permute.xlu0 %4183
        %4186 = vset.pattern.permute.xlu0 4
        %4187 = vperm.xlu0 %4186, %v623
        %v4188 = vpop.permute.xlu0 %4187
        %4190 = vset.pattern.permute.xlu0 4
        %4191 = vperm.xlu0 %4190, %v624
        %v4192 = vpop.permute.xlu0 %4191
        %4194 = vset.pattern.permute.xlu0 4
        %4195 = vperm.xlu0 %4194, %v625
        %v4196 = vpop.permute.xlu0 %4195
        %4198 = vset.pattern.permute.xlu0 4
        %4199 = vperm.xlu0 %4198, %v626
        %v4200 = vpop.permute.xlu0 %4199
        %4202 = vset.pattern.permute.xlu0 4
        %4203 = vperm.xlu0 %4202, %v627
        %v4204 = vpop.permute.xlu0 %4203
        %4206 = vset.pattern.permute.xlu0 4
        %4207 = vperm.xlu0 %4206, %v628
        %v4208 = vpop.permute.xlu0 %4207
        %4210 = vset.pattern.permute.xlu0 4
        %4211 = vperm.xlu0 %4210, %v629
        %v4212 = vpop.permute.xlu0 %4211
        %4214 = vset.pattern.permute.xlu0 4
        %4215 = vperm.xlu0 %4214, %v630
        %v4216 = vpop.permute.xlu0 %4215
        %4218 = vset.pattern.permute.xlu0 4
        %4219 = vperm.xlu0 %4218, %v631
        %v4220 = vpop.permute.xlu0 %4219
        %4222 = vset.pattern.permute.xlu0 4
        %4223 = vperm.xlu0 %4222, %v632
        %v4224 = vpop.permute.xlu0 %4223
        %4226 = vset.pattern.permute.xlu0 4
        %4227 = vperm.xlu0 %4226, %v633
        %v4228 = vpop.permute.xlu0 %4227
        %4230 = vset.pattern.permute.xlu0 4
        %4231 = vperm.xlu0 %4230, %v634
        %v4232 = vpop.permute.xlu0 %4231
        %4234 = vset.pattern.permute.xlu0 4
        %4235 = vperm.xlu0 %4234, %v635
        %v4236 = vpop.permute.xlu0 %4235
        %4238 = vset.pattern.permute.xlu0 4
        %4239 = vperm.xlu0 %4238, %v636
        %v4240 = vpop.permute.xlu0 %4239
        %4242 = vset.pattern.permute.xlu0 4
        %4243 = vperm.xlu0 %4242, %v637
        %v4244 = vpop.permute.xlu0 %4243
        %4246 = vset.pattern.permute.xlu0 4
        %4247 = vperm.xlu0 %4246, %v638
        %v4248 = vpop.permute.xlu0 %4247
        %4250 = vset.pattern.permute.xlu0 4
        %4251 = vperm.xlu0 %4250, %v639
        %v4252 = vpop.permute.xlu0 %4251
        %4254 = vset.pattern.permute.xlu0 4
        %4255 = vperm.xlu0 %4254, %v640
        %v4256 = vpop.permute.xlu0 %4255
        %4258 = vset.pattern.permute.xlu0 4
        %4259 = vperm.xlu0 %4258, %v641
        %v4260 = vpop.permute.xlu0 %4259
        %4262 = vset.pattern.permute.xlu0 4
        %4263 = vperm.xlu0 %4262, %v642
        %v4264 = vpop.permute.xlu0 %4263
        %4266 = vset.pattern.permute.xlu0 4
        %4267 = vperm.xlu0 %4266, %v643
        %v4268 = vpop.permute.xlu0 %4267
        %4270 = vset.pattern.permute.xlu0 4
        %4271 = vperm.xlu0 %4270, %v644
        %v4272 = vpop.permute.xlu0 %4271
        %4274 = vset.pattern.permute.xlu0 4
        %4275 = vperm.xlu0 %4274, %v645
        %v4276 = vpop.permute.xlu0 %4275
        %4278 = vset.pattern.permute.xlu0 4
        %4279 = vperm.xlu0 %4278, %v646
        %v4280 = vpop.permute.xlu0 %4279
        %4282 = vset.pattern.permute.xlu0 4
        %4283 = vperm.xlu0 %4282, %v647
        %v4284 = vpop.permute.xlu0 %4283
        %4286 = vset.pattern.permute.xlu0 4
        %4287 = vperm.xlu0 %4286, %v648
        %v4288 = vpop.permute.xlu0 %4287
        %4290 = vset.pattern.permute.xlu0 4
        %4291 = vperm.xlu0 %4290, %v649
        %v4292 = vpop.permute.xlu0 %4291
        %4294 = vset.pattern.permute.xlu0 4
        %4295 = vperm.xlu0 %4294, %v650
        %v4296 = vpop.permute.xlu0 %4295
        %4298 = vset.pattern.permute.xlu0 4
        %4299 = vperm.xlu0 %4298, %v651
        %v4300 = vpop.permute.xlu0 %4299
        %4302 = vset.pattern.permute.xlu0 4
        %4303 = vperm.xlu0 %4302, %v652
        %v4304 = vpop.permute.xlu0 %4303
        %4306 = vset.pattern.permute.xlu0 4
        %4307 = vperm.xlu0 %4306, %v653
        %v4308 = vpop.permute.xlu0 %4307
        %4310 = vset.pattern.permute.xlu0 4
        %4311 = vperm.xlu0 %4310, %v654
        %v4312 = vpop.permute.xlu0 %4311
        %4314 = vset.pattern.permute.xlu0 4
        %4315 = vperm.xlu0 %4314, %v655
        %v4316 = vpop.permute.xlu0 %4315
        %4318 = vset.pattern.permute.xlu0 4
        %4319 = vperm.xlu0 %4318, %v656
        %v4320 = vpop.permute.xlu0 %4319
        %4322 = vset.pattern.permute.xlu0 4
        %4323 = vperm.xlu0 %4322, %v657
        %v4324 = vpop.permute.xlu0 %4323
        %4326 = vset.pattern.permute.xlu0 4
        %4327 = vperm.xlu0 %4326, %v658
        %v4328 = vpop.permute.xlu0 %4327
        %4330 = vset.pattern.permute.xlu0 4
        %4331 = vperm.xlu0 %4330, %v659
        %v4332 = vpop.permute.xlu0 %4331
        %4334 = vset.pattern.permute.xlu0 4
        %4335 = vperm.xlu0 %4334, %v660
        %v4336 = vpop.permute.xlu0 %4335
        %4338 = vset.pattern.permute.xlu0 4
        %4339 = vperm.xlu0 %4338, %v661
        %v4340 = vpop.permute.xlu0 %4339
        %4342 = vset.pattern.permute.xlu0 4
        %4343 = vperm.xlu0 %4342, %v662
        %v4344 = vpop.permute.xlu0 %4343
        %4346 = vset.pattern.permute.xlu0 4
        %4347 = vperm.xlu0 %4346, %v663
        %v4348 = vpop.permute.xlu0 %4347
        %4350 = vset.pattern.permute.xlu0 4
        %4351 = vperm.xlu0 %4350, %v664
        %v4352 = vpop.permute.xlu0 %4351
        %4354 = vset.pattern.permute.xlu0 4
        %4355 = vperm.xlu0 %4354, %v665
        %v4356 = vpop.permute.xlu0 %4355
        %4358 = vset.pattern.permute.xlu0 4
        %4359 = vperm.xlu0 %4358, %v666
        %v4360 = vpop.permute.xlu0 %4359
        %4362 = vset.pattern.permute.xlu0 4
        %4363 = vperm.xlu0 %4362, %v667
        %v4364 = vpop.permute.xlu0 %4363
        %4366 = vset.pattern.permute.xlu0 4
        %4367 = vperm.xlu0 %4366, %v668
        %v4368 = vpop.permute.xlu0 %4367
        %4370 = vset.pattern.permute.xlu0 4
        %4371 = vperm.xlu0 %4370, %v669
        %v4372 = vpop.permute.xlu0 %4371
        %4374 = vset.pattern.permute.xlu0 4
        %4375 = vperm.xlu0 %4374, %v670
        %v4376 = vpop.permute.xlu0 %4375
        %4378 = vset.pattern.permute.xlu0 4
        %4379 = vperm.xlu0 %4378, %v671
        %v4380 = vpop.permute.xlu0 %4379
        %4382 = vset.pattern.permute.xlu0 4
        %4383 = vperm.xlu0 %4382, %v672
        %v4384 = vpop.permute.xlu0 %4383
        %4386 = vset.pattern.permute.xlu0 4
        %4387 = vperm.xlu0 %4386, %v673
        %v4388 = vpop.permute.xlu0 %4387
        %4390 = vset.pattern.permute.xlu0 4
        %4391 = vperm.xlu0 %4390, %v674
        %v4392 = vpop.permute.xlu0 %4391
        %4394 = vset.pattern.permute.xlu0 4
        %4395 = vperm.xlu0 %4394, %v675
        %v4396 = vpop.permute.xlu0 %4395
        %4398 = vset.pattern.permute.xlu0 4
        %4399 = vperm.xlu0 %4398, %v676
        %v4400 = vpop.permute.xlu0 %4399
        %4402 = vset.pattern.permute.xlu0 4
        %4403 = vperm.xlu0 %4402, %v677
        %v4404 = vpop.permute.xlu0 %4403
        %v4406 = vmul.f32 %v4152, %v3382
        %v4407 = vmul.f32 %v4156, %v3383
        %v4408 = vmul.f32 %v4160, %v3384
        %v4409 = vmul.f32 %v4164, %v3385
        %v4410 = vmul.f32 %v4168, %v3386
        %v4411 = vmul.f32 %v4172, %v3387
        %v4412 = vmul.f32 %v4176, %v3388
        %v4413 = vmul.f32 %v4180, %v3389
        %v4414 = vmul.f32 %v4184, %v3390
        %v4415 = vmul.f32 %v4188, %v3391
        %v4416 = vmul.f32 %v4192, %v3392
        %v4417 = vmul.f32 %v4196, %v3393
        %v4418 = vmul.f32 %v4200, %v3394
        %v4419 = vmul.f32 %v4204, %v3395
        %v4420 = vmul.f32 %v4208, %v3396
        %v4421 = vmul.f32 %v4212, %v3397
        %v4422 = vmul.f32 %v4216, %v3398
        %v4423 = vmul.f32 %v4220, %v3399
        %v4424 = vmul.f32 %v4224, %v3400
        %v4425 = vmul.f32 %v4228, %v3401
        %v4426 = vmul.f32 %v4232, %v3402
        %v4427 = vmul.f32 %v4236, %v3403
        %v4428 = vmul.f32 %v4240, %v3404
        %v4429 = vmul.f32 %v4244, %v3405
        %v4430 = vmul.f32 %v4248, %v3406
        %v4431 = vmul.f32 %v4252, %v3407
        %v4432 = vmul.f32 %v4256, %v3408
        %v4433 = vmul.f32 %v4260, %v3409
        %v4434 = vmul.f32 %v4264, %v3410
        %v4435 = vmul.f32 %v4268, %v3411
        %v4436 = vmul.f32 %v4272, %v3412
        %v4437 = vmul.f32 %v4276, %v3413
        %v4438 = vmul.f32 %v4280, %v3414
        %v4439 = vmul.f32 %v4284, %v3415
        %v4440 = vmul.f32 %v4288, %v3416
        %v4441 = vmul.f32 %v4292, %v3417
        %v4442 = vmul.f32 %v4296, %v3418
        %v4443 = vmul.f32 %v4300, %v3419
        %v4444 = vmul.f32 %v4304, %v3420
        %v4445 = vmul.f32 %v4308, %v3421
        %v4446 = vmul.f32 %v4312, %v3422
        %v4447 = vmul.f32 %v4316, %v3423
        %v4448 = vmul.f32 %v4320, %v3424
        %v4449 = vmul.f32 %v4324, %v3425
        %v4450 = vmul.f32 %v4328, %v3426
        %v4451 = vmul.f32 %v4332, %v3427
        %v4452 = vmul.f32 %v4336, %v3428
        %v4453 = vmul.f32 %v4340, %v3429
        %v4454 = vmul.f32 %v4344, %v3430
        %v4455 = vmul.f32 %v4348, %v3431
        %v4456 = vmul.f32 %v4352, %v3432
        %v4457 = vmul.f32 %v4356, %v3433
        %v4458 = vmul.f32 %v4360, %v3434
        %v4459 = vmul.f32 %v4364, %v3435
        %v4460 = vmul.f32 %v4368, %v3436
        %v4461 = vmul.f32 %v4372, %v3437
        %v4462 = vmul.f32 %v4376, %v3438
        %v4463 = vmul.f32 %v4380, %v3439
        %v4464 = vmul.f32 %v4384, %v3440
        %v4465 = vmul.f32 %v4388, %v3441
        %v4466 = vmul.f32 %v4392, %v3442
        %v4467 = vmul.f32 %v4396, %v3443
        %v4468 = vmul.f32 %v4400, %v3444
        %v4469 = vmul.f32 %v4404, %v3445
        %v4470 = vadd.f32 %v4086, %v4406
        %v4471 = vadd.f32 %v4087, %v4407
        %v4472 = vadd.f32 %v4088, %v4408
        %v4473 = vadd.f32 %v4089, %v4409
        %v4474 = vadd.f32 %v4090, %v4410
        %v4475 = vadd.f32 %v4091, %v4411
        %v4476 = vadd.f32 %v4092, %v4412
        %v4477 = vadd.f32 %v4093, %v4413
        %v4478 = vadd.f32 %v4094, %v4414
        %v4479 = vadd.f32 %v4095, %v4415
        %v4480 = vadd.f32 %v4096, %v4416
        %v4481 = vadd.f32 %v4097, %v4417
        %v4482 = vadd.f32 %v4098, %v4418
        %v4483 = vadd.f32 %v4099, %v4419
        %v4484 = vadd.f32 %v4100, %v4420
        %v4485 = vadd.f32 %v4101, %v4421
        %v4486 = vadd.f32 %v4102, %v4422
        %v4487 = vadd.f32 %v4103, %v4423
        %v4488 = vadd.f32 %v4104, %v4424
        %v4489 = vadd.f32 %v4105, %v4425
        %v4490 = vadd.f32 %v4106, %v4426
        %v4491 = vadd.f32 %v4107, %v4427
        %v4492 = vadd.f32 %v4108, %v4428
        %v4493 = vadd.f32 %v4109, %v4429
        %v4494 = vadd.f32 %v4110, %v4430
        %v4495 = vadd.f32 %v4111, %v4431
        %v4496 = vadd.f32 %v4112, %v4432
        %v4497 = vadd.f32 %v4113, %v4433
        %v4498 = vadd.f32 %v4114, %v4434
        %v4499 = vadd.f32 %v4115, %v4435
        %v4500 = vadd.f32 %v4116, %v4436
        %v4501 = vadd.f32 %v4117, %v4437
        %v4502 = vadd.f32 %v4118, %v4438
        %v4503 = vadd.f32 %v4119, %v4439
        %v4504 = vadd.f32 %v4120, %v4440
        %v4505 = vadd.f32 %v4121, %v4441
        %v4506 = vadd.f32 %v4122, %v4442
        %v4507 = vadd.f32 %v4123, %v4443
        %v4508 = vadd.f32 %v4124, %v4444
        %v4509 = vadd.f32 %v4125, %v4445
        %v4510 = vadd.f32 %v4126, %v4446
        %v4511 = vadd.f32 %v4127, %v4447
        %v4512 = vadd.f32 %v4128, %v4448
        %v4513 = vadd.f32 %v4129, %v4449
        %v4514 = vadd.f32 %v4130, %v4450
        %v4515 = vadd.f32 %v4131, %v4451
        %v4516 = vadd.f32 %v4132, %v4452
        %v4517 = vadd.f32 %v4133, %v4453
        %v4518 = vadd.f32 %v4134, %v4454
        %v4519 = vadd.f32 %v4135, %v4455
        %v4520 = vadd.f32 %v4136, %v4456
        %v4521 = vadd.f32 %v4137, %v4457
        %v4522 = vadd.f32 %v4138, %v4458
        %v4523 = vadd.f32 %v4139, %v4459
        %v4524 = vadd.f32 %v4140, %v4460
        %v4525 = vadd.f32 %v4141, %v4461
        %v4526 = vadd.f32 %v4142, %v4462
        %v4527 = vadd.f32 %v4143, %v4463
        %v4528 = vadd.f32 %v4144, %v4464
        %v4529 = vadd.f32 %v4145, %v4465
        %v4530 = vadd.f32 %v4146, %v4466
        %v4531 = vadd.f32 %v4147, %v4467
        %v4532 = vadd.f32 %v4148, %v4468
        %v4533 = vadd.f32 %v4149, %v4469
        %vm4534 = vcmp.ge.f32.partialorder %v4470, 0.0
        %vm4535 = vcmp.ge.f32.partialorder %v4471, 0.0
        %vm4536 = vcmp.ge.f32.partialorder %v4472, 0.0
        %vm4537 = vcmp.ge.f32.partialorder %v4473, 0.0
        %vm4538 = vcmp.ge.f32.partialorder %v4474, 0.0
        %vm4539 = vcmp.ge.f32.partialorder %v4475, 0.0
        %vm4540 = vcmp.ge.f32.partialorder %v4476, 0.0
        %vm4541 = vcmp.ge.f32.partialorder %v4477, 0.0
        %vm4542 = vcmp.ge.f32.partialorder %v4478, 0.0
        %vm4543 = vcmp.ge.f32.partialorder %v4479, 0.0
        %vm4544 = vcmp.ge.f32.partialorder %v4480, 0.0
        %vm4545 = vcmp.ge.f32.partialorder %v4481, 0.0
        %vm4546 = vcmp.ge.f32.partialorder %v4482, 0.0
        %vm4547 = vcmp.ge.f32.partialorder %v4483, 0.0
        %vm4548 = vcmp.ge.f32.partialorder %v4484, 0.0
        %vm4549 = vcmp.ge.f32.partialorder %v4485, 0.0
        %vm4550 = vcmp.ge.f32.partialorder %v4486, 0.0
        %vm4551 = vcmp.ge.f32.partialorder %v4487, 0.0
        %vm4552 = vcmp.ge.f32.partialorder %v4488, 0.0
        %vm4553 = vcmp.ge.f32.partialorder %v4489, 0.0
        %vm4554 = vcmp.ge.f32.partialorder %v4490, 0.0
        %vm4555 = vcmp.ge.f32.partialorder %v4491, 0.0
        %vm4556 = vcmp.ge.f32.partialorder %v4492, 0.0
        %vm4557 = vcmp.ge.f32.partialorder %v4493, 0.0
        %vm4558 = vcmp.ge.f32.partialorder %v4494, 0.0
        %vm4559 = vcmp.ge.f32.partialorder %v4495, 0.0
        %vm4560 = vcmp.ge.f32.partialorder %v4496, 0.0
        %vm4561 = vcmp.ge.f32.partialorder %v4497, 0.0
        %vm4562 = vcmp.ge.f32.partialorder %v4498, 0.0
        %vm4563 = vcmp.ge.f32.partialorder %v4499, 0.0
        %vm4564 = vcmp.ge.f32.partialorder %v4500, 0.0
        %vm4565 = vcmp.ge.f32.partialorder %v4501, 0.0
        %vm4566 = vcmp.ge.f32.partialorder %v4502, 0.0
        %vm4567 = vcmp.ge.f32.partialorder %v4503, 0.0
        %vm4568 = vcmp.ge.f32.partialorder %v4504, 0.0
        %vm4569 = vcmp.ge.f32.partialorder %v4505, 0.0
        %vm4570 = vcmp.ge.f32.partialorder %v4506, 0.0
        %vm4571 = vcmp.ge.f32.partialorder %v4507, 0.0
        %vm4572 = vcmp.ge.f32.partialorder %v4508, 0.0
        %vm4573 = vcmp.ge.f32.partialorder %v4509, 0.0
        %vm4574 = vcmp.ge.f32.partialorder %v4510, 0.0
        %vm4575 = vcmp.ge.f32.partialorder %v4511, 0.0
        %vm4576 = vcmp.ge.f32.partialorder %v4512, 0.0
        %vm4577 = vcmp.ge.f32.partialorder %v4513, 0.0
        %vm4578 = vcmp.ge.f32.partialorder %v4514, 0.0
        %vm4579 = vcmp.ge.f32.partialorder %v4515, 0.0
        %vm4580 = vcmp.ge.f32.partialorder %v4516, 0.0
        %vm4581 = vcmp.ge.f32.partialorder %v4517, 0.0
        %vm4582 = vcmp.ge.f32.partialorder %v4518, 0.0
        %vm4583 = vcmp.ge.f32.partialorder %v4519, 0.0
        %vm4584 = vcmp.ge.f32.partialorder %v4520, 0.0
        %vm4585 = vcmp.ge.f32.partialorder %v4521, 0.0
        %vm4586 = vcmp.ge.f32.partialorder %v4522, 0.0
        %vm4587 = vcmp.ge.f32.partialorder %v4523, 0.0
        %vm4588 = vcmp.ge.f32.partialorder %v4524, 0.0
        %vm4589 = vcmp.ge.f32.partialorder %v4525, 0.0
        %vm4590 = vcmp.ge.f32.partialorder %v4526, 0.0
        %vm4591 = vcmp.ge.f32.partialorder %v4527, 0.0
        %vm4592 = vcmp.ge.f32.partialorder %v4528, 0.0
        %vm4593 = vcmp.ge.f32.partialorder %v4529, 0.0
        %vm4594 = vcmp.ge.f32.partialorder %v4530, 0.0
        %vm4595 = vcmp.ge.f32.partialorder %v4531, 0.0
        %vm4596 = vcmp.ge.f32.partialorder %v4532, 0.0
        %vm4597 = vcmp.ge.f32.partialorder %v4533, 0.0
        %4598 = vset.pattern.permute.xlu0 7
        %4599 = vperm.xlu0 %4598, %v614
        %v4600 = vpop.permute.xlu0 %4599
        %4602 = vset.pattern.permute.xlu0 7
        %4603 = vperm.xlu0 %4602, %v615
        %v4604 = vpop.permute.xlu0 %4603
        %4606 = vset.pattern.permute.xlu0 7
        %4607 = vperm.xlu0 %4606, %v616
        %v4608 = vpop.permute.xlu0 %4607
        %4610 = vset.pattern.permute.xlu0 7
        %4611 = vperm.xlu0 %4610, %v617
        %v4612 = vpop.permute.xlu0 %4611
        %4614 = vset.pattern.permute.xlu0 7
        %4615 = vperm.xlu0 %4614, %v618
        %v4616 = vpop.permute.xlu0 %4615
        %4618 = vset.pattern.permute.xlu0 7
        %4619 = vperm.xlu0 %4618, %v619
        %v4620 = vpop.permute.xlu0 %4619
        %4622 = vset.pattern.permute.xlu0 7
        %4623 = vperm.xlu0 %4622, %v620
        %v4624 = vpop.permute.xlu0 %4623
        %4626 = vset.pattern.permute.xlu0 7
        %4627 = vperm.xlu0 %4626, %v621
        %v4628 = vpop.permute.xlu0 %4627
        %4630 = vset.pattern.permute.xlu0 7
        %4631 = vperm.xlu0 %4630, %v622
        %v4632 = vpop.permute.xlu0 %4631
        %4634 = vset.pattern.permute.xlu0 7
        %4635 = vperm.xlu0 %4634, %v623
        %v4636 = vpop.permute.xlu0 %4635
        %4638 = vset.pattern.permute.xlu0 7
        %4639 = vperm.xlu0 %4638, %v624
        %v4640 = vpop.permute.xlu0 %4639
        %4642 = vset.pattern.permute.xlu0 7
        %4643 = vperm.xlu0 %4642, %v625
        %v4644 = vpop.permute.xlu0 %4643
        %4646 = vset.pattern.permute.xlu0 7
        %4647 = vperm.xlu0 %4646, %v626
        %v4648 = vpop.permute.xlu0 %4647
        %4650 = vset.pattern.permute.xlu0 7
        %4651 = vperm.xlu0 %4650, %v627
        %v4652 = vpop.permute.xlu0 %4651
        %4654 = vset.pattern.permute.xlu0 7
        %4655 = vperm.xlu0 %4654, %v628
        %v4656 = vpop.permute.xlu0 %4655
        %4658 = vset.pattern.permute.xlu0 7
        %4659 = vperm.xlu0 %4658, %v629
        %v4660 = vpop.permute.xlu0 %4659
        %4662 = vset.pattern.permute.xlu0 7
        %4663 = vperm.xlu0 %4662, %v630
        %v4664 = vpop.permute.xlu0 %4663
        %4666 = vset.pattern.permute.xlu0 7
        %4667 = vperm.xlu0 %4666, %v631
        %v4668 = vpop.permute.xlu0 %4667
        %4670 = vset.pattern.permute.xlu0 7
        %4671 = vperm.xlu0 %4670, %v632
        %v4672 = vpop.permute.xlu0 %4671
        %4674 = vset.pattern.permute.xlu0 7
        %4675 = vperm.xlu0 %4674, %v633
        %v4676 = vpop.permute.xlu0 %4675
        %4678 = vset.pattern.permute.xlu0 7
        %4679 = vperm.xlu0 %4678, %v634
        %v4680 = vpop.permute.xlu0 %4679
        %4682 = vset.pattern.permute.xlu0 7
        %4683 = vperm.xlu0 %4682, %v635
        %v4684 = vpop.permute.xlu0 %4683
        %4686 = vset.pattern.permute.xlu0 7
        %4687 = vperm.xlu0 %4686, %v636
        %v4688 = vpop.permute.xlu0 %4687
        %4690 = vset.pattern.permute.xlu0 7
        %4691 = vperm.xlu0 %4690, %v637
        %v4692 = vpop.permute.xlu0 %4691
        %4694 = vset.pattern.permute.xlu0 7
        %4695 = vperm.xlu0 %4694, %v638
        %v4696 = vpop.permute.xlu0 %4695
        %4698 = vset.pattern.permute.xlu0 7
        %4699 = vperm.xlu0 %4698, %v639
        %v4700 = vpop.permute.xlu0 %4699
        %4702 = vset.pattern.permute.xlu0 7
        %4703 = vperm.xlu0 %4702, %v640
        %v4704 = vpop.permute.xlu0 %4703
        %4706 = vset.pattern.permute.xlu0 7
        %4707 = vperm.xlu0 %4706, %v641
        %v4708 = vpop.permute.xlu0 %4707
        %4710 = vset.pattern.permute.xlu0 7
        %4711 = vperm.xlu0 %4710, %v642
        %v4712 = vpop.permute.xlu0 %4711
        %4714 = vset.pattern.permute.xlu0 7
        %4715 = vperm.xlu0 %4714, %v643
        %v4716 = vpop.permute.xlu0 %4715
        %4718 = vset.pattern.permute.xlu0 7
        %4719 = vperm.xlu0 %4718, %v644
        %v4720 = vpop.permute.xlu0 %4719
        %4722 = vset.pattern.permute.xlu0 7
        %4723 = vperm.xlu0 %4722, %v645
        %v4724 = vpop.permute.xlu0 %4723
        %4726 = vset.pattern.permute.xlu0 7
        %4727 = vperm.xlu0 %4726, %v646
        %v4728 = vpop.permute.xlu0 %4727
        %4730 = vset.pattern.permute.xlu0 7
        %4731 = vperm.xlu0 %4730, %v647
        %v4732 = vpop.permute.xlu0 %4731
        %4734 = vset.pattern.permute.xlu0 7
        %4735 = vperm.xlu0 %4734, %v648
        %v4736 = vpop.permute.xlu0 %4735
        %4738 = vset.pattern.permute.xlu0 7
        %4739 = vperm.xlu0 %4738, %v649
        %v4740 = vpop.permute.xlu0 %4739
        %4742 = vset.pattern.permute.xlu0 7
        %4743 = vperm.xlu0 %4742, %v650
        %v4744 = vpop.permute.xlu0 %4743
        %4746 = vset.pattern.permute.xlu0 7
        %4747 = vperm.xlu0 %4746, %v651
        %v4748 = vpop.permute.xlu0 %4747
        %4750 = vset.pattern.permute.xlu0 7
        %4751 = vperm.xlu0 %4750, %v652
        %v4752 = vpop.permute.xlu0 %4751
        %4754 = vset.pattern.permute.xlu0 7
        %4755 = vperm.xlu0 %4754, %v653
        %v4756 = vpop.permute.xlu0 %4755
        %4758 = vset.pattern.permute.xlu0 7
        %4759 = vperm.xlu0 %4758, %v654
        %v4760 = vpop.permute.xlu0 %4759
        %4762 = vset.pattern.permute.xlu0 7
        %4763 = vperm.xlu0 %4762, %v655
        %v4764 = vpop.permute.xlu0 %4763
        %4766 = vset.pattern.permute.xlu0 7
        %4767 = vperm.xlu0 %4766, %v656
        %v4768 = vpop.permute.xlu0 %4767
        %4770 = vset.pattern.permute.xlu0 7
        %4771 = vperm.xlu0 %4770, %v657
        %v4772 = vpop.permute.xlu0 %4771
        %4774 = vset.pattern.permute.xlu0 7
        %4775 = vperm.xlu0 %4774, %v658
        %v4776 = vpop.permute.xlu0 %4775
        %4778 = vset.pattern.permute.xlu0 7
        %4779 = vperm.xlu0 %4778, %v659
        %v4780 = vpop.permute.xlu0 %4779
        %4782 = vset.pattern.permute.xlu0 7
        %4783 = vperm.xlu0 %4782, %v660
        %v4784 = vpop.permute.xlu0 %4783
        %4786 = vset.pattern.permute.xlu0 7
        %4787 = vperm.xlu0 %4786, %v661
        %v4788 = vpop.permute.xlu0 %4787
        %4790 = vset.pattern.permute.xlu0 7
        %4791 = vperm.xlu0 %4790, %v662
        %v4792 = vpop.permute.xlu0 %4791
        %4794 = vset.pattern.permute.xlu0 7
        %4795 = vperm.xlu0 %4794, %v663
        %v4796 = vpop.permute.xlu0 %4795
        %4798 = vset.pattern.permute.xlu0 7
        %4799 = vperm.xlu0 %4798, %v664
        %v4800 = vpop.permute.xlu0 %4799
        %4802 = vset.pattern.permute.xlu0 7
        %4803 = vperm.xlu0 %4802, %v665
        %v4804 = vpop.permute.xlu0 %4803
        %4806 = vset.pattern.permute.xlu0 7
        %4807 = vperm.xlu0 %4806, %v666
        %v4808 = vpop.permute.xlu0 %4807
        %4810 = vset.pattern.permute.xlu0 7
        %4811 = vperm.xlu0 %4810, %v667
        %v4812 = vpop.permute.xlu0 %4811
        %4814 = vset.pattern.permute.xlu0 7
        %4815 = vperm.xlu0 %4814, %v668
        %v4816 = vpop.permute.xlu0 %4815
        %4818 = vset.pattern.permute.xlu0 7
        %4819 = vperm.xlu0 %4818, %v669
        %v4820 = vpop.permute.xlu0 %4819
        %4822 = vset.pattern.permute.xlu0 7
        %4823 = vperm.xlu0 %4822, %v670
        %v4824 = vpop.permute.xlu0 %4823
        %4826 = vset.pattern.permute.xlu0 7
        %4827 = vperm.xlu0 %4826, %v671
        %v4828 = vpop.permute.xlu0 %4827
        %4830 = vset.pattern.permute.xlu0 7
        %4831 = vperm.xlu0 %4830, %v672
        %v4832 = vpop.permute.xlu0 %4831
        %4834 = vset.pattern.permute.xlu0 7
        %4835 = vperm.xlu0 %4834, %v673
        %v4836 = vpop.permute.xlu0 %4835
        %4838 = vset.pattern.permute.xlu0 7
        %4839 = vperm.xlu0 %4838, %v674
        %v4840 = vpop.permute.xlu0 %4839
        %4842 = vset.pattern.permute.xlu0 7
        %4843 = vperm.xlu0 %4842, %v675
        %v4844 = vpop.permute.xlu0 %4843
        %4846 = vset.pattern.permute.xlu0 7
        %4847 = vperm.xlu0 %4846, %v676
        %v4848 = vpop.permute.xlu0 %4847
        %4850 = vset.pattern.permute.xlu0 7
        %4851 = vperm.xlu0 %4850, %v677
        %v4852 = vpop.permute.xlu0 %4851
        %v4854 = vmul.f32 %v4600, %v4470
        %v4855 = vmul.f32 %v4604, %v4471
        %v4856 = vmul.f32 %v4608, %v4472
        %v4857 = vmul.f32 %v4612, %v4473
        %v4858 = vmul.f32 %v4616, %v4474
        %v4859 = vmul.f32 %v4620, %v4475
        %v4860 = vmul.f32 %v4624, %v4476
        %v4861 = vmul.f32 %v4628, %v4477
        %v4862 = vmul.f32 %v4632, %v4478
        %v4863 = vmul.f32 %v4636, %v4479
        %v4864 = vmul.f32 %v4640, %v4480
        %v4865 = vmul.f32 %v4644, %v4481
        %v4866 = vmul.f32 %v4648, %v4482
        %v4867 = vmul.f32 %v4652, %v4483
        %v4868 = vmul.f32 %v4656, %v4484
        %v4869 = vmul.f32 %v4660, %v4485
        %v4870 = vmul.f32 %v4664, %v4486
        %v4871 = vmul.f32 %v4668, %v4487
        %v4872 = vmul.f32 %v4672, %v4488
        %v4873 = vmul.f32 %v4676, %v4489
        %v4874 = vmul.f32 %v4680, %v4490
        %v4875 = vmul.f32 %v4684, %v4491
        %v4876 = vmul.f32 %v4688, %v4492
        %v4877 = vmul.f32 %v4692, %v4493
        %v4878 = vmul.f32 %v4696, %v4494
        %v4879 = vmul.f32 %v4700, %v4495
        %v4880 = vmul.f32 %v4704, %v4496
        %v4881 = vmul.f32 %v4708, %v4497
        %v4882 = vmul.f32 %v4712, %v4498
        %v4883 = vmul.f32 %v4716, %v4499
        %v4884 = vmul.f32 %v4720, %v4500
        %v4885 = vmul.f32 %v4724, %v4501
        %v4886 = vmul.f32 %v4728, %v4502
        %v4887 = vmul.f32 %v4732, %v4503
        %v4888 = vmul.f32 %v4736, %v4504
        %v4889 = vmul.f32 %v4740, %v4505
        %v4890 = vmul.f32 %v4744, %v4506
        %v4891 = vmul.f32 %v4748, %v4507
        %v4892 = vmul.f32 %v4752, %v4508
        %v4893 = vmul.f32 %v4756, %v4509
        %v4894 = vmul.f32 %v4760, %v4510
        %v4895 = vmul.f32 %v4764, %v4511
        %v4896 = vmul.f32 %v4768, %v4512
        %v4897 = vmul.f32 %v4772, %v4513
        %v4898 = vmul.f32 %v4776, %v4514
        %v4899 = vmul.f32 %v4780, %v4515
        %v4900 = vmul.f32 %v4784, %v4516
        %v4901 = vmul.f32 %v4788, %v4517
        %v4902 = vmul.f32 %v4792, %v4518
        %v4903 = vmul.f32 %v4796, %v4519
        %v4904 = vmul.f32 %v4800, %v4520
        %v4905 = vmul.f32 %v4804, %v4521
        %v4906 = vmul.f32 %v4808, %v4522
        %v4907 = vmul.f32 %v4812, %v4523
        %v4908 = vmul.f32 %v4816, %v4524
        %v4909 = vmul.f32 %v4820, %v4525
        %v4910 = vmul.f32 %v4824, %v4526
        %v4911 = vmul.f32 %v4828, %v4527
        %v4912 = vmul.f32 %v4832, %v4528
        %v4913 = vmul.f32 %v4836, %v4529
        %v4914 = vmul.f32 %v4840, %v4530
        %v4915 = vmul.f32 %v4844, %v4531
        %v4916 = vmul.f32 %v4848, %v4532
        %v4917 = vmul.f32 %v4852, %v4533
        %v4918 = vsel %vm4534, %v4470, %v4854
        %v4919 = vsel %vm4535, %v4471, %v4855
        %v4920 = vsel %vm4536, %v4472, %v4856
        %v4921 = vsel %vm4537, %v4473, %v4857
        %v4922 = vsel %vm4538, %v4474, %v4858
        %v4923 = vsel %vm4539, %v4475, %v4859
        %v4924 = vsel %vm4540, %v4476, %v4860
        %v4925 = vsel %vm4541, %v4477, %v4861
        %v4926 = vsel %vm4542, %v4478, %v4862
        %v4927 = vsel %vm4543, %v4479, %v4863
        %v4928 = vsel %vm4544, %v4480, %v4864
        %v4929 = vsel %vm4545, %v4481, %v4865
        %v4930 = vsel %vm4546, %v4482, %v4866
        %v4931 = vsel %vm4547, %v4483, %v4867
        %v4932 = vsel %vm4548, %v4484, %v4868
        %v4933 = vsel %vm4549, %v4485, %v4869
        %v4934 = vsel %vm4550, %v4486, %v4870
        %v4935 = vsel %vm4551, %v4487, %v4871
        %v4936 = vsel %vm4552, %v4488, %v4872
        %v4937 = vsel %vm4553, %v4489, %v4873
        %v4938 = vsel %vm4554, %v4490, %v4874
        %v4939 = vsel %vm4555, %v4491, %v4875
        %v4940 = vsel %vm4556, %v4492, %v4876
        %v4941 = vsel %vm4557, %v4493, %v4877
        %v4942 = vsel %vm4558, %v4494, %v4878
        %v4943 = vsel %vm4559, %v4495, %v4879
        %v4944 = vsel %vm4560, %v4496, %v4880
        %v4945 = vsel %vm4561, %v4497, %v4881
        %v4946 = vsel %vm4562, %v4498, %v4882
        %v4947 = vsel %vm4563, %v4499, %v4883
        %v4948 = vsel %vm4564, %v4500, %v4884
        %v4949 = vsel %vm4565, %v4501, %v4885
        %v4950 = vsel %vm4566, %v4502, %v4886
        %v4951 = vsel %vm4567, %v4503, %v4887
        %v4952 = vsel %vm4568, %v4504, %v4888
        %v4953 = vsel %vm4569, %v4505, %v4889
        %v4954 = vsel %vm4570, %v4506, %v4890
        %v4955 = vsel %vm4571, %v4507, %v4891
        %v4956 = vsel %vm4572, %v4508, %v4892
        %v4957 = vsel %vm4573, %v4509, %v4893
        %v4958 = vsel %vm4574, %v4510, %v4894
        %v4959 = vsel %vm4575, %v4511, %v4895
        %v4960 = vsel %vm4576, %v4512, %v4896
        %v4961 = vsel %vm4577, %v4513, %v4897
        %v4962 = vsel %vm4578, %v4514, %v4898
        %v4963 = vsel %vm4579, %v4515, %v4899
        %v4964 = vsel %vm4580, %v4516, %v4900
        %v4965 = vsel %vm4581, %v4517, %v4901
        %v4966 = vsel %vm4582, %v4518, %v4902
        %v4967 = vsel %vm4583, %v4519, %v4903
        %v4968 = vsel %vm4584, %v4520, %v4904
        %v4969 = vsel %vm4585, %v4521, %v4905
        %v4970 = vsel %vm4586, %v4522, %v4906
        %v4971 = vsel %vm4587, %v4523, %v4907
        %v4972 = vsel %vm4588, %v4524, %v4908
        %v4973 = vsel %vm4589, %v4525, %v4909
        %v4974 = vsel %vm4590, %v4526, %v4910
        %v4975 = vsel %vm4591, %v4527, %v4911
        %v4976 = vsel %vm4592, %v4528, %v4912
        %v4977 = vsel %vm4593, %v4529, %v4913
        %v4978 = vsel %vm4594, %v4530, %v4914
        %v4979 = vsel %vm4595, %v4531, %v4915
        %v4980 = vsel %vm4596, %v4532, %v4916
        %v4981 = vsel %vm4597, %v4533, %v4917
        %4982 = vset.pattern.permute.xlu0 5
        %4983 = vperm.xlu0 %4982, %v614
        %v4984 = vpop.permute.xlu0 %4983
        %4986 = vset.pattern.permute.xlu0 5
        %4987 = vperm.xlu0 %4986, %v615
        %v4988 = vpop.permute.xlu0 %4987
        %4990 = vset.pattern.permute.xlu0 5
        %4991 = vperm.xlu0 %4990, %v616
        %v4992 = vpop.permute.xlu0 %4991
        %4994 = vset.pattern.permute.xlu0 5
        %4995 = vperm.xlu0 %4994, %v617
        %v4996 = vpop.permute.xlu0 %4995
        %4998 = vset.pattern.permute.xlu0 5
        %4999 = vperm.xlu0 %4998, %v618
        %v5000 = vpop.permute.xlu0 %4999
        %5002 = vset.pattern.permute.xlu0 5
        %5003 = vperm.xlu0 %5002, %v619
        %v5004 = vpop.permute.xlu0 %5003
        %5006 = vset.pattern.permute.xlu0 5
        %5007 = vperm.xlu0 %5006, %v620
        %v5008 = vpop.permute.xlu0 %5007
        %5010 = vset.pattern.permute.xlu0 5
        %5011 = vperm.xlu0 %5010, %v621
        %v5012 = vpop.permute.xlu0 %5011
        %5014 = vset.pattern.permute.xlu0 5
        %5015 = vperm.xlu0 %5014, %v622
        %v5016 = vpop.permute.xlu0 %5015
        %5018 = vset.pattern.permute.xlu0 5
        %5019 = vperm.xlu0 %5018, %v623
        %v5020 = vpop.permute.xlu0 %5019
        %5022 = vset.pattern.permute.xlu0 5
        %5023 = vperm.xlu0 %5022, %v624
        %v5024 = vpop.permute.xlu0 %5023
        %5026 = vset.pattern.permute.xlu0 5
        %5027 = vperm.xlu0 %5026, %v625
        %v5028 = vpop.permute.xlu0 %5027
        %5030 = vset.pattern.permute.xlu0 5
        %5031 = vperm.xlu0 %5030, %v626
        %v5032 = vpop.permute.xlu0 %5031
        %5034 = vset.pattern.permute.xlu0 5
        %5035 = vperm.xlu0 %5034, %v627
        %v5036 = vpop.permute.xlu0 %5035
        %5038 = vset.pattern.permute.xlu0 5
        %5039 = vperm.xlu0 %5038, %v628
        %v5040 = vpop.permute.xlu0 %5039
        %5042 = vset.pattern.permute.xlu0 5
        %5043 = vperm.xlu0 %5042, %v629
        %v5044 = vpop.permute.xlu0 %5043
        %5046 = vset.pattern.permute.xlu0 5
        %5047 = vperm.xlu0 %5046, %v630
        %v5048 = vpop.permute.xlu0 %5047
        %5050 = vset.pattern.permute.xlu0 5
        %5051 = vperm.xlu0 %5050, %v631
        %v5052 = vpop.permute.xlu0 %5051
        %5054 = vset.pattern.permute.xlu0 5
        %5055 = vperm.xlu0 %5054, %v632
        %v5056 = vpop.permute.xlu0 %5055
        %5058 = vset.pattern.permute.xlu0 5
        %5059 = vperm.xlu0 %5058, %v633
        %v5060 = vpop.permute.xlu0 %5059
        %5062 = vset.pattern.permute.xlu0 5
        %5063 = vperm.xlu0 %5062, %v634
        %v5064 = vpop.permute.xlu0 %5063
        %5066 = vset.pattern.permute.xlu0 5
        %5067 = vperm.xlu0 %5066, %v635
        %v5068 = vpop.permute.xlu0 %5067
        %5070 = vset.pattern.permute.xlu0 5
        %5071 = vperm.xlu0 %5070, %v636
        %v5072 = vpop.permute.xlu0 %5071
        %5074 = vset.pattern.permute.xlu0 5
        %5075 = vperm.xlu0 %5074, %v637
        %v5076 = vpop.permute.xlu0 %5075
        %5078 = vset.pattern.permute.xlu0 5
        %5079 = vperm.xlu0 %5078, %v638
        %v5080 = vpop.permute.xlu0 %5079
        %5082 = vset.pattern.permute.xlu0 5
        %5083 = vperm.xlu0 %5082, %v639
        %v5084 = vpop.permute.xlu0 %5083
        %5086 = vset.pattern.permute.xlu0 5
        %5087 = vperm.xlu0 %5086, %v640
        %v5088 = vpop.permute.xlu0 %5087
        %5090 = vset.pattern.permute.xlu0 5
        %5091 = vperm.xlu0 %5090, %v641
        %v5092 = vpop.permute.xlu0 %5091
        %5094 = vset.pattern.permute.xlu0 5
        %5095 = vperm.xlu0 %5094, %v642
        %v5096 = vpop.permute.xlu0 %5095
        %5098 = vset.pattern.permute.xlu0 5
        %5099 = vperm.xlu0 %5098, %v643
        %v5100 = vpop.permute.xlu0 %5099
        %5102 = vset.pattern.permute.xlu0 5
        %5103 = vperm.xlu0 %5102, %v644
        %v5104 = vpop.permute.xlu0 %5103
        %5106 = vset.pattern.permute.xlu0 5
        %5107 = vperm.xlu0 %5106, %v645
        %v5108 = vpop.permute.xlu0 %5107
        %5110 = vset.pattern.permute.xlu0 5
        %5111 = vperm.xlu0 %5110, %v646
        %v5112 = vpop.permute.xlu0 %5111
        %5114 = vset.pattern.permute.xlu0 5
        %5115 = vperm.xlu0 %5114, %v647
        %v5116 = vpop.permute.xlu0 %5115
        %5118 = vset.pattern.permute.xlu0 5
        %5119 = vperm.xlu0 %5118, %v648
        %v5120 = vpop.permute.xlu0 %5119
        %5122 = vset.pattern.permute.xlu0 5
        %5123 = vperm.xlu0 %5122, %v649
        %v5124 = vpop.permute.xlu0 %5123
        %5126 = vset.pattern.permute.xlu0 5
        %5127 = vperm.xlu0 %5126, %v650
        %v5128 = vpop.permute.xlu0 %5127
        %5130 = vset.pattern.permute.xlu0 5
        %5131 = vperm.xlu0 %5130, %v651
        %v5132 = vpop.permute.xlu0 %5131
        %5134 = vset.pattern.permute.xlu0 5
        %5135 = vperm.xlu0 %5134, %v652
        %v5136 = vpop.permute.xlu0 %5135
        %5138 = vset.pattern.permute.xlu0 5
        %5139 = vperm.xlu0 %5138, %v653
        %v5140 = vpop.permute.xlu0 %5139
        %5142 = vset.pattern.permute.xlu0 5
        %5143 = vperm.xlu0 %5142, %v654
        %v5144 = vpop.permute.xlu0 %5143
        %5146 = vset.pattern.permute.xlu0 5
        %5147 = vperm.xlu0 %5146, %v655
        %v5148 = vpop.permute.xlu0 %5147
        %5150 = vset.pattern.permute.xlu0 5
        %5151 = vperm.xlu0 %5150, %v656
        %v5152 = vpop.permute.xlu0 %5151
        %5154 = vset.pattern.permute.xlu0 5
        %5155 = vperm.xlu0 %5154, %v657
        %v5156 = vpop.permute.xlu0 %5155
        %5158 = vset.pattern.permute.xlu0 5
        %5159 = vperm.xlu0 %5158, %v658
        %v5160 = vpop.permute.xlu0 %5159
        %5162 = vset.pattern.permute.xlu0 5
        %5163 = vperm.xlu0 %5162, %v659
        %v5164 = vpop.permute.xlu0 %5163
        %5166 = vset.pattern.permute.xlu0 5
        %5167 = vperm.xlu0 %5166, %v660
        %v5168 = vpop.permute.xlu0 %5167
        %5170 = vset.pattern.permute.xlu0 5
        %5171 = vperm.xlu0 %5170, %v661
        %v5172 = vpop.permute.xlu0 %5171
        %5174 = vset.pattern.permute.xlu0 5
        %5175 = vperm.xlu0 %5174, %v662
        %v5176 = vpop.permute.xlu0 %5175
        %5178 = vset.pattern.permute.xlu0 5
        %5179 = vperm.xlu0 %5178, %v663
        %v5180 = vpop.permute.xlu0 %5179
        %5182 = vset.pattern.permute.xlu0 5
        %5183 = vperm.xlu0 %5182, %v664
        %v5184 = vpop.permute.xlu0 %5183
        %5186 = vset.pattern.permute.xlu0 5
        %5187 = vperm.xlu0 %5186, %v665
        %v5188 = vpop.permute.xlu0 %5187
        %5190 = vset.pattern.permute.xlu0 5
        %5191 = vperm.xlu0 %5190, %v666
        %v5192 = vpop.permute.xlu0 %5191
        %5194 = vset.pattern.permute.xlu0 5
        %5195 = vperm.xlu0 %5194, %v667
        %v5196 = vpop.permute.xlu0 %5195
        %5198 = vset.pattern.permute.xlu0 5
        %5199 = vperm.xlu0 %5198, %v668
        %v5200 = vpop.permute.xlu0 %5199
        %5202 = vset.pattern.permute.xlu0 5
        %5203 = vperm.xlu0 %5202, %v669
        %v5204 = vpop.permute.xlu0 %5203
        %5206 = vset.pattern.permute.xlu0 5
        %5207 = vperm.xlu0 %5206, %v670
        %v5208 = vpop.permute.xlu0 %5207
        %5210 = vset.pattern.permute.xlu0 5
        %5211 = vperm.xlu0 %5210, %v671
        %v5212 = vpop.permute.xlu0 %5211
        %5214 = vset.pattern.permute.xlu0 5
        %5215 = vperm.xlu0 %5214, %v672
        %v5216 = vpop.permute.xlu0 %5215
        %5218 = vset.pattern.permute.xlu0 5
        %5219 = vperm.xlu0 %5218, %v673
        %v5220 = vpop.permute.xlu0 %5219
        %5222 = vset.pattern.permute.xlu0 5
        %5223 = vperm.xlu0 %5222, %v674
        %v5224 = vpop.permute.xlu0 %5223
        %5226 = vset.pattern.permute.xlu0 5
        %5227 = vperm.xlu0 %5226, %v675
        %v5228 = vpop.permute.xlu0 %5227
        %5230 = vset.pattern.permute.xlu0 5
        %5231 = vperm.xlu0 %5230, %v676
        %v5232 = vpop.permute.xlu0 %5231
        %5234 = vset.pattern.permute.xlu0 5
        %5235 = vperm.xlu0 %5234, %v677
        %v5236 = vpop.permute.xlu0 %5235
        %v5238 = vmul.f32 %v4918, %v4984
        %v5239 = vmul.f32 %v4919, %v4988
        %v5240 = vmul.f32 %v4920, %v4992
        %v5241 = vmul.f32 %v4921, %v4996
        %v5242 = vmul.f32 %v4922, %v5000
        %v5243 = vmul.f32 %v4923, %v5004
        %v5244 = vmul.f32 %v4924, %v5008
        %v5245 = vmul.f32 %v4925, %v5012
        %v5246 = vmul.f32 %v4926, %v5016
        %v5247 = vmul.f32 %v4927, %v5020
        %v5248 = vmul.f32 %v4928, %v5024
        %v5249 = vmul.f32 %v4929, %v5028
        %v5250 = vmul.f32 %v4930, %v5032
        %v5251 = vmul.f32 %v4931, %v5036
        %v5252 = vmul.f32 %v4932, %v5040
        %v5253 = vmul.f32 %v4933, %v5044
        %v5254 = vmul.f32 %v4934, %v5048
        %v5255 = vmul.f32 %v4935, %v5052
        %v5256 = vmul.f32 %v4936, %v5056
        %v5257 = vmul.f32 %v4937, %v5060
        %v5258 = vmul.f32 %v4938, %v5064
        %v5259 = vmul.f32 %v4939, %v5068
        %v5260 = vmul.f32 %v4940, %v5072
        %v5261 = vmul.f32 %v4941, %v5076
        %v5262 = vmul.f32 %v4942, %v5080
        %v5263 = vmul.f32 %v4943, %v5084
        %v5264 = vmul.f32 %v4944, %v5088
        %v5265 = vmul.f32 %v4945, %v5092
        %v5266 = vmul.f32 %v4946, %v5096
        %v5267 = vmul.f32 %v4947, %v5100
        %v5268 = vmul.f32 %v4948, %v5104
        %v5269 = vmul.f32 %v4949, %v5108
        %v5270 = vmul.f32 %v4950, %v5112
        %v5271 = vmul.f32 %v4951, %v5116
        %v5272 = vmul.f32 %v4952, %v5120
        %v5273 = vmul.f32 %v4953, %v5124
        %v5274 = vmul.f32 %v4954, %v5128
        %v5275 = vmul.f32 %v4955, %v5132
        %v5276 = vmul.f32 %v4956, %v5136
        %v5277 = vmul.f32 %v4957, %v5140
        %v5278 = vmul.f32 %v4958, %v5144
        %v5279 = vmul.f32 %v4959, %v5148
        %v5280 = vmul.f32 %v4960, %v5152
        %v5281 = vmul.f32 %v4961, %v5156
        %v5282 = vmul.f32 %v4962, %v5160
        %v5283 = vmul.f32 %v4963, %v5164
        %v5284 = vmul.f32 %v4964, %v5168
        %v5285 = vmul.f32 %v4965, %v5172
        %v5286 = vmul.f32 %v4966, %v5176
        %v5287 = vmul.f32 %v4967, %v5180
        %v5288 = vmul.f32 %v4968, %v5184
        %v5289 = vmul.f32 %v4969, %v5188
        %v5290 = vmul.f32 %v4970, %v5192
        %v5291 = vmul.f32 %v4971, %v5196
        %v5292 = vmul.f32 %v4972, %v5200
        %v5293 = vmul.f32 %v4973, %v5204
        %v5294 = vmul.f32 %v4974, %v5208
        %v5295 = vmul.f32 %v4975, %v5212
        %v5296 = vmul.f32 %v4976, %v5216
        %v5297 = vmul.f32 %v4977, %v5220
        %v5298 = vmul.f32 %v4978, %v5224
        %v5299 = vmul.f32 %v4979, %v5228
        %v5300 = vmul.f32 %v4980, %v5232
        %v5301 = vmul.f32 %v4981, %v5236
        %5302 = vset.pattern.permute.xlu0 6
        %5303 = vperm.xlu0 %5302, %v614
        %v5304 = vpop.permute.xlu0 %5303
        %5306 = vset.pattern.permute.xlu0 6
        %5307 = vperm.xlu0 %5306, %v615
        %v5308 = vpop.permute.xlu0 %5307
        %5310 = vset.pattern.permute.xlu0 6
        %5311 = vperm.xlu0 %5310, %v616
        %v5312 = vpop.permute.xlu0 %5311
        %5314 = vset.pattern.permute.xlu0 6
        %5315 = vperm.xlu0 %5314, %v617
        %v5316 = vpop.permute.xlu0 %5315
        %5318 = vset.pattern.permute.xlu0 6
        %5319 = vperm.xlu0 %5318, %v618
        %v5320 = vpop.permute.xlu0 %5319
        %5322 = vset.pattern.permute.xlu0 6
        %5323 = vperm.xlu0 %5322, %v619
        %v5324 = vpop.permute.xlu0 %5323
        %5326 = vset.pattern.permute.xlu0 6
        %5327 = vperm.xlu0 %5326, %v620
        %v5328 = vpop.permute.xlu0 %5327
        %5330 = vset.pattern.permute.xlu0 6
        %5331 = vperm.xlu0 %5330, %v621
        %v5332 = vpop.permute.xlu0 %5331
        %5334 = vset.pattern.permute.xlu0 6
        %5335 = vperm.xlu0 %5334, %v622
        %v5336 = vpop.permute.xlu0 %5335
        %5338 = vset.pattern.permute.xlu0 6
        %5339 = vperm.xlu0 %5338, %v623
        %v5340 = vpop.permute.xlu0 %5339
        %5342 = vset.pattern.permute.xlu0 6
        %5343 = vperm.xlu0 %5342, %v624
        %v5344 = vpop.permute.xlu0 %5343
        %5346 = vset.pattern.permute.xlu0 6
        %5347 = vperm.xlu0 %5346, %v625
        %v5348 = vpop.permute.xlu0 %5347
        %5350 = vset.pattern.permute.xlu0 6
        %5351 = vperm.xlu0 %5350, %v626
        %v5352 = vpop.permute.xlu0 %5351
        %5354 = vset.pattern.permute.xlu0 6
        %5355 = vperm.xlu0 %5354, %v627
        %v5356 = vpop.permute.xlu0 %5355
        %5358 = vset.pattern.permute.xlu0 6
        %5359 = vperm.xlu0 %5358, %v628
        %v5360 = vpop.permute.xlu0 %5359
        %5362 = vset.pattern.permute.xlu0 6
        %5363 = vperm.xlu0 %5362, %v629
        %v5364 = vpop.permute.xlu0 %5363
        %5366 = vset.pattern.permute.xlu0 6
        %5367 = vperm.xlu0 %5366, %v630
        %v5368 = vpop.permute.xlu0 %5367
        %5370 = vset.pattern.permute.xlu0 6
        %5371 = vperm.xlu0 %5370, %v631
        %v5372 = vpop.permute.xlu0 %5371
        %5374 = vset.pattern.permute.xlu0 6
        %5375 = vperm.xlu0 %5374, %v632
        %v5376 = vpop.permute.xlu0 %5375
        %5378 = vset.pattern.permute.xlu0 6
        %5379 = vperm.xlu0 %5378, %v633
        %v5380 = vpop.permute.xlu0 %5379
        %5382 = vset.pattern.permute.xlu0 6
        %5383 = vperm.xlu0 %5382, %v634
        %v5384 = vpop.permute.xlu0 %5383
        %5386 = vset.pattern.permute.xlu0 6
        %5387 = vperm.xlu0 %5386, %v635
        %v5388 = vpop.permute.xlu0 %5387
        %5390 = vset.pattern.permute.xlu0 6
        %5391 = vperm.xlu0 %5390, %v636
        %v5392 = vpop.permute.xlu0 %5391
        %5394 = vset.pattern.permute.xlu0 6
        %5395 = vperm.xlu0 %5394, %v637
        %v5396 = vpop.permute.xlu0 %5395
        %5398 = vset.pattern.permute.xlu0 6
        %5399 = vperm.xlu0 %5398, %v638
        %v5400 = vpop.permute.xlu0 %5399
        %5402 = vset.pattern.permute.xlu0 6
        %5403 = vperm.xlu0 %5402, %v639
        %v5404 = vpop.permute.xlu0 %5403
        %5406 = vset.pattern.permute.xlu0 6
        %5407 = vperm.xlu0 %5406, %v640
        %v5408 = vpop.permute.xlu0 %5407
        %5410 = vset.pattern.permute.xlu0 6
        %5411 = vperm.xlu0 %5410, %v641
        %v5412 = vpop.permute.xlu0 %5411
        %5414 = vset.pattern.permute.xlu0 6
        %5415 = vperm.xlu0 %5414, %v642
        %v5416 = vpop.permute.xlu0 %5415
        %5418 = vset.pattern.permute.xlu0 6
        %5419 = vperm.xlu0 %5418, %v643
        %v5420 = vpop.permute.xlu0 %5419
        %5422 = vset.pattern.permute.xlu0 6
        %5423 = vperm.xlu0 %5422, %v644
        %v5424 = vpop.permute.xlu0 %5423
        %5426 = vset.pattern.permute.xlu0 6
        %5427 = vperm.xlu0 %5426, %v645
        %v5428 = vpop.permute.xlu0 %5427
        %5430 = vset.pattern.permute.xlu0 6
        %5431 = vperm.xlu0 %5430, %v646
        %v5432 = vpop.permute.xlu0 %5431
        %5434 = vset.pattern.permute.xlu0 6
        %5435 = vperm.xlu0 %5434, %v647
        %v5436 = vpop.permute.xlu0 %5435
        %5438 = vset.pattern.permute.xlu0 6
        %5439 = vperm.xlu0 %5438, %v648
        %v5440 = vpop.permute.xlu0 %5439
        %5442 = vset.pattern.permute.xlu0 6
        %5443 = vperm.xlu0 %5442, %v649
        %v5444 = vpop.permute.xlu0 %5443
        %5446 = vset.pattern.permute.xlu0 6
        %5447 = vperm.xlu0 %5446, %v650
        %v5448 = vpop.permute.xlu0 %5447
        %5450 = vset.pattern.permute.xlu0 6
        %5451 = vperm.xlu0 %5450, %v651
        %v5452 = vpop.permute.xlu0 %5451
        %5454 = vset.pattern.permute.xlu0 6
        %5455 = vperm.xlu0 %5454, %v652
        %v5456 = vpop.permute.xlu0 %5455
        %5458 = vset.pattern.permute.xlu0 6
        %5459 = vperm.xlu0 %5458, %v653
        %v5460 = vpop.permute.xlu0 %5459
        %5462 = vset.pattern.permute.xlu0 6
        %5463 = vperm.xlu0 %5462, %v654
        %v5464 = vpop.permute.xlu0 %5463
        %5466 = vset.pattern.permute.xlu0 6
        %5467 = vperm.xlu0 %5466, %v655
        %v5468 = vpop.permute.xlu0 %5467
        %5470 = vset.pattern.permute.xlu0 6
        %5471 = vperm.xlu0 %5470, %v656
        %v5472 = vpop.permute.xlu0 %5471
        %5474 = vset.pattern.permute.xlu0 6
        %5475 = vperm.xlu0 %5474, %v657
        %v5476 = vpop.permute.xlu0 %5475
        %5478 = vset.pattern.permute.xlu0 6
        %5479 = vperm.xlu0 %5478, %v658
        %v5480 = vpop.permute.xlu0 %5479
        %5482 = vset.pattern.permute.xlu0 6
        %5483 = vperm.xlu0 %5482, %v659
        %v5484 = vpop.permute.xlu0 %5483
        %5486 = vset.pattern.permute.xlu0 6
        %5487 = vperm.xlu0 %5486, %v660
        %v5488 = vpop.permute.xlu0 %5487
        %5490 = vset.pattern.permute.xlu0 6
        %5491 = vperm.xlu0 %5490, %v661
        %v5492 = vpop.permute.xlu0 %5491
        %5494 = vset.pattern.permute.xlu0 6
        %5495 = vperm.xlu0 %5494, %v662
        %v5496 = vpop.permute.xlu0 %5495
        %5498 = vset.pattern.permute.xlu0 6
        %5499 = vperm.xlu0 %5498, %v663
        %v5500 = vpop.permute.xlu0 %5499
        %5502 = vset.pattern.permute.xlu0 6
        %5503 = vperm.xlu0 %5502, %v664
        %v5504 = vpop.permute.xlu0 %5503
        %5506 = vset.pattern.permute.xlu0 6
        %5507 = vperm.xlu0 %5506, %v665
        %v5508 = vpop.permute.xlu0 %5507
        %5510 = vset.pattern.permute.xlu0 6
        %5511 = vperm.xlu0 %5510, %v666
        %v5512 = vpop.permute.xlu0 %5511
        %5514 = vset.pattern.permute.xlu0 6
        %5515 = vperm.xlu0 %5514, %v667
        %v5516 = vpop.permute.xlu0 %5515
        %5518 = vset.pattern.permute.xlu0 6
        %5519 = vperm.xlu0 %5518, %v668
        %v5520 = vpop.permute.xlu0 %5519
        %5522 = vset.pattern.permute.xlu0 6
        %5523 = vperm.xlu0 %5522, %v669
        %v5524 = vpop.permute.xlu0 %5523
        %5526 = vset.pattern.permute.xlu0 6
        %5527 = vperm.xlu0 %5526, %v670
        %v5528 = vpop.permute.xlu0 %5527
        %5530 = vset.pattern.permute.xlu0 6
        %5531 = vperm.xlu0 %5530, %v671
        %v5532 = vpop.permute.xlu0 %5531
        %5534 = vset.pattern.permute.xlu0 6
        %5535 = vperm.xlu0 %5534, %v672
        %v5536 = vpop.permute.xlu0 %5535
        %5538 = vset.pattern.permute.xlu0 6
        %5539 = vperm.xlu0 %5538, %v673
        %v5540 = vpop.permute.xlu0 %5539
        %5542 = vset.pattern.permute.xlu0 6
        %5543 = vperm.xlu0 %5542, %v674
        %v5544 = vpop.permute.xlu0 %5543
        %5546 = vset.pattern.permute.xlu0 6
        %5547 = vperm.xlu0 %5546, %v675
        %v5548 = vpop.permute.xlu0 %5547
        %5550 = vset.pattern.permute.xlu0 6
        %5551 = vperm.xlu0 %5550, %v676
        %v5552 = vpop.permute.xlu0 %5551
        %5554 = vset.pattern.permute.xlu0 6
        %5555 = vperm.xlu0 %5554, %v677
        %v5556 = vpop.permute.xlu0 %5555
        %v5558 = vadd.f32 %v5238, %v5304
        %v5559 = vadd.f32 %v5239, %v5308
        %v5560 = vadd.f32 %v5240, %v5312
        %v5561 = vadd.f32 %v5241, %v5316
        %v5562 = vadd.f32 %v5242, %v5320
        %v5563 = vadd.f32 %v5243, %v5324
        %v5564 = vadd.f32 %v5244, %v5328
        %v5565 = vadd.f32 %v5245, %v5332
        %v5566 = vadd.f32 %v5246, %v5336
        %v5567 = vadd.f32 %v5247, %v5340
        %v5568 = vadd.f32 %v5248, %v5344
        %v5569 = vadd.f32 %v5249, %v5348
        %v5570 = vadd.f32 %v5250, %v5352
        %v5571 = vadd.f32 %v5251, %v5356
        %v5572 = vadd.f32 %v5252, %v5360
        %v5573 = vadd.f32 %v5253, %v5364
        %v5574 = vadd.f32 %v5254, %v5368
        %v5575 = vadd.f32 %v5255, %v5372
        %v5576 = vadd.f32 %v5256, %v5376
        %v5577 = vadd.f32 %v5257, %v5380
        %v5578 = vadd.f32 %v5258, %v5384
        %v5579 = vadd.f32 %v5259, %v5388
        %v5580 = vadd.f32 %v5260, %v5392
        %v5581 = vadd.f32 %v5261, %v5396
        %v5582 = vadd.f32 %v5262, %v5400
        %v5583 = vadd.f32 %v5263, %v5404
        %v5584 = vadd.f32 %v5264, %v5408
        %v5585 = vadd.f32 %v5265, %v5412
        %v5586 = vadd.f32 %v5266, %v5416
        %v5587 = vadd.f32 %v5267, %v5420
        %v5588 = vadd.f32 %v5268, %v5424
        %v5589 = vadd.f32 %v5269, %v5428
        %v5590 = vadd.f32 %v5270, %v5432
        %v5591 = vadd.f32 %v5271, %v5436
        %v5592 = vadd.f32 %v5272, %v5440
        %v5593 = vadd.f32 %v5273, %v5444
        %v5594 = vadd.f32 %v5274, %v5448
        %v5595 = vadd.f32 %v5275, %v5452
        %v5596 = vadd.f32 %v5276, %v5456
        %v5597 = vadd.f32 %v5277, %v5460
        %v5598 = vadd.f32 %v5278, %v5464
        %v5599 = vadd.f32 %v5279, %v5468
        %v5600 = vadd.f32 %v5280, %v5472
        %v5601 = vadd.f32 %v5281, %v5476
        %v5602 = vadd.f32 %v5282, %v5480
        %v5603 = vadd.f32 %v5283, %v5484
        %v5604 = vadd.f32 %v5284, %v5488
        %v5605 = vadd.f32 %v5285, %v5492
        %v5606 = vadd.f32 %v5286, %v5496
        %v5607 = vadd.f32 %v5287, %v5500
        %v5608 = vadd.f32 %v5288, %v5504
        %v5609 = vadd.f32 %v5289, %v5508
        %v5610 = vadd.f32 %v5290, %v5512
        %v5611 = vadd.f32 %v5291, %v5516
        %v5612 = vadd.f32 %v5292, %v5520
        %v5613 = vadd.f32 %v5293, %v5524
        %v5614 = vadd.f32 %v5294, %v5528
        %v5615 = vadd.f32 %v5295, %v5532
        %v5616 = vadd.f32 %v5296, %v5536
        %v5617 = vadd.f32 %v5297, %v5540
        %v5618 = vadd.f32 %v5298, %v5544
        %v5619 = vadd.f32 %v5299, %v5548
        %v5620 = vadd.f32 %v5300, %v5552
        %v5621 = vadd.f32 %v5301, %v5556
        %v5622 = vld [vmem:[#allocation3] sm:$0xff]
        %v5623 = vld [vmem:[#allocation3 + $0x8] sm:$0xff]
        %v5624 = vld [vmem:[#allocation3 + $0x10] sm:$0xff]
        %v5625 = vld [vmem:[#allocation3 + $0x18] sm:$0xff]
        %v5626 = vld [vmem:[#allocation3 + $0x20] sm:$0xff]
        %v5627 = vld [vmem:[#allocation3 + $0x28] sm:$0xff]
        %v5628 = vld [vmem:[#allocation3 + $0x30] sm:$0xff]
        %v5629 = vld [vmem:[#allocation3 + $0x38] sm:$0xff]
        %v5630 = vld [vmem:[#allocation3 + $0x40] sm:$0xff]
        %v5631 = vld [vmem:[#allocation3 + $0x48] sm:$0xff]
        %v5632 = vld [vmem:[#allocation3 + $0x50] sm:$0xff]
        %v5633 = vld [vmem:[#allocation3 + $0x58] sm:$0xff]
        %v5634 = vld [vmem:[#allocation3 + $0x60] sm:$0xff]
        %v5635 = vld [vmem:[#allocation3 + $0x68] sm:$0xff]
        %v5636 = vld [vmem:[#allocation3 + $0x70] sm:$0xff]
        %v5637 = vld [vmem:[#allocation3 + $0x78] sm:$0xff]
        %v5638 = vld [vmem:[#allocation3 + $0x80] sm:$0xff]
        %v5639 = vld [vmem:[#allocation3 + $0x88] sm:$0xff]
        %v5640 = vld [vmem:[#allocation3 + $0x90] sm:$0xff]
        %v5641 = vld [vmem:[#allocation3 + $0x98] sm:$0xff]
        %v5642 = vld [vmem:[#allocation3 + $0xa0] sm:$0xff]
        %v5643 = vld [vmem:[#allocation3 + $0xa8] sm:$0xff]
        %v5644 = vld [vmem:[#allocation3 + $0xb0] sm:$0xff]
        %v5645 = vld [vmem:[#allocation3 + $0xb8] sm:$0xff]
        %v5646 = vld [vmem:[#allocation3 + $0xc0] sm:$0xff]
        %v5647 = vld [vmem:[#allocation3 + $0xc8] sm:$0xff]
        %v5648 = vld [vmem:[#allocation3 + $0xd0] sm:$0xff]
        %v5649 = vld [vmem:[#allocation3 + $0xd8] sm:$0xff]
        %v5650 = vld [vmem:[#allocation3 + $0xe0] sm:$0xff]
        %v5651 = vld [vmem:[#allocation3 + $0xe8] sm:$0xff]
        %v5652 = vld [vmem:[#allocation3 + $0xf0] sm:$0xff]
        %v5653 = vld [vmem:[#allocation3 + $0xf8] sm:$0xff]
        %v5654 = vld [vmem:[#allocation3 + $0x100] sm:$0xff]
        %v5655 = vld [vmem:[#allocation3 + $0x108] sm:$0xff]
        %v5656 = vld [vmem:[#allocation3 + $0x110] sm:$0xff]
        %v5657 = vld [vmem:[#allocation3 + $0x118] sm:$0xff]
        %v5658 = vld [vmem:[#allocation3 + $0x120] sm:$0xff]
        %v5659 = vld [vmem:[#allocation3 + $0x128] sm:$0xff]
        %v5660 = vld [vmem:[#allocation3 + $0x130] sm:$0xff]
        %v5661 = vld [vmem:[#allocation3 + $0x138] sm:$0xff]
        %v5662 = vld [vmem:[#allocation3 + $0x140] sm:$0xff]
        %v5663 = vld [vmem:[#allocation3 + $0x148] sm:$0xff]
        %v5664 = vld [vmem:[#allocation3 + $0x150] sm:$0xff]
        %v5665 = vld [vmem:[#allocation3 + $0x158] sm:$0xff]
        %v5666 = vld [vmem:[#allocation3 + $0x160] sm:$0xff]
        %v5667 = vld [vmem:[#allocation3 + $0x168] sm:$0xff]
        %v5668 = vld [vmem:[#allocation3 + $0x170] sm:$0xff]
        %v5669 = vld [vmem:[#allocation3 + $0x178] sm:$0xff]
        %v5670 = vld [vmem:[#allocation3 + $0x180] sm:$0xff]
        %v5671 = vld [vmem:[#allocation3 + $0x188] sm:$0xff]
        %v5672 = vld [vmem:[#allocation3 + $0x190] sm:$0xff]
        %v5673 = vld [vmem:[#allocation3 + $0x198] sm:$0xff]
        %v5674 = vld [vmem:[#allocation3 + $0x1a0] sm:$0xff]
        %v5675 = vld [vmem:[#allocation3 + $0x1a8] sm:$0xff]
        %v5676 = vld [vmem:[#allocation3 + $0x1b0] sm:$0xff]
        %v5677 = vld [vmem:[#allocation3 + $0x1b8] sm:$0xff]
        %v5678 = vld [vmem:[#allocation3 + $0x1c0] sm:$0xff]
        %v5679 = vld [vmem:[#allocation3 + $0x1c8] sm:$0xff]
        %v5680 = vld [vmem:[#allocation3 + $0x1d0] sm:$0xff]
        %v5681 = vld [vmem:[#allocation3 + $0x1d8] sm:$0xff]
        %v5682 = vld [vmem:[#allocation3 + $0x1e0] sm:$0xff]
        %v5683 = vld [vmem:[#allocation3 + $0x1e8] sm:$0xff]
        %v5684 = vld [vmem:[#allocation3 + $0x1f0] sm:$0xff]
        %v5685 = vld [vmem:[#allocation3 + $0x1f8] sm:$0xff]
        %v5686 = vld [vmem:[#allocation3 + $0x200] sm:$0xff]
        %v5687 = vld [vmem:[#allocation3 + $0x208] sm:$0xff]
        %v5688 = vld [vmem:[#allocation3 + $0x210] sm:$0xff]
        %v5689 = vld [vmem:[#allocation3 + $0x218] sm:$0xff]
        %v5690 = vld [vmem:[#allocation3 + $0x220] sm:$0xff]
        %v5691 = vld [vmem:[#allocation3 + $0x228] sm:$0xff]
        %v5692 = vld [vmem:[#allocation3 + $0x230] sm:$0xff]
        %v5693 = vld [vmem:[#allocation3 + $0x238] sm:$0xff]
        %v5694 = vld [vmem:[#allocation3 + $0x240] sm:$0xff]
        %v5695 = vld [vmem:[#allocation3 + $0x248] sm:$0xff]
        %v5696 = vld [vmem:[#allocation3 + $0x250] sm:$0xff]
        %v5697 = vld [vmem:[#allocation3 + $0x258] sm:$0xff]
        %v5698 = vld [vmem:[#allocation3 + $0x260] sm:$0xff]
        %v5699 = vld [vmem:[#allocation3 + $0x268] sm:$0xff]
        %v5700 = vld [vmem:[#allocation3 + $0x270] sm:$0xff]
        %v5701 = vld [vmem:[#allocation3 + $0x278] sm:$0xff]
        %v5702 = vld [vmem:[#allocation3 + $0x280] sm:$0xff]
        %v5703 = vld [vmem:[#allocation3 + $0x288] sm:$0xff]
        %v5704 = vld [vmem:[#allocation3 + $0x290] sm:$0xff]
        %v5705 = vld [vmem:[#allocation3 + $0x298] sm:$0xff]
        %v5706 = vld [vmem:[#allocation3 + $0x2a0] sm:$0xff]
        %v5707 = vld [vmem:[#allocation3 + $0x2a8] sm:$0xff]
        %v5708 = vld [vmem:[#allocation3 + $0x2b0] sm:$0xff]
        %v5709 = vld [vmem:[#allocation3 + $0x2b8] sm:$0xff]
        %v5710 = vld [vmem:[#allocation3 + $0x2c0] sm:$0xff]
        %v5711 = vld [vmem:[#allocation3 + $0x2c8] sm:$0xff]
        %v5712 = vld [vmem:[#allocation3 + $0x2d0] sm:$0xff]
        %v5713 = vld [vmem:[#allocation3 + $0x2d8] sm:$0xff]
        %v5714 = vld [vmem:[#allocation3 + $0x2e0] sm:$0xff]
        %v5715 = vld [vmem:[#allocation3 + $0x2e8] sm:$0xff]
        %v5716 = vld [vmem:[#allocation3 + $0x2f0] sm:$0xff]
        %v5717 = vld [vmem:[#allocation3 + $0x2f8] sm:$0xff]
        %v5718 = vld [vmem:[#allocation3 + $0x300] sm:$0xff]
        %v5719 = vld [vmem:[#allocation3 + $0x308] sm:$0xff]
        %v5720 = vld [vmem:[#allocation3 + $0x310] sm:$0xff]
        %v5721 = vld [vmem:[#allocation3 + $0x318] sm:$0xff]
        %v5722 = vld [vmem:[#allocation3 + $0x320] sm:$0xff]
        %v5723 = vld [vmem:[#allocation3 + $0x328] sm:$0xff]
        %v5724 = vld [vmem:[#allocation3 + $0x330] sm:$0xff]
        %v5725 = vld [vmem:[#allocation3 + $0x338] sm:$0xff]
        %v5726 = vld [vmem:[#allocation3 + $0x340] sm:$0xff]
        %v5727 = vld [vmem:[#allocation3 + $0x348] sm:$0xff]
        %v5728 = vld [vmem:[#allocation3 + $0x350] sm:$0xff]
        %v5729 = vld [vmem:[#allocation3 + $0x358] sm:$0xff]
        %v5730 = vld [vmem:[#allocation3 + $0x360] sm:$0xff]
        %v5731 = vld [vmem:[#allocation3 + $0x368] sm:$0xff]
        %v5732 = vld [vmem:[#allocation3 + $0x370] sm:$0xff]
        %v5733 = vld [vmem:[#allocation3 + $0x378] sm:$0xff]
        %v5734 = vld [vmem:[#allocation3 + $0x380] sm:$0xff]
        %v5735 = vld [vmem:[#allocation3 + $0x388] sm:$0xff]
        %v5736 = vld [vmem:[#allocation3 + $0x390] sm:$0xff]
        %v5737 = vld [vmem:[#allocation3 + $0x398] sm:$0xff]
        %v5738 = vld [vmem:[#allocation3 + $0x3a0] sm:$0xff]
        %v5739 = vld [vmem:[#allocation3 + $0x3a8] sm:$0xff]
        %v5740 = vld [vmem:[#allocation3 + $0x3b0] sm:$0xff]
        %v5741 = vld [vmem:[#allocation3 + $0x3b8] sm:$0xff]
        %v5742 = vld [vmem:[#allocation3 + $0x3c0] sm:$0xff]
        %v5743 = vld [vmem:[#allocation3 + $0x3c8] sm:$0xff]
        %v5744 = vld [vmem:[#allocation3 + $0x3d0] sm:$0xff]
        %v5745 = vld [vmem:[#allocation3 + $0x3d8] sm:$0xff]
        %v5746 = vld [vmem:[#allocation3 + $0x3e0] sm:$0xff]
        %v5747 = vld [vmem:[#allocation3 + $0x3e8] sm:$0xff]
        %v5748 = vld [vmem:[#allocation3 + $0x3f0] sm:$0xff]
        %v5749 = vld [vmem:[#allocation3 + $0x3f8] sm:$0xff]
        %v5750 = vpack.c.bf16 %v5559, %v5558
        %v5751 = vpack.c.bf16 %v5561, %v5560
        %v5752 = vpack.c.bf16 %v5563, %v5562
        %v5753 = vpack.c.bf16 %v5565, %v5564
        %v5754 = vpack.c.bf16 %v5567, %v5566
        %v5755 = vpack.c.bf16 %v5569, %v5568
        %v5756 = vpack.c.bf16 %v5571, %v5570
        %v5757 = vpack.c.bf16 %v5573, %v5572
        %v5758 = vpack.c.bf16 %v5575, %v5574
        %v5759 = vpack.c.bf16 %v5577, %v5576
        %v5760 = vpack.c.bf16 %v5579, %v5578
        %v5761 = vpack.c.bf16 %v5581, %v5580
        %v5762 = vpack.c.bf16 %v5583, %v5582
        %v5763 = vpack.c.bf16 %v5585, %v5584
        %v5764 = vpack.c.bf16 %v5587, %v5586
        %v5765 = vpack.c.bf16 %v5589, %v5588
        %v5766 = vpack.c.bf16 %v5591, %v5590
        %v5767 = vpack.c.bf16 %v5593, %v5592
        %v5768 = vpack.c.bf16 %v5595, %v5594
        %v5769 = vpack.c.bf16 %v5597, %v5596
        %v5770 = vpack.c.bf16 %v5599, %v5598
        %v5771 = vpack.c.bf16 %v5601, %v5600
        %v5772 = vpack.c.bf16 %v5603, %v5602
        %v5773 = vpack.c.bf16 %v5605, %v5604
        %v5774 = vpack.c.bf16 %v5607, %v5606
        %v5775 = vpack.c.bf16 %v5609, %v5608
        %v5776 = vpack.c.bf16 %v5611, %v5610
        %v5777 = vpack.c.bf16 %v5613, %v5612
        %v5778 = vpack.c.bf16 %v5615, %v5614
        %v5779 = vpack.c.bf16 %v5617, %v5616
        %v5780 = vpack.c.bf16 %v5619, %v5618
        %v5781 = vpack.c.bf16 %v5621, %v5620
        %v5910 = vunpack.c.l.b16 %v5622
        %v5911 = vunpack.c.h.b16 %v5622
        %v5912 = vunpack.c.l.b16 %v5623
        %v5913 = vunpack.c.h.b16 %v5623
        %v5914 = vunpack.c.l.b16 %v5624
        %v5915 = vunpack.c.h.b16 %v5624
        %v5916 = vunpack.c.l.b16 %v5625
        %v5917 = vunpack.c.h.b16 %v5625
        %v5918 = vunpack.c.l.b16 %v5626
        %v5919 = vunpack.c.h.b16 %v5626
        %v5920 = vunpack.c.l.b16 %v5627
        %v5921 = vunpack.c.h.b16 %v5627
        %v5922 = vunpack.c.l.b16 %v5628
        %v5923 = vunpack.c.h.b16 %v5628
        %v5924 = vunpack.c.l.b16 %v5629
        %v5925 = vunpack.c.h.b16 %v5629
        %v5926 = vunpack.c.l.b16 %v5630
        %v5927 = vunpack.c.h.b16 %v5630
        %v5928 = vunpack.c.l.b16 %v5631
        %v5929 = vunpack.c.h.b16 %v5631
        %v5930 = vunpack.c.l.b16 %v5632
        %v5931 = vunpack.c.h.b16 %v5632
        %v5932 = vunpack.c.l.b16 %v5633
        %v5933 = vunpack.c.h.b16 %v5633
        %v5934 = vunpack.c.l.b16 %v5634
        %v5935 = vunpack.c.h.b16 %v5634
        %v5936 = vunpack.c.l.b16 %v5635
        %v5937 = vunpack.c.h.b16 %v5635
        %v5938 = vunpack.c.l.b16 %v5636
        %v5939 = vunpack.c.h.b16 %v5636
        %v5940 = vunpack.c.l.b16 %v5637
        %v5941 = vunpack.c.h.b16 %v5637
        %v5942 = vunpack.c.l.b16 %v5638
        %v5943 = vunpack.c.h.b16 %v5638
        %v5944 = vunpack.c.l.b16 %v5639
        %v5945 = vunpack.c.h.b16 %v5639
        %v5946 = vunpack.c.l.b16 %v5640
        %v5947 = vunpack.c.h.b16 %v5640
        %v5948 = vunpack.c.l.b16 %v5641
        %v5949 = vunpack.c.h.b16 %v5641
        %v5950 = vunpack.c.l.b16 %v5642
        %v5951 = vunpack.c.h.b16 %v5642
        %v5952 = vunpack.c.l.b16 %v5643
        %v5953 = vunpack.c.h.b16 %v5643
        %v5954 = vunpack.c.l.b16 %v5644
        %v5955 = vunpack.c.h.b16 %v5644
        %v5956 = vunpack.c.l.b16 %v5645
        %v5957 = vunpack.c.h.b16 %v5645
        %v5958 = vunpack.c.l.b16 %v5646
        %v5959 = vunpack.c.h.b16 %v5646
        %v5960 = vunpack.c.l.b16 %v5647
        %v5961 = vunpack.c.h.b16 %v5647
        %v5962 = vunpack.c.l.b16 %v5648
        %v5963 = vunpack.c.h.b16 %v5648
        %v5964 = vunpack.c.l.b16 %v5649
        %v5965 = vunpack.c.h.b16 %v5649
        %v5966 = vunpack.c.l.b16 %v5650
        %v5967 = vunpack.c.h.b16 %v5650
        %v5968 = vunpack.c.l.b16 %v5651
        %v5969 = vunpack.c.h.b16 %v5651
        %v5970 = vunpack.c.l.b16 %v5652
        %v5971 = vunpack.c.h.b16 %v5652
        %v5972 = vunpack.c.l.b16 %v5653
        %v5973 = vunpack.c.h.b16 %v5653
        %v5974 = vunpack.c.l.b16 %v5654
        %v5975 = vunpack.c.h.b16 %v5654
        %v5976 = vunpack.c.l.b16 %v5655
        %v5977 = vunpack.c.h.b16 %v5655
        %v5978 = vunpack.c.l.b16 %v5656
        %v5979 = vunpack.c.h.b16 %v5656
        %v5980 = vunpack.c.l.b16 %v5657
        %v5981 = vunpack.c.h.b16 %v5657
        %v5982 = vunpack.c.l.b16 %v5658
        %v5983 = vunpack.c.h.b16 %v5658
        %v5984 = vunpack.c.l.b16 %v5659
        %v5985 = vunpack.c.h.b16 %v5659
        %v5986 = vunpack.c.l.b16 %v5660
        %v5987 = vunpack.c.h.b16 %v5660
        %v5988 = vunpack.c.l.b16 %v5661
        %v5989 = vunpack.c.h.b16 %v5661
        %v5990 = vunpack.c.l.b16 %v5662
        %v5991 = vunpack.c.h.b16 %v5662
        %v5992 = vunpack.c.l.b16 %v5663
        %v5993 = vunpack.c.h.b16 %v5663
        %v5994 = vunpack.c.l.b16 %v5664
        %v5995 = vunpack.c.h.b16 %v5664
        %v5996 = vunpack.c.l.b16 %v5665
        %v5997 = vunpack.c.h.b16 %v5665
        %v5998 = vunpack.c.l.b16 %v5666
        %v5999 = vunpack.c.h.b16 %v5666
        %v6000 = vunpack.c.l.b16 %v5667
        %v6001 = vunpack.c.h.b16 %v5667
        %v6002 = vunpack.c.l.b16 %v5668
        %v6003 = vunpack.c.h.b16 %v5668
        %v6004 = vunpack.c.l.b16 %v5669
        %v6005 = vunpack.c.h.b16 %v5669
        %v6006 = vunpack.c.l.b16 %v5670
        %v6007 = vunpack.c.h.b16 %v5670
        %v6008 = vunpack.c.l.b16 %v5671
        %v6009 = vunpack.c.h.b16 %v5671
        %v6010 = vunpack.c.l.b16 %v5672
        %v6011 = vunpack.c.h.b16 %v5672
        %v6012 = vunpack.c.l.b16 %v5673
        %v6013 = vunpack.c.h.b16 %v5673
        %v6014 = vunpack.c.l.b16 %v5674
        %v6015 = vunpack.c.h.b16 %v5674
        %v6016 = vunpack.c.l.b16 %v5675
        %v6017 = vunpack.c.h.b16 %v5675
        %v6018 = vunpack.c.l.b16 %v5676
        %v6019 = vunpack.c.h.b16 %v5676
        %v6020 = vunpack.c.l.b16 %v5677
        %v6021 = vunpack.c.h.b16 %v5677
        %v6022 = vunpack.c.l.b16 %v5678
        %v6023 = vunpack.c.h.b16 %v5678
        %v6024 = vunpack.c.l.b16 %v5679
        %v6025 = vunpack.c.h.b16 %v5679
        %v6026 = vunpack.c.l.b16 %v5680
        %v6027 = vunpack.c.h.b16 %v5680
        %v6028 = vunpack.c.l.b16 %v5681
        %v6029 = vunpack.c.h.b16 %v5681
        %v6030 = vunpack.c.l.b16 %v5682
        %v6031 = vunpack.c.h.b16 %v5682
        %v6032 = vunpack.c.l.b16 %v5683
        %v6033 = vunpack.c.h.b16 %v5683
        %v6034 = vunpack.c.l.b16 %v5684
        %v6035 = vunpack.c.h.b16 %v5684
        %v6036 = vunpack.c.l.b16 %v5685
        %v6037 = vunpack.c.h.b16 %v5685
        %v6038 = vunpack.c.l.b16 %v5686
        %v6039 = vunpack.c.h.b16 %v5686
        %v6040 = vunpack.c.l.b16 %v5687
        %v6041 = vunpack.c.h.b16 %v5687
        %v6042 = vunpack.c.l.b16 %v5688
        %v6043 = vunpack.c.h.b16 %v5688
        %v6044 = vunpack.c.l.b16 %v5689
        %v6045 = vunpack.c.h.b16 %v5689
        %v6046 = vunpack.c.l.b16 %v5690
        %v6047 = vunpack.c.h.b16 %v5690
        %v6048 = vunpack.c.l.b16 %v5691
        %v6049 = vunpack.c.h.b16 %v5691
        %v6050 = vunpack.c.l.b16 %v5692
        %v6051 = vunpack.c.h.b16 %v5692
        %v6052 = vunpack.c.l.b16 %v5693
        %v6053 = vunpack.c.h.b16 %v5693
        %v6054 = vunpack.c.l.b16 %v5694
        %v6055 = vunpack.c.h.b16 %v5694
        %v6056 = vunpack.c.l.b16 %v5695
        %v6057 = vunpack.c.h.b16 %v5695
        %v6058 = vunpack.c.l.b16 %v5696
        %v6059 = vunpack.c.h.b16 %v5696
        %v6060 = vunpack.c.l.b16 %v5697
        %v6061 = vunpack.c.h.b16 %v5697
        %v6062 = vunpack.c.l.b16 %v5698
        %v6063 = vunpack.c.h.b16 %v5698
        %v6064 = vunpack.c.l.b16 %v5699
        %v6065 = vunpack.c.h.b16 %v5699
        %v6066 = vunpack.c.l.b16 %v5700
        %v6067 = vunpack.c.h.b16 %v5700
        %v6068 = vunpack.c.l.b16 %v5701
        %v6069 = vunpack.c.h.b16 %v5701
        %v6070 = vunpack.c.l.b16 %v5702
        %v6071 = vunpack.c.h.b16 %v5702
        %v6072 = vunpack.c.l.b16 %v5703
        %v6073 = vunpack.c.h.b16 %v5703
        %v6074 = vunpack.c.l.b16 %v5704
        %v6075 = vunpack.c.h.b16 %v5704
        %v6076 = vunpack.c.l.b16 %v5705
        %v6077 = vunpack.c.h.b16 %v5705
        %v6078 = vunpack.c.l.b16 %v5706
        %v6079 = vunpack.c.h.b16 %v5706
        %v6080 = vunpack.c.l.b16 %v5707
        %v6081 = vunpack.c.h.b16 %v5707
        %v6082 = vunpack.c.l.b16 %v5708
        %v6083 = vunpack.c.h.b16 %v5708
        %v6084 = vunpack.c.l.b16 %v5709
        %v6085 = vunpack.c.h.b16 %v5709
        %v6086 = vunpack.c.l.b16 %v5710
        %v6087 = vunpack.c.h.b16 %v5710
        %v6088 = vunpack.c.l.b16 %v5711
        %v6089 = vunpack.c.h.b16 %v5711
        %v6090 = vunpack.c.l.b16 %v5712
        %v6091 = vunpack.c.h.b16 %v5712
        %v6092 = vunpack.c.l.b16 %v5713
        %v6093 = vunpack.c.h.b16 %v5713
        %v6094 = vunpack.c.l.b16 %v5714
        %v6095 = vunpack.c.h.b16 %v5714
        %v6096 = vunpack.c.l.b16 %v5715
        %v6097 = vunpack.c.h.b16 %v5715
        %v6098 = vunpack.c.l.b16 %v5716
        %v6099 = vunpack.c.h.b16 %v5716
        %v6100 = vunpack.c.l.b16 %v5717
        %v6101 = vunpack.c.h.b16 %v5717
        %v6102 = vunpack.c.l.b16 %v5718
        %v6103 = vunpack.c.h.b16 %v5718
        %v6104 = vunpack.c.l.b16 %v5719
        %v6105 = vunpack.c.h.b16 %v5719
        %v6106 = vunpack.c.l.b16 %v5720
        %v6107 = vunpack.c.h.b16 %v5720
        %v6108 = vunpack.c.l.b16 %v5721
        %v6109 = vunpack.c.h.b16 %v5721
        %v6110 = vunpack.c.l.b16 %v5722
        %v6111 = vunpack.c.h.b16 %v5722
        %v6112 = vunpack.c.l.b16 %v5723
        %v6113 = vunpack.c.h.b16 %v5723
        %v6114 = vunpack.c.l.b16 %v5724
        %v6115 = vunpack.c.h.b16 %v5724
        %v6116 = vunpack.c.l.b16 %v5725
        %v6117 = vunpack.c.h.b16 %v5725
        %v6118 = vunpack.c.l.b16 %v5726
        %v6119 = vunpack.c.h.b16 %v5726
        %v6120 = vunpack.c.l.b16 %v5727
        %v6121 = vunpack.c.h.b16 %v5727
        %v6122 = vunpack.c.l.b16 %v5728
        %v6123 = vunpack.c.h.b16 %v5728
        %v6124 = vunpack.c.l.b16 %v5729
        %v6125 = vunpack.c.h.b16 %v5729
        %v6126 = vunpack.c.l.b16 %v5730
        %v6127 = vunpack.c.h.b16 %v5730
        %v6128 = vunpack.c.l.b16 %v5731
        %v6129 = vunpack.c.h.b16 %v5731
        %v6130 = vunpack.c.l.b16 %v5732
        %v6131 = vunpack.c.h.b16 %v5732
        %v6132 = vunpack.c.l.b16 %v5733
        %v6133 = vunpack.c.h.b16 %v5733
        %v6134 = vunpack.c.l.b16 %v5734
        %v6135 = vunpack.c.h.b16 %v5734
        %v6136 = vunpack.c.l.b16 %v5735
        %v6137 = vunpack.c.h.b16 %v5735
        %v6138 = vunpack.c.l.b16 %v5736
        %v6139 = vunpack.c.h.b16 %v5736
        %v6140 = vunpack.c.l.b16 %v5737
        %v6141 = vunpack.c.h.b16 %v5737
        %v6142 = vunpack.c.l.b16 %v5738
        %v6143 = vunpack.c.h.b16 %v5738
        %v6144 = vunpack.c.l.b16 %v5739
        %v6145 = vunpack.c.h.b16 %v5739
        %v6146 = vunpack.c.l.b16 %v5740
        %v6147 = vunpack.c.h.b16 %v5740
        %v6148 = vunpack.c.l.b16 %v5741
        %v6149 = vunpack.c.h.b16 %v5741
        %v6150 = vunpack.c.l.b16 %v5742
        %v6151 = vunpack.c.h.b16 %v5742
        %v6152 = vunpack.c.l.b16 %v5743
        %v6153 = vunpack.c.h.b16 %v5743
        %v6154 = vunpack.c.l.b16 %v5744
        %v6155 = vunpack.c.h.b16 %v5744
        %v6156 = vunpack.c.l.b16 %v5745
        %v6157 = vunpack.c.h.b16 %v5745
        %v6158 = vunpack.c.l.b16 %v5746
        %v6159 = vunpack.c.h.b16 %v5746
        %v6160 = vunpack.c.l.b16 %v5747
        %v6161 = vunpack.c.h.b16 %v5747
        %v6162 = vunpack.c.l.b16 %v5748
        %v6163 = vunpack.c.h.b16 %v5748
        %v6164 = vunpack.c.l.b16 %v5749
        %v6165 = vunpack.c.h.b16 %v5749
        %v6166 = vpack.c.b16 %v5914, %v5910
        %v6167 = vpack.c.b16 %v5915, %v5911
        %v6168 = vpack.c.b16 %v5916, %v5912
        %v6169 = vpack.c.b16 %v5917, %v5913
        %v6170 = vpack.c.b16 %v5922, %v5918
        %v6171 = vpack.c.b16 %v5923, %v5919
        %v6172 = vpack.c.b16 %v5924, %v5920
        %v6173 = vpack.c.b16 %v5925, %v5921
        %v6174 = vpack.c.b16 %v5930, %v5926
        %v6175 = vpack.c.b16 %v5931, %v5927
        %v6176 = vpack.c.b16 %v5932, %v5928
        %v6177 = vpack.c.b16 %v5933, %v5929
        %v6178 = vpack.c.b16 %v5938, %v5934
        %v6179 = vpack.c.b16 %v5939, %v5935
        %v6180 = vpack.c.b16 %v5940, %v5936
        %v6181 = vpack.c.b16 %v5941, %v5937
        %v6182 = vpack.c.b16 %v5946, %v5942
        %v6183 = vpack.c.b16 %v5947, %v5943
        %v6184 = vpack.c.b16 %v5948, %v5944
        %v6185 = vpack.c.b16 %v5949, %v5945
        %v6186 = vpack.c.b16 %v5954, %v5950
        %v6187 = vpack.c.b16 %v5955, %v5951
        %v6188 = vpack.c.b16 %v5956, %v5952
        %v6189 = vpack.c.b16 %v5957, %v5953
        %v6190 = vpack.c.b16 %v5962, %v5958
        %v6191 = vpack.c.b16 %v5963, %v5959
        %v6192 = vpack.c.b16 %v5964, %v5960
        %v6193 = vpack.c.b16 %v5965, %v5961
        %v6194 = vpack.c.b16 %v5970, %v5966
        %v6195 = vpack.c.b16 %v5971, %v5967
        %v6196 = vpack.c.b16 %v5972, %v5968
        %v6197 = vpack.c.b16 %v5973, %v5969
        %v6198 = vpack.c.b16 %v5978, %v5974
        %v6199 = vpack.c.b16 %v5979, %v5975
        %v6200 = vpack.c.b16 %v5980, %v5976
        %v6201 = vpack.c.b16 %v5981, %v5977
        %v6202 = vpack.c.b16 %v5986, %v5982
        %v6203 = vpack.c.b16 %v5987, %v5983
        %v6204 = vpack.c.b16 %v5988, %v5984
        %v6205 = vpack.c.b16 %v5989, %v5985
        %v6206 = vpack.c.b16 %v5994, %v5990
        %v6207 = vpack.c.b16 %v5995, %v5991
        %v6208 = vpack.c.b16 %v5996, %v5992
        %v6209 = vpack.c.b16 %v5997, %v5993
        %v6210 = vpack.c.b16 %v6002, %v5998
        %v6211 = vpack.c.b16 %v6003, %v5999
        %v6212 = vpack.c.b16 %v6004, %v6000
        %v6213 = vpack.c.b16 %v6005, %v6001
        %v6214 = vpack.c.b16 %v6010, %v6006
        %v6215 = vpack.c.b16 %v6011, %v6007
        %v6216 = vpack.c.b16 %v6012, %v6008
        %v6217 = vpack.c.b16 %v6013, %v6009
        %v6218 = vpack.c.b16 %v6018, %v6014
        %v6219 = vpack.c.b16 %v6019, %v6015
        %v6220 = vpack.c.b16 %v6020, %v6016
        %v6221 = vpack.c.b16 %v6021, %v6017
        %v6222 = vpack.c.b16 %v6026, %v6022
        %v6223 = vpack.c.b16 %v6027, %v6023
        %v6224 = vpack.c.b16 %v6028, %v6024
        %v6225 = vpack.c.b16 %v6029, %v6025
        %v6226 = vpack.c.b16 %v6034, %v6030
        %v6227 = vpack.c.b16 %v6035, %v6031
        %v6228 = vpack.c.b16 %v6036, %v6032
        %v6229 = vpack.c.b16 %v6037, %v6033
        %v6230 = vpack.c.b16 %v6042, %v6038
        %v6231 = vpack.c.b16 %v6043, %v6039
        %v6232 = vpack.c.b16 %v6044, %v6040
        %v6233 = vpack.c.b16 %v6045, %v6041
        %v6234 = vpack.c.b16 %v6050, %v6046
        %v6235 = vpack.c.b16 %v6051, %v6047
        %v6236 = vpack.c.b16 %v6052, %v6048
        %v6237 = vpack.c.b16 %v6053, %v6049
        %v6238 = vpack.c.b16 %v6058, %v6054
        %v6239 = vpack.c.b16 %v6059, %v6055
        %v6240 = vpack.c.b16 %v6060, %v6056
        %v6241 = vpack.c.b16 %v6061, %v6057
        %v6242 = vpack.c.b16 %v6066, %v6062
        %v6243 = vpack.c.b16 %v6067, %v6063
        %v6244 = vpack.c.b16 %v6068, %v6064
        %v6245 = vpack.c.b16 %v6069, %v6065
        %v6246 = vpack.c.b16 %v6074, %v6070
        %v6247 = vpack.c.b16 %v6075, %v6071
        %v6248 = vpack.c.b16 %v6076, %v6072
        %v6249 = vpack.c.b16 %v6077, %v6073
        %v6250 = vpack.c.b16 %v6082, %v6078
        %v6251 = vpack.c.b16 %v6083, %v6079
        %v6252 = vpack.c.b16 %v6084, %v6080
        %v6253 = vpack.c.b16 %v6085, %v6081
        %v6254 = vpack.c.b16 %v6090, %v6086
        %v6255 = vpack.c.b16 %v6091, %v6087
        %v6256 = vpack.c.b16 %v6092, %v6088
        %v6257 = vpack.c.b16 %v6093, %v6089
        %v6258 = vpack.c.b16 %v6098, %v6094
        %v6259 = vpack.c.b16 %v6099, %v6095
        %v6260 = vpack.c.b16 %v6100, %v6096
        %v6261 = vpack.c.b16 %v6101, %v6097
        %v6262 = vpack.c.b16 %v6106, %v6102
        %v6263 = vpack.c.b16 %v6107, %v6103
        %v6264 = vpack.c.b16 %v6108, %v6104
        %v6265 = vpack.c.b16 %v6109, %v6105
        %v6266 = vpack.c.b16 %v6114, %v6110
        %v6267 = vpack.c.b16 %v6115, %v6111
        %v6268 = vpack.c.b16 %v6116, %v6112
        %v6269 = vpack.c.b16 %v6117, %v6113
        %v6270 = vpack.c.b16 %v6122, %v6118
        %v6271 = vpack.c.b16 %v6123, %v6119
        %v6272 = vpack.c.b16 %v6124, %v6120
        %v6273 = vpack.c.b16 %v6125, %v6121
        %v6274 = vpack.c.b16 %v6130, %v6126
        %v6275 = vpack.c.b16 %v6131, %v6127
        %v6276 = vpack.c.b16 %v6132, %v6128
        %v6277 = vpack.c.b16 %v6133, %v6129
        %v6278 = vpack.c.b16 %v6138, %v6134
        %v6279 = vpack.c.b16 %v6139, %v6135
        %v6280 = vpack.c.b16 %v6140, %v6136
        %v6281 = vpack.c.b16 %v6141, %v6137
        %v6282 = vpack.c.b16 %v6146, %v6142
        %v6283 = vpack.c.b16 %v6147, %v6143
        %v6284 = vpack.c.b16 %v6148, %v6144
        %v6285 = vpack.c.b16 %v6149, %v6145
        %v6286 = vpack.c.b16 %v6154, %v6150
        %v6287 = vpack.c.b16 %v6155, %v6151
        %v6288 = vpack.c.b16 %v6156, %v6152
        %v6289 = vpack.c.b16 %v6157, %v6153
        %v6290 = vpack.c.b16 %v6162, %v6158
        %v6291 = vpack.c.b16 %v6163, %v6159
        %v6292 = vpack.c.b16 %v6164, %v6160
        %v6293 = vpack.c.b16 %v6165, %v6161
        %6422 = vmatprep.subr.bf16.mxu0 0
        %6423 = vmatpush1.bf16.msra.mxu0 %v5750
        %6424 = vmatprep.subr.bf16.mxu0 0
        %6425 = vmatpush1.bf16.msra.mxu0 %v5751
        %6426 = vmatprep.subr.bf16.mxu0 0
        %6427 = vmatpush1.bf16.msra.mxu0 %v5752
        %6428 = vmatprep.subr.bf16.mxu0 0
        %6429 = vmatpush1.bf16.msra.mxu0 %v5753
        %6430 = vmatprep.subr.bf16.mxu0 0
        %6431 = vmatpush1.bf16.msra.mxu0 %v5754
        %6432 = vmatprep.subr.bf16.mxu0 0
        %6433 = vmatpush1.bf16.msra.mxu0 %v5755
        %6434 = vmatprep.subr.bf16.mxu0 0
        %6435 = vmatpush1.bf16.msra.mxu0 %v5756
        %6436 = vmatprep.subr.bf16.mxu0 0
        %6437 = vmatpush1.bf16.msra.mxu0 %v5757
        %6438 = vmatprep.subr.bf16.mxu0 0
        %6439 = vmatpush1.bf16.msra.mxu0 %v5758
        %6440 = vmatprep.subr.bf16.mxu0 0
        %6441 = vmatpush1.bf16.msra.mxu0 %v5759
        %6442 = vmatprep.subr.bf16.mxu0 0
        %6443 = vmatpush1.bf16.msra.mxu0 %v5760
        %6444 = vmatprep.subr.bf16.mxu0 0
        %6445 = vmatpush1.bf16.msra.mxu0 %v5761
        %6446 = vmatprep.subr.bf16.mxu0 0
        %6447 = vmatpush1.bf16.msra.mxu0 %v5762
        %6448 = vmatprep.subr.bf16.mxu0 0
        %6449 = vmatpush1.bf16.msra.mxu0 %v5763
        %6450 = vmatprep.subr.bf16.mxu0 0
        %6451 = vmatpush1.bf16.msra.mxu0 %v5764
        %6452 = vmatprep.subr.bf16.mxu0 0
        %6453 = vmatpush1.bf16.msra.mxu0 %v5765
        %6454 = vmatprep.mubr.bf16.mxu0 %v6167
        %6455 = vmatmul.mubr.bf16.gmra.mrb[0].mxu0 %v6166
        %v6456 = vpop.f32.mrb[0].mxu0
        %v6457 = vadd.f32 %v550, %v6456
        %v6458 = vpop.f32.mrb[0].mxu0
        %v6459 = vpop.f32.mrb[0].mxu0
        %v6460 = vadd.f32 %v551, %v6459
        %v6461 = vpop.f32.mrb[0].mxu0
        %6462 = vmatprep.mubr.bf16.mxu0 %v6171
        %6463 = vmatmul.mubr.bf16.gmra.mrb[0].mxu0 %v6170
        %v6464 = vpop.f32.mrb[0].mxu0
        %v6465 = vadd.f32 %v552, %v6464
        %v6466 = vpop.f32.mrb[0].mxu0
        %v6467 = vpop.f32.mrb[0].mxu0
        %v6468 = vadd.f32 %v553, %v6467
        %v6469 = vpop.f32.mrb[0].mxu0
        %6470 = vmatprep.mubr.bf16.mxu0 %v6175
        %6471 = vmatmul.mubr.bf16.gmra.mrb[0].mxu0 %v6174
        %v6472 = vpop.f32.mrb[0].mxu0
        %v6473 = vadd.f32 %v554, %v6472
        %v6474 = vpop.f32.mrb[0].mxu0
        %v6475 = vpop.f32.mrb[0].mxu0
        %v6476 = vadd.f32 %v555, %v6475
        %v6477 = vpop.f32.mrb[0].mxu0
        %6478 = vmatprep.mubr.bf16.mxu0 %v6179
        %6479 = vmatmul.mubr.bf16.gmra.mrb[0].mxu0 %v6178
        %v6480 = vpop.f32.mrb[0].mxu0
        %v6481 = vadd.f32 %v556, %v6480
        %v6482 = vpop.f32.mrb[0].mxu0
        %v6483 = vpop.f32.mrb[0].mxu0
        %v6484 = vadd.f32 %v557, %v6483
        %v6485 = vpop.f32.mrb[0].mxu0
        %6486 = vmatprep.mubr.bf16.mxu0 %v6183
        %6487 = vmatmul.mubr.bf16.gmra.mrb[0].mxu0 %v6182
        %v6488 = vpop.f32.mrb[0].mxu0
        %v6489 = vadd.f32 %v558, %v6488
        %v6490 = vpop.f32.mrb[0].mxu0
        %v6491 = vpop.f32.mrb[0].mxu0
        %v6492 = vadd.f32 %v559, %v6491
        %v6493 = vpop.f32.mrb[0].mxu0
        %6494 = vmatprep.mubr.bf16.mxu0 %v6187
        %6495 = vmatmul.mubr.bf16.gmra.mrb[0].mxu0 %v6186
        %v6496 = vpop.f32.mrb[0].mxu0
        %v6497 = vadd.f32 %v560, %v6496
        %v6498 = vpop.f32.mrb[0].mxu0
        %v6499 = vpop.f32.mrb[0].mxu0
        %v6500 = vadd.f32 %v561, %v6499
        %v6501 = vpop.f32.mrb[0].mxu0
        %6502 = vmatprep.mubr.bf16.mxu0 %v6191
        %6503 = vmatmul.mubr.bf16.gmra.mrb[0].mxu0 %v6190
        %v6504 = vpop.f32.mrb[0].mxu0
        %v6505 = vadd.f32 %v562, %v6504
        %v6506 = vpop.f32.mrb[0].mxu0
        %v6507 = vpop.f32.mrb[0].mxu0
        %v6508 = vadd.f32 %v563, %v6507
        %v6509 = vpop.f32.mrb[0].mxu0
        %6510 = vmatprep.mubr.bf16.mxu0 %v6195
        %6511 = vmatmul.mubr.bf16.gmra.mrb[0].mxu0 %v6194
        %v6512 = vpop.f32.mrb[0].mxu0
        %v6513 = vadd.f32 %v564, %v6512
        %v6514 = vpop.f32.mrb[0].mxu0
        %v6515 = vpop.f32.mrb[0].mxu0
        %v6516 = vadd.f32 %v565, %v6515
        %v6517 = vpop.f32.mrb[0].mxu0
        %6518 = vmatprep.mubr.bf16.mxu0 %v6199
        %6519 = vmatmul.mubr.bf16.gmra.mrb[0].mxu0 %v6198
        %v6520 = vpop.f32.mrb[0].mxu0
        %v6521 = vadd.f32 %v566, %v6520
        %v6522 = vpop.f32.mrb[0].mxu0
        %v6523 = vpop.f32.mrb[0].mxu0
        %v6524 = vadd.f32 %v567, %v6523
        %v6525 = vpop.f32.mrb[0].mxu0
        %6526 = vmatprep.mubr.bf16.mxu0 %v6203
        %6527 = vmatmul.mubr.bf16.gmra.mrb[0].mxu0 %v6202
        %v6528 = vpop.f32.mrb[0].mxu0
        %v6529 = vadd.f32 %v568, %v6528
        %v6530 = vpop.f32.mrb[0].mxu0
        %v6531 = vpop.f32.mrb[0].mxu0
        %v6532 = vadd.f32 %v569, %v6531
        %v6533 = vpop.f32.mrb[0].mxu0
        %6534 = vmatprep.mubr.bf16.mxu0 %v6207
        %6535 = vmatmul.mubr.bf16.gmra.mrb[0].mxu0 %v6206
        %v6536 = vpop.f32.mrb[0].mxu0
        %v6537 = vadd.f32 %v570, %v6536
        %v6538 = vpop.f32.mrb[0].mxu0
        %v6539 = vpop.f32.mrb[0].mxu0
        %v6540 = vadd.f32 %v571, %v6539
        %v6541 = vpop.f32.mrb[0].mxu0
        %6542 = vmatprep.mubr.bf16.mxu0 %v6211
        %6543 = vmatmul.mubr.bf16.gmra.mrb[0].mxu0 %v6210
        %v6544 = vpop.f32.mrb[0].mxu0
        %v6545 = vadd.f32 %v572, %v6544
        %v6546 = vpop.f32.mrb[0].mxu0
        %v6547 = vpop.f32.mrb[0].mxu0
        %v6548 = vadd.f32 %v573, %v6547
        %v6549 = vpop.f32.mrb[0].mxu0
        %6550 = vmatprep.mubr.bf16.mxu0 %v6215
        %6551 = vmatmul.mubr.bf16.gmra.mrb[0].mxu0 %v6214
        %v6552 = vpop.f32.mrb[0].mxu0
        %v6553 = vadd.f32 %v574, %v6552
        %v6554 = vpop.f32.mrb[0].mxu0
        %v6555 = vpop.f32.mrb[0].mxu0
        %v6556 = vadd.f32 %v575, %v6555
        %v6557 = vpop.f32.mrb[0].mxu0
        %6558 = vmatprep.mubr.bf16.mxu0 %v6219
        %6559 = vmatmul.mubr.bf16.gmra.mrb[0].mxu0 %v6218
        %v6560 = vpop.f32.mrb[0].mxu0
        %v6561 = vadd.f32 %v576, %v6560
        %v6562 = vpop.f32.mrb[0].mxu0
        %v6563 = vpop.f32.mrb[0].mxu0
        %v6564 = vadd.f32 %v577, %v6563
        %v6565 = vpop.f32.mrb[0].mxu0
        %6566 = vmatprep.mubr.bf16.mxu0 %v6223
        %6567 = vmatmul.mubr.bf16.gmra.mrb[0].mxu0 %v6222
        %v6568 = vpop.f32.mrb[0].mxu0
        %v6569 = vadd.f32 %v578, %v6568
        %v6570 = vpop.f32.mrb[0].mxu0
        %v6571 = vpop.f32.mrb[0].mxu0
        %v6572 = vadd.f32 %v579, %v6571
        %v6573 = vpop.f32.mrb[0].mxu0
        %6574 = vmatprep.mubr.bf16.mxu0 %v6227
        %6575 = vmatmul.mubr.bf16.gmra.mrb[0].mxu0 %v6226
        %v6576 = vpop.f32.mrb[0].mxu0
        %v6577 = vadd.f32 %v580, %v6576
        %v6578 = vpop.f32.mrb[0].mxu0
        %v6579 = vpop.f32.mrb[0].mxu0
        %v6580 = vadd.f32 %v581, %v6579
        %v6581 = vpop.f32.mrb[0].mxu0
        %6582 = vmatprep.mubr.bf16.mxu0 %v6231
        %6583 = vmatmul.mubr.bf16.gmra.mrb[0].mxu0 %v6230
        %v6584 = vpop.f32.mrb[0].mxu0
        %v6585 = vadd.f32 %v582, %v6584
        %v6586 = vpop.f32.mrb[0].mxu0
        %v6587 = vpop.f32.mrb[0].mxu0
        %v6588 = vadd.f32 %v583, %v6587
        %v6589 = vpop.f32.mrb[0].mxu0
        %6590 = vmatprep.mubr.bf16.mxu0 %v6235
        %6591 = vmatmul.mubr.bf16.gmra.mrb[0].mxu0 %v6234
        %v6592 = vpop.f32.mrb[0].mxu0
        %v6593 = vadd.f32 %v584, %v6592
        %v6594 = vpop.f32.mrb[0].mxu0
        %v6595 = vpop.f32.mrb[0].mxu0
        %v6596 = vadd.f32 %v585, %v6595
        %v6597 = vpop.f32.mrb[0].mxu0
        %6598 = vmatprep.mubr.bf16.mxu0 %v6239
        %6599 = vmatmul.mubr.bf16.gmra.mrb[0].mxu0 %v6238
        %v6600 = vpop.f32.mrb[0].mxu0
        %v6601 = vadd.f32 %v586, %v6600
        %v6602 = vpop.f32.mrb[0].mxu0
        %v6603 = vpop.f32.mrb[0].mxu0
        %v6604 = vadd.f32 %v587, %v6603
        %v6605 = vpop.f32.mrb[0].mxu0
        %6606 = vmatprep.mubr.bf16.mxu0 %v6243
        %6607 = vmatmul.mubr.bf16.gmra.mrb[0].mxu0 %v6242
        %v6608 = vpop.f32.mrb[0].mxu0
        %v6609 = vadd.f32 %v588, %v6608
        %v6610 = vpop.f32.mrb[0].mxu0
        %v6611 = vpop.f32.mrb[0].mxu0
        %v6612 = vadd.f32 %v589, %v6611
        %v6613 = vpop.f32.mrb[0].mxu0
        %6614 = vmatprep.mubr.bf16.mxu0 %v6247
        %6615 = vmatmul.mubr.bf16.gmra.mrb[0].mxu0 %v6246
        %v6616 = vpop.f32.mrb[0].mxu0
        %v6617 = vadd.f32 %v590, %v6616
        %v6618 = vpop.f32.mrb[0].mxu0
        %v6619 = vpop.f32.mrb[0].mxu0
        %v6620 = vadd.f32 %v591, %v6619
        %v6621 = vpop.f32.mrb[0].mxu0
        %6622 = vmatprep.mubr.bf16.mxu0 %v6251
        %6623 = vmatmul.mubr.bf16.gmra.mrb[0].mxu0 %v6250
        %v6624 = vpop.f32.mrb[0].mxu0
        %v6625 = vadd.f32 %v592, %v6624
        %v6626 = vpop.f32.mrb[0].mxu0
        %v6627 = vpop.f32.mrb[0].mxu0
        %v6628 = vadd.f32 %v593, %v6627
        %v6629 = vpop.f32.mrb[0].mxu0
        %6630 = vmatprep.mubr.bf16.mxu0 %v6255
        %6631 = vmatmul.mubr.bf16.gmra.mrb[0].mxu0 %v6254
        %v6632 = vpop.f32.mrb[0].mxu0
        %v6633 = vadd.f32 %v594, %v6632
        %v6634 = vpop.f32.mrb[0].mxu0
        %v6635 = vpop.f32.mrb[0].mxu0
        %v6636 = vadd.f32 %v595, %v6635
        %v6637 = vpop.f32.mrb[0].mxu0
        %6638 = vmatprep.mubr.bf16.mxu0 %v6259
        %6639 = vmatmul.mubr.bf16.gmra.mrb[0].mxu0 %v6258
        %v6640 = vpop.f32.mrb[0].mxu0
        %v6641 = vadd.f32 %v596, %v6640
        %v6642 = vpop.f32.mrb[0].mxu0
        %v6643 = vpop.f32.mrb[0].mxu0
        %v6644 = vadd.f32 %v597, %v6643
        %v6645 = vpop.f32.mrb[0].mxu0
        %6646 = vmatprep.mubr.bf16.mxu0 %v6263
        %6647 = vmatmul.mubr.bf16.gmra.mrb[0].mxu0 %v6262
        %v6648 = vpop.f32.mrb[0].mxu0
        %v6649 = vadd.f32 %v598, %v6648
        %v6650 = vpop.f32.mrb[0].mxu0
        %v6651 = vpop.f32.mrb[0].mxu0
        %v6652 = vadd.f32 %v599, %v6651
        %v6653 = vpop.f32.mrb[0].mxu0
        %6654 = vmatprep.mubr.bf16.mxu0 %v6267
        %6655 = vmatmul.mubr.bf16.gmra.mrb[0].mxu0 %v6266
        %v6656 = vpop.f32.mrb[0].mxu0
        %v6657 = vadd.f32 %v600, %v6656
        %v6658 = vpop.f32.mrb[0].mxu0
        %v6659 = vpop.f32.mrb[0].mxu0
        %v6660 = vadd.f32 %v601, %v6659
        %v6661 = vpop.f32.mrb[0].mxu0
        %6662 = vmatprep.mubr.bf16.mxu0 %v6271
        %6663 = vmatmul.mubr.bf16.gmra.mrb[0].mxu0 %v6270
        %v6664 = vpop.f32.mrb[0].mxu0
        %v6665 = vadd.f32 %v602, %v6664
        %v6666 = vpop.f32.mrb[0].mxu0
        %v6667 = vpop.f32.mrb[0].mxu0
        %v6668 = vadd.f32 %v603, %v6667
        %v6669 = vpop.f32.mrb[0].mxu0
        %6670 = vmatprep.mubr.bf16.mxu0 %v6275
        %6671 = vmatmul.mubr.bf16.gmra.mrb[0].mxu0 %v6274
        %v6672 = vpop.f32.mrb[0].mxu0
        %v6673 = vadd.f32 %v604, %v6672
        %v6674 = vpop.f32.mrb[0].mxu0
        %v6675 = vpop.f32.mrb[0].mxu0
        %v6676 = vadd.f32 %v605, %v6675
        %v6677 = vpop.f32.mrb[0].mxu0
        %6678 = vmatprep.mubr.bf16.mxu0 %v6279
        %6679 = vmatmul.mubr.bf16.gmra.mrb[0].mxu0 %v6278
        %v6680 = vpop.f32.mrb[0].mxu0
        %v6681 = vadd.f32 %v606, %v6680
        %v6682 = vpop.f32.mrb[0].mxu0
        %v6683 = vpop.f32.mrb[0].mxu0
        %v6684 = vadd.f32 %v607, %v6683
        %v6685 = vpop.f32.mrb[0].mxu0
        %6686 = vmatprep.mubr.bf16.mxu0 %v6283
        %6687 = vmatmul.mubr.bf16.gmra.mrb[0].mxu0 %v6282
        %v6688 = vpop.f32.mrb[0].mxu0
        %v6689 = vadd.f32 %v608, %v6688
        %v6690 = vpop.f32.mrb[0].mxu0
        %v6691 = vpop.f32.mrb[0].mxu0
        %v6692 = vadd.f32 %v609, %v6691
        %v6693 = vpop.f32.mrb[0].mxu0
        %6694 = vmatprep.mubr.bf16.mxu0 %v6287
        %6695 = vmatmul.mubr.bf16.gmra.mrb[0].mxu0 %v6286
        %v6696 = vpop.f32.mrb[0].mxu0
        %v6697 = vadd.f32 %v610, %v6696
        %v6698 = vpop.f32.mrb[0].mxu0
        %v6699 = vpop.f32.mrb[0].mxu0
        %v6700 = vadd.f32 %v611, %v6699
        %v6701 = vpop.f32.mrb[0].mxu0
        %6702 = vmatprep.mubr.bf16.mxu0 %v6291
        %6703 = vmatmul.mubr.bf16.gmra.mrb[0].mxu0 %v6290
        %v6704 = vpop.f32.mrb[0].mxu0
        %v6705 = vadd.f32 %v612, %v6704
        %v6706 = vpop.f32.mrb[0].mxu0
        %v6707 = vpop.f32.mrb[0].mxu0
        %v6708 = vadd.f32 %v613, %v6707
        %v6709 = vpop.f32.mrb[0].mxu0
        %6710 = vdwg.mxu0
        %6711 = vmatprep.subr.bf16.mxu0 0
        %6712 = vmatpush1.bf16.msra.mxu0 %v5766
        %6713 = vmatprep.subr.bf16.mxu0 0
        %6714 = vmatpush1.bf16.msra.mxu0 %v5767
        %6715 = vmatprep.subr.bf16.mxu0 0
        %6716 = vmatpush1.bf16.msra.mxu0 %v5768
        %6717 = vmatprep.subr.bf16.mxu0 0
        %6718 = vmatpush1.bf16.msra.mxu0 %v5769
        %6719 = vmatprep.subr.bf16.mxu0 0
        %6720 = vmatpush1.bf16.msra.mxu0 %v5770
        %6721 = vmatprep.subr.bf16.mxu0 0
        %6722 = vmatpush1.bf16.msra.mxu0 %v5771
        %6723 = vmatprep.subr.bf16.mxu0 0
        %6724 = vmatpush1.bf16.msra.mxu0 %v5772
        %6725 = vmatprep.subr.bf16.mxu0 0
        %6726 = vmatpush1.bf16.msra.mxu0 %v5773
        %6727 = vmatprep.subr.bf16.mxu0 0
        %6728 = vmatpush1.bf16.msra.mxu0 %v5774
        %6729 = vmatprep.subr.bf16.mxu0 0
        %6730 = vmatpush1.bf16.msra.mxu0 %v5775
        %6731 = vmatprep.subr.bf16.mxu0 0
        %6732 = vmatpush1.bf16.msra.mxu0 %v5776
        %6733 = vmatprep.subr.bf16.mxu0 0
        %6734 = vmatpush1.bf16.msra.mxu0 %v5777
        %6735 = vmatprep.subr.bf16.mxu0 0
        %6736 = vmatpush1.bf16.msra.mxu0 %v5778
        %6737 = vmatprep.subr.bf16.mxu0 0
        %6738 = vmatpush1.bf16.msra.mxu0 %v5779
        %6739 = vmatprep.subr.bf16.mxu0 0
        %6740 = vmatpush1.bf16.msra.mxu0 %v5780
        %6741 = vmatprep.subr.bf16.mxu0 0
        %6742 = vmatpush1.bf16.msra.mxu0 %v5781
        %6743 = vmatprep.mubr.bf16.mxu0 %v6169
        %6744 = vmatmul.mubr.bf16.gmra.mrb[0].mxu0 %v6168
        %v6745 = vpop.f32.mrb[0].mxu0
        %v6746 = vadd.f32 %v6457, %v6745
        %v6747 = vpop.f32.mrb[0].mxu0
        %v6748 = vpop.f32.mrb[0].mxu0
        %v6749 = vadd.f32 %v6460, %v6748
        %v6750 = vpop.f32.mrb[0].mxu0
        %6751 = vmatprep.mubr.bf16.mxu0 %v6173
        %6752 = vmatmul.mubr.bf16.gmra.mrb[0].mxu0 %v6172
        %v6753 = vpop.f32.mrb[0].mxu0
        %v6754 = vadd.f32 %v6465, %v6753
        %v6755 = vpop.f32.mrb[0].mxu0
        %v6756 = vpop.f32.mrb[0].mxu0
        %v6757 = vadd.f32 %v6468, %v6756
        %v6758 = vpop.f32.mrb[0].mxu0
        %6759 = vmatprep.mubr.bf16.mxu0 %v6177
        %6760 = vmatmul.mubr.bf16.gmra.mrb[0].mxu0 %v6176
        %v6761 = vpop.f32.mrb[0].mxu0
        %v6762 = vadd.f32 %v6473, %v6761
        %v6763 = vpop.f32.mrb[0].mxu0
        %v6764 = vpop.f32.mrb[0].mxu0
        %v6765 = vadd.f32 %v6476, %v6764
        %v6766 = vpop.f32.mrb[0].mxu0
        %6767 = vmatprep.mubr.bf16.mxu0 %v6181
        %6768 = vmatmul.mubr.bf16.gmra.mrb[0].mxu0 %v6180
        %v6769 = vpop.f32.mrb[0].mxu0
        %v6770 = vadd.f32 %v6481, %v6769
        %v6771 = vpop.f32.mrb[0].mxu0
        %v6772 = vpop.f32.mrb[0].mxu0
        %v6773 = vadd.f32 %v6484, %v6772
        %v6774 = vpop.f32.mrb[0].mxu0
        %6775 = vmatprep.mubr.bf16.mxu0 %v6185
        %6776 = vmatmul.mubr.bf16.gmra.mrb[0].mxu0 %v6184
        %v6777 = vpop.f32.mrb[0].mxu0
        %v6778 = vadd.f32 %v6489, %v6777
        %v6779 = vpop.f32.mrb[0].mxu0
        %v6780 = vpop.f32.mrb[0].mxu0
        %v6781 = vadd.f32 %v6492, %v6780
        %v6782 = vpop.f32.mrb[0].mxu0
        %6783 = vmatprep.mubr.bf16.mxu0 %v6189
        %6784 = vmatmul.mubr.bf16.gmra.mrb[0].mxu0 %v6188
        %v6785 = vpop.f32.mrb[0].mxu0
        %v6786 = vadd.f32 %v6497, %v6785
        %v6787 = vpop.f32.mrb[0].mxu0
        %v6788 = vpop.f32.mrb[0].mxu0
        %v6789 = vadd.f32 %v6500, %v6788
        %v6790 = vpop.f32.mrb[0].mxu0
        %6791 = vmatprep.mubr.bf16.mxu0 %v6193
        %6792 = vmatmul.mubr.bf16.gmra.mrb[0].mxu0 %v6192
        %v6793 = vpop.f32.mrb[0].mxu0
        %v6794 = vadd.f32 %v6505, %v6793
        %v6795 = vpop.f32.mrb[0].mxu0
        %v6796 = vpop.f32.mrb[0].mxu0
        %v6797 = vadd.f32 %v6508, %v6796
        %v6798 = vpop.f32.mrb[0].mxu0
        %6799 = vmatprep.mubr.bf16.mxu0 %v6197
        %6800 = vmatmul.mubr.bf16.gmra.mrb[0].mxu0 %v6196
        %v6801 = vpop.f32.mrb[0].mxu0
        %v6802 = vadd.f32 %v6513, %v6801
        %v6803 = vpop.f32.mrb[0].mxu0
        %v6804 = vpop.f32.mrb[0].mxu0
        %v6805 = vadd.f32 %v6516, %v6804
        %v6806 = vpop.f32.mrb[0].mxu0
        %6807 = vmatprep.mubr.bf16.mxu0 %v6201
        %6808 = vmatmul.mubr.bf16.gmra.mrb[0].mxu0 %v6200
        %v6809 = vpop.f32.mrb[0].mxu0
        %v6810 = vadd.f32 %v6521, %v6809
        %v6811 = vpop.f32.mrb[0].mxu0
        %v6812 = vpop.f32.mrb[0].mxu0
        %v6813 = vadd.f32 %v6524, %v6812
        %v6814 = vpop.f32.mrb[0].mxu0
        %6815 = vmatprep.mubr.bf16.mxu0 %v6205
        %6816 = vmatmul.mubr.bf16.gmra.mrb[0].mxu0 %v6204
        %v6817 = vpop.f32.mrb[0].mxu0
        %v6818 = vadd.f32 %v6529, %v6817
        %v6819 = vpop.f32.mrb[0].mxu0
        %v6820 = vpop.f32.mrb[0].mxu0
        %v6821 = vadd.f32 %v6532, %v6820
        %v6822 = vpop.f32.mrb[0].mxu0
        %6823 = vmatprep.mubr.bf16.mxu0 %v6209
        %6824 = vmatmul.mubr.bf16.gmra.mrb[0].mxu0 %v6208
        %v6825 = vpop.f32.mrb[0].mxu0
        %v6826 = vadd.f32 %v6537, %v6825
        %v6827 = vpop.f32.mrb[0].mxu0
        %v6828 = vpop.f32.mrb[0].mxu0
        %v6829 = vadd.f32 %v6540, %v6828
        %v6830 = vpop.f32.mrb[0].mxu0
        %6831 = vmatprep.mubr.bf16.mxu0 %v6213
        %6832 = vmatmul.mubr.bf16.gmra.mrb[0].mxu0 %v6212
        %v6833 = vpop.f32.mrb[0].mxu0
        %v6834 = vadd.f32 %v6545, %v6833
        %v6835 = vpop.f32.mrb[0].mxu0
        %v6836 = vpop.f32.mrb[0].mxu0
        %v6837 = vadd.f32 %v6548, %v6836
        %v6838 = vpop.f32.mrb[0].mxu0
        %6839 = vmatprep.mubr.bf16.mxu0 %v6217
        %6840 = vmatmul.mubr.bf16.gmra.mrb[0].mxu0 %v6216
        %v6841 = vpop.f32.mrb[0].mxu0
        %v6842 = vadd.f32 %v6553, %v6841
        %v6843 = vpop.f32.mrb[0].mxu0
        %v6844 = vpop.f32.mrb[0].mxu0
        %v6845 = vadd.f32 %v6556, %v6844
        %v6846 = vpop.f32.mrb[0].mxu0
        %6847 = vmatprep.mubr.bf16.mxu0 %v6221
        %6848 = vmatmul.mubr.bf16.gmra.mrb[0].mxu0 %v6220
        %v6849 = vpop.f32.mrb[0].mxu0
        %v6850 = vadd.f32 %v6561, %v6849
        %v6851 = vpop.f32.mrb[0].mxu0
        %v6852 = vpop.f32.mrb[0].mxu0
        %v6853 = vadd.f32 %v6564, %v6852
        %v6854 = vpop.f32.mrb[0].mxu0
        %6855 = vmatprep.mubr.bf16.mxu0 %v6225
        %6856 = vmatmul.mubr.bf16.gmra.mrb[0].mxu0 %v6224
        %v6857 = vpop.f32.mrb[0].mxu0
        %v6858 = vadd.f32 %v6569, %v6857
        %v6859 = vpop.f32.mrb[0].mxu0
        %v6860 = vpop.f32.mrb[0].mxu0
        %v6861 = vadd.f32 %v6572, %v6860
        %v6862 = vpop.f32.mrb[0].mxu0
        %6863 = vmatprep.mubr.bf16.mxu0 %v6229
        %6864 = vmatmul.mubr.bf16.gmra.mrb[0].mxu0 %v6228
        %v6865 = vpop.f32.mrb[0].mxu0
        %v6866 = vadd.f32 %v6577, %v6865
        %v6867 = vpop.f32.mrb[0].mxu0
        %v6868 = vpop.f32.mrb[0].mxu0
        %v6869 = vadd.f32 %v6580, %v6868
        %v6870 = vpop.f32.mrb[0].mxu0
        %6871 = vmatprep.mubr.bf16.mxu0 %v6233
        %6872 = vmatmul.mubr.bf16.gmra.mrb[0].mxu0 %v6232
        %v6873 = vpop.f32.mrb[0].mxu0
        %v6874 = vadd.f32 %v6585, %v6873
        %v6875 = vpop.f32.mrb[0].mxu0
        %v6876 = vpop.f32.mrb[0].mxu0
        %v6877 = vadd.f32 %v6588, %v6876
        %v6878 = vpop.f32.mrb[0].mxu0
        %6879 = vmatprep.mubr.bf16.mxu0 %v6237
        %6880 = vmatmul.mubr.bf16.gmra.mrb[0].mxu0 %v6236
        %v6881 = vpop.f32.mrb[0].mxu0
        %v6882 = vadd.f32 %v6593, %v6881
        %v6883 = vpop.f32.mrb[0].mxu0
        %v6884 = vpop.f32.mrb[0].mxu0
        %v6885 = vadd.f32 %v6596, %v6884
        %v6886 = vpop.f32.mrb[0].mxu0
        %6887 = vmatprep.mubr.bf16.mxu0 %v6241
        %6888 = vmatmul.mubr.bf16.gmra.mrb[0].mxu0 %v6240
        %v6889 = vpop.f32.mrb[0].mxu0
        %v6890 = vadd.f32 %v6601, %v6889
        %v6891 = vpop.f32.mrb[0].mxu0
        %v6892 = vpop.f32.mrb[0].mxu0
        %v6893 = vadd.f32 %v6604, %v6892
        %v6894 = vpop.f32.mrb[0].mxu0
        %6895 = vmatprep.mubr.bf16.mxu0 %v6245
        %6896 = vmatmul.mubr.bf16.gmra.mrb[0].mxu0 %v6244
        %v6897 = vpop.f32.mrb[0].mxu0
        %v6898 = vadd.f32 %v6609, %v6897
        %v6899 = vpop.f32.mrb[0].mxu0
        %v6900 = vpop.f32.mrb[0].mxu0
        %v6901 = vadd.f32 %v6612, %v6900
        %v6902 = vpop.f32.mrb[0].mxu0
        %6903 = vmatprep.mubr.bf16.mxu0 %v6249
        %6904 = vmatmul.mubr.bf16.gmra.mrb[0].mxu0 %v6248
        %v6905 = vpop.f32.mrb[0].mxu0
        %v6906 = vadd.f32 %v6617, %v6905
        %v6907 = vpop.f32.mrb[0].mxu0
        %v6908 = vpop.f32.mrb[0].mxu0
        %v6909 = vadd.f32 %v6620, %v6908
        %v6910 = vpop.f32.mrb[0].mxu0
        %6911 = vmatprep.mubr.bf16.mxu0 %v6253
        %6912 = vmatmul.mubr.bf16.gmra.mrb[0].mxu0 %v6252
        %v6913 = vpop.f32.mrb[0].mxu0
        %v6914 = vadd.f32 %v6625, %v6913
        %v6915 = vpop.f32.mrb[0].mxu0
        %v6916 = vpop.f32.mrb[0].mxu0
        %v6917 = vadd.f32 %v6628, %v6916
        %v6918 = vpop.f32.mrb[0].mxu0
        %6919 = vmatprep.mubr.bf16.mxu0 %v6257
        %6920 = vmatmul.mubr.bf16.gmra.mrb[0].mxu0 %v6256
        %v6921 = vpop.f32.mrb[0].mxu0
        %v6922 = vadd.f32 %v6633, %v6921
        %v6923 = vpop.f32.mrb[0].mxu0
        %v6924 = vpop.f32.mrb[0].mxu0
        %v6925 = vadd.f32 %v6636, %v6924
        %v6926 = vpop.f32.mrb[0].mxu0
        %6927 = vmatprep.mubr.bf16.mxu0 %v6261
        %6928 = vmatmul.mubr.bf16.gmra.mrb[0].mxu0 %v6260
        %v6929 = vpop.f32.mrb[0].mxu0
        %v6930 = vadd.f32 %v6641, %v6929
        %v6931 = vpop.f32.mrb[0].mxu0
        %v6932 = vpop.f32.mrb[0].mxu0
        %v6933 = vadd.f32 %v6644, %v6932
        %v6934 = vpop.f32.mrb[0].mxu0
        %6935 = vmatprep.mubr.bf16.mxu0 %v6265
        %6936 = vmatmul.mubr.bf16.gmra.mrb[0].mxu0 %v6264
        %v6937 = vpop.f32.mrb[0].mxu0
        %v6938 = vadd.f32 %v6649, %v6937
        %v6939 = vpop.f32.mrb[0].mxu0
        %v6940 = vpop.f32.mrb[0].mxu0
        %v6941 = vadd.f32 %v6652, %v6940
        %v6942 = vpop.f32.mrb[0].mxu0
        %6943 = vmatprep.mubr.bf16.mxu0 %v6269
        %6944 = vmatmul.mubr.bf16.gmra.mrb[0].mxu0 %v6268
        %v6945 = vpop.f32.mrb[0].mxu0
        %v6946 = vadd.f32 %v6657, %v6945
        %v6947 = vpop.f32.mrb[0].mxu0
        %v6948 = vpop.f32.mrb[0].mxu0
        %v6949 = vadd.f32 %v6660, %v6948
        %v6950 = vpop.f32.mrb[0].mxu0
        %6951 = vmatprep.mubr.bf16.mxu0 %v6273
        %6952 = vmatmul.mubr.bf16.gmra.mrb[0].mxu0 %v6272
        %v6953 = vpop.f32.mrb[0].mxu0
        %v6954 = vadd.f32 %v6665, %v6953
        %v6955 = vpop.f32.mrb[0].mxu0
        %v6956 = vpop.f32.mrb[0].mxu0
        %v6957 = vadd.f32 %v6668, %v6956
        %v6958 = vpop.f32.mrb[0].mxu0
        %6959 = vmatprep.mubr.bf16.mxu0 %v6277
        %6960 = vmatmul.mubr.bf16.gmra.mrb[0].mxu0 %v6276
        %v6961 = vpop.f32.mrb[0].mxu0
        %v6962 = vadd.f32 %v6673, %v6961
        %v6963 = vpop.f32.mrb[0].mxu0
        %v6964 = vpop.f32.mrb[0].mxu0
        %v6965 = vadd.f32 %v6676, %v6964
        %v6966 = vpop.f32.mrb[0].mxu0
        %6967 = vmatprep.mubr.bf16.mxu0 %v6281
        %6968 = vmatmul.mubr.bf16.gmra.mrb[0].mxu0 %v6280
        %v6969 = vpop.f32.mrb[0].mxu0
        %v6970 = vadd.f32 %v6681, %v6969
        %v6971 = vpop.f32.mrb[0].mxu0
        %v6972 = vpop.f32.mrb[0].mxu0
        %v6973 = vadd.f32 %v6684, %v6972
        %v6974 = vpop.f32.mrb[0].mxu0
        %6975 = vmatprep.mubr.bf16.mxu0 %v6285
        %6976 = vmatmul.mubr.bf16.gmra.mrb[0].mxu0 %v6284
        %v6977 = vpop.f32.mrb[0].mxu0
        %v6978 = vadd.f32 %v6689, %v6977
        %v6979 = vpop.f32.mrb[0].mxu0
        %v6980 = vpop.f32.mrb[0].mxu0
        %v6981 = vadd.f32 %v6692, %v6980
        %v6982 = vpop.f32.mrb[0].mxu0
        %6983 = vmatprep.mubr.bf16.mxu0 %v6289
        %6984 = vmatmul.mubr.bf16.gmra.mrb[0].mxu0 %v6288
        %v6985 = vpop.f32.mrb[0].mxu0
        %v6986 = vadd.f32 %v6697, %v6985
        %v6987 = vpop.f32.mrb[0].mxu0
        %v6988 = vpop.f32.mrb[0].mxu0
        %v6989 = vadd.f32 %v6700, %v6988
        %v6990 = vpop.f32.mrb[0].mxu0
        %6991 = vmatprep.mubr.bf16.mxu0 %v6293
        %6992 = vmatmul.mubr.bf16.gmra.mrb[0].mxu0 %v6292
        %v6993 = vpop.f32.mrb[0].mxu0
        %v6994 = vadd.f32 %v6705, %v6993
        %v6995 = vpop.f32.mrb[0].mxu0
        %v6996 = vpop.f32.mrb[0].mxu0
        %v6997 = vadd.f32 %v6708, %v6996
        %v6998 = vpop.f32.mrb[0].mxu0
        %6999 = vdwg.mxu0
        %7000 = vst [vmem:[%s539] sm:$0xff] %v6746
        %7001 = vst [vmem:[%s539 + $0x8] sm:$0xff] %v6749
        %7002 = vst [vmem:[%s539 + $0x10] sm:$0xff] %v6754
        %7003 = vst [vmem:[%s539 + $0x18] sm:$0xff] %v6757
        %7004 = vst [vmem:[%s539 + $0x20] sm:$0xff] %v6762
        %7005 = vst [vmem:[%s539 + $0x28] sm:$0xff] %v6765
        %7006 = vst [vmem:[%s539 + $0x30] sm:$0xff] %v6770
        %7007 = vst [vmem:[%s539 + $0x38] sm:$0xff] %v6773
        %7008 = vst [vmem:[%s539 + $0x40] sm:$0xff] %v6778
        %7009 = vst [vmem:[%s539 + $0x48] sm:$0xff] %v6781
        %7010 = vst [vmem:[%s539 + $0x50] sm:$0xff] %v6786
        %7011 = vst [vmem:[%s539 + $0x58] sm:$0xff] %v6789
        %7012 = vst [vmem:[%s539 + $0x60] sm:$0xff] %v6794
        %7013 = vst [vmem:[%s539 + $0x68] sm:$0xff] %v6797
        %7014 = vst [vmem:[%s539 + $0x70] sm:$0xff] %v6802
        %7015 = vst [vmem:[%s539 + $0x78] sm:$0xff] %v6805
        %7016 = vst [vmem:[%s539 + $0x80] sm:$0xff] %v6810
        %7017 = vst [vmem:[%s539 + $0x88] sm:$0xff] %v6813
        %7018 = vst [vmem:[%s539 + $0x90] sm:$0xff] %v6818
        %7019 = vst [vmem:[%s539 + $0x98] sm:$0xff] %v6821
        %7020 = vst [vmem:[%s539 + $0xa0] sm:$0xff] %v6826
        %7021 = vst [vmem:[%s539 + $0xa8] sm:$0xff] %v6829
        %7022 = vst [vmem:[%s539 + $0xb0] sm:$0xff] %v6834
        %7023 = vst [vmem:[%s539 + $0xb8] sm:$0xff] %v6837
        %7024 = vst [vmem:[%s539 + $0xc0] sm:$0xff] %v6842
        %7025 = vst [vmem:[%s539 + $0xc8] sm:$0xff] %v6845
        %7026 = vst [vmem:[%s539 + $0xd0] sm:$0xff] %v6850
        %7027 = vst [vmem:[%s539 + $0xd8] sm:$0xff] %v6853
        %7028 = vst [vmem:[%s539 + $0xe0] sm:$0xff] %v6858
        %7029 = vst [vmem:[%s539 + $0xe8] sm:$0xff] %v6861
        %7030 = vst [vmem:[%s539 + $0xf0] sm:$0xff] %v6866
        %7031 = vst [vmem:[%s539 + $0xf8] sm:$0xff] %v6869
        %7032 = vst [vmem:[%s539 + $0x100] sm:$0xff] %v6874
        %7033 = vst [vmem:[%s539 + $0x108] sm:$0xff] %v6877
        %7034 = vst [vmem:[%s539 + $0x110] sm:$0xff] %v6882
        %7035 = vst [vmem:[%s539 + $0x118] sm:$0xff] %v6885
        %7036 = vst [vmem:[%s539 + $0x120] sm:$0xff] %v6890
        %7037 = vst [vmem:[%s539 + $0x128] sm:$0xff] %v6893
        %7038 = vst [vmem:[%s539 + $0x130] sm:$0xff] %v6898
        %7039 = vst [vmem:[%s539 + $0x138] sm:$0xff] %v6901
        %7040 = vst [vmem:[%s539 + $0x140] sm:$0xff] %v6906
        %7041 = vst [vmem:[%s539 + $0x148] sm:$0xff] %v6909
        %7042 = vst [vmem:[%s539 + $0x150] sm:$0xff] %v6914
        %7043 = vst [vmem:[%s539 + $0x158] sm:$0xff] %v6917
        %7044 = vst [vmem:[%s539 + $0x160] sm:$0xff] %v6922
        %7045 = vst [vmem:[%s539 + $0x168] sm:$0xff] %v6925
        %7046 = vst [vmem:[%s539 + $0x170] sm:$0xff] %v6930
        %7047 = vst [vmem:[%s539 + $0x178] sm:$0xff] %v6933
        %7048 = vst [vmem:[%s539 + $0x180] sm:$0xff] %v6938
        %7049 = vst [vmem:[%s539 + $0x188] sm:$0xff] %v6941
        %7050 = vst [vmem:[%s539 + $0x190] sm:$0xff] %v6946
        %7051 = vst [vmem:[%s539 + $0x198] sm:$0xff] %v6949
        %7052 = vst [vmem:[%s539 + $0x1a0] sm:$0xff] %v6954
        %7053 = vst [vmem:[%s539 + $0x1a8] sm:$0xff] %v6957
        %7054 = vst [vmem:[%s539 + $0x1b0] sm:$0xff] %v6962
        %7055 = vst [vmem:[%s539 + $0x1b8] sm:$0xff] %v6965
        %7056 = vst [vmem:[%s539 + $0x1c0] sm:$0xff] %v6970
        %7057 = vst [vmem:[%s539 + $0x1c8] sm:$0xff] %v6973
        %7058 = vst [vmem:[%s539 + $0x1d0] sm:$0xff] %v6978
        %7059 = vst [vmem:[%s539 + $0x1d8] sm:$0xff] %v6981
        %7060 = vst [vmem:[%s539 + $0x1e0] sm:$0xff] %v6986
        %7061 = vst [vmem:[%s539 + $0x1e8] sm:$0xff] %v6989
        %7062 = vst [vmem:[%s539 + $0x1f0] sm:$0xff] %v6994
        %7063 = vst [vmem:[%s539 + $0x1f8] sm:$0xff] %v6997
        %s7064 = sand.u32 %s139, 1
        %s7065 = scalar_lea.sflag [#allocation5], %s7064
        %s7066 = sand.u32 %s139, 1
        %s7067 = smul.addr %s7066, 512
        %s7068 = scalar_lea.vmem [#allocation6], %s7067
        // Predicated region
        $region79: #{tpu_custom_call.1} parent=69 // pred_check
          %p7069 = pneg %p149
        $region80: #{tpu_custom_call.1} parent=69 // pred_check_branch
          %7071 = sbr.rel (%p7069) target = $region82
        $region81: #{tpu_custom_call.1} parent=69 // pred_region
          %s7073 = ssub.s32 8192, 8192
          %7074 = vsyncadd %s7065, %s7073
          %s7075 = smul.addr %s23, 192
          %s7076 = sadd.s32 %s24, %s7075
          %s7077 = smul.addr %s7076, 128
          %s7078 = scalar_lea.hbm %s4, %s7077
          %s7079 = sshll.u32 %s7068, 4
          %s7080 = int_to_ptr.vmem [resolvable:$true] %s7079
          %7085 = dma.vmem_to_hbm [thread:$0]  %s7080, 8192, %s7078, %s7065, 128, 384, 8
        $region82: #{tpu_custom_call.1} parent=69 // pred_fallthru
          _
      $region70: #{tpu_custom_call.1} parent=5 // pred_fallthru
        _
      %p7086 = scmp.le.s32.totalorder 2, %s14
      // Predicated region
      $region83: #{tpu_custom_call.1} parent=5 // pred_check
        %p7087 = pneg %p7086
      $region84: #{tpu_custom_call.1} parent=5 // pred_check_branch
        %7089 = sbr.rel (%p7087) target = $region86
      $region85: #{tpu_custom_call.1} parent=5 // pred_region
        %s7090 = ssub.s32 %s14, 2
        // Predicated region
        $region87: #{tpu_custom_call.1} parent=85 // pred_check
          %p7091 = pneg %p155
        $region88: #{tpu_custom_call.1} parent=85 // pred_check_branch
          %7093 = sbr.rel (%p7091) target = $region90
        $region89: #{tpu_custom_call.1} parent=85 // pred_region
          %s7094 = sand.u32 %s140, 1
          %s7095 = scalar_lea.sflag [#allocation5], %s7094
          %s7096 = sand.u32 %s140, 1
          %s7097 = smul.addr %s7096, 512
          %s7098 = scalar_lea.vmem [#allocation6], %s7097
          %7099 = dma.done %s7095, 8192
        $region90: #{tpu_custom_call.1} parent=85 // pred_fallthru
          _
      $region86: #{tpu_custom_call.1} parent=5 // pred_fallthru
        _
    $region6: #{tpu_custom_call.1} parent=1 // loop_footer
      %s18 = sadd.s32 1, %s14
    $region7: #{tpu_custom_call.1} parent=1 // loop_footer_branch
      %13 = sbr.rel target = $region3
    $region8: #{tpu_custom_call.1} parent=1 // loop_exit
      _
    %7100 = vsyncpa [#allocation4], 1
    %s7101 = scalar_lea.sflag [#allocation4], 1
    %7102 = vsyncpa %s7101, 1
    %7103 = vsyncpa [#allocation5], 1
    %s7104 = scalar_lea.sflag [#allocation5], 1
    %7105 = vsyncpa %s7104, 1

</llo_original>
